<compile_context>
chip_gen: v7x
topology: tpu7x:2x2x1
jax: 0.10.0
libtpu: 0.0.40
codegen_flags: <defaults>
</compile_context>

<pallas_src>
import math

import jax
import jax.numpy as jnp
from jax.experimental import pallas as pl
from jax.experimental.pallas import tpu as pltpu

# ---- small, module-consistent config (dim divisible by 16 heads) ----
B = 2          # batch
T = 8          # num image tokens
D = 128        # embedding dim   (stand-in for 768)
H = 16         # num heads (fixed by MultiHeadAttention default)
HD = D // H    # per-head dim
HID = 2 * D    # MLP hidden dim  (same 2x ratio as Encoder(dim, 2*dim))
EPS = 1e-12    # LayerNorm eps (matches nn.LayerNorm(dim, eps=1e-12) in the Encoder spec)
BT = B * T

MXU_DTYPE = jnp.bfloat16   # bf16 MXU operands on every generation; f32 accumulation kept


def _layernorm(x, gamma, beta):
    mu = jnp.mean(x, axis=-1, keepdims=True)
    var = jnp.mean((x - mu) ** 2, axis=-1, keepdims=True)   # biased variance, like torch
    return (x - mu) * jax.lax.rsqrt(var + EPS) * gamma + beta


def _gelu_tanh(h):
    # tanh-approx GELU: tanh goes to the EUP (own VLIW slot) instead of erf's VALU polynomial.
    return 0.5 * h * (1.0 + jnp.tanh(0.7978845608028654 * (h + 0.044715 * h * h * h)))


def encoder_kernel(x_ref, wqkv_ref, bqkv_ref, wp_ref, bp_ref,
                   g1_ref, be1_ref, w1_ref, b1_ref, w2_ref, b2_ref,
                   g2_ref, be2_ref, o_ref):
    c = lambda a: a.astype(MXU_DTYPE)   # MXU operand dtype (weights already arrive in bf16)

    x = x_ref[...]                                           # (BT, D) f32, lane-dense

    # ---- fused QKV projection: one (BT,D)x(D,3D) bf16 MXU op (scale pre-folded into Q) ----
    qkv = jnp.dot(c(x), wqkv_ref[...],
                  preferred_element_type=jnp.float32) + bqkv_ref[...]   # (BT, 3D) f32

    # ---- multi-head attention: per-head batched MXU matmuls, key axis on lanes ----
    # TODO(synk): at production dims fold this head loop into the grid (or one 4-D einsum).
    head_out = []
    for h in range(H):
        q_h = c(qkv[:, 0 * D + h * HD: 0 * D + (h + 1) * HD]).reshape(B, T, HD)  # pre-scaled
        k_h = c(qkv[:, 1 * D + h * HD: 1 * D + (h + 1) * HD]).reshape(B, T, HD)
        v_h = c(qkv[:, 2 * D + h * HD: 2 * D + (h + 1) * HD]).reshape(B, T, HD)

        # scores (B, Tq, Tk): key axis last (lane dim) -> dense-lane max/exp/sum
        s = jnp.einsum('bqd,bkd->bqk', q_h, k_h, preferred_element_type=jnp.float32)
        m = jnp.max(s, axis=-1, keepdims=True)
        e = jnp.exp(s - m)
        att = e * pl.reciprocal(jnp.sum(e, axis=-1, keepdims=True), approx=True)
        # attention dropout = identity (eval mode)

        y_h = jnp.einsum('bqk,bkd->bqd', c(att), v_h,
                         preferred_element_type=jnp.float32)            # (B, T, HD)
        head_out.append(y_h.reshape(BT, HD))
    y = jnp.concatenate(head_out, axis=1)                               # (BT, D)

    attn_out = jnp.dot(c(y), wp_ref[...],
                       preferred_element_type=jnp.float32) + bp_ref[...]

    # residual + LayerNorm1 (encoder dropout = identity, eval mode)
    x1 = _layernorm(x + attn_out, g1_ref[...], be1_ref[...])

    # ---- MLP: Linear -> GELU(tanh) -> Linear ----
    hdn = jnp.dot(c(x1), w1_ref[...], preferred_element_type=jnp.float32) + b1_ref[...]
    hdn = _gelu_tanh(hdn)
    mlp_out = jnp.dot(c(hdn), w2_ref[...], preferred_element_type=jnp.float32) + b2_ref[...]
    # MLP dropout = identity (eval mode)

    # residual + LayerNorm2
    o_ref[...] = _layernorm(x1 + mlp_out, g2_ref[...], be2_ref[...])


def encoder_forward(x, params):
    (wq, bq, wk, bk, wv, bv, wp, bp, g1, be1, w1, b1, w2, b2, g2, be2) = params
    scale = 1.0 / math.sqrt(HD)
    # Fuse Q/K/V into one matmul, fold the attention scale into Q, and pre-cast weights to
    # bf16 wrapper-side (halves weight bytes through HBM/VMEM; biases stay f32).
    wqkv = jnp.concatenate([wq * scale, wk, wv], axis=1).astype(MXU_DTYPE)   # (D, 3D) bf16
    bqkv = jnp.concatenate([bq * scale, bk, bv], axis=1)                     # (1, 3D) f32
    wp_b = wp.astype(MXU_DTYPE)
    w1_b = w1.astype(MXU_DTYPE)
    w2_b = w2.astype(MXU_DTYPE)

    x2d = x.reshape(BT, D)                                   # whole batch in one block
    inputs = (x2d, wqkv, bqkv, wp_b, bp, g1, be1, w1_b, b1, w2_b, b2, g2, be2)

    # Advisory cost estimate so XLA schedules neighbours around the custom call sensibly.
    flops = (2 * BT * D * 3 * D          # fused QKV projection
             + 4 * B * H * T * T * HD    # scores + att@V
             + 2 * BT * D * D            # output projection
             + 4 * BT * D * HID)         # two MLP matmuls
    transcendentals = B * H * T * T + BT * HID               # softmax exp + GELU tanh
    bytes_accessed = int(sum(int(a.size) * a.dtype.itemsize for a in inputs) + BT * D * 4)

    vmem = lambda: pl.BlockSpec(memory_space=pltpu.MemorySpace.VMEM)
    out = pl.pallas_call(
        encoder_kernel,
        out_shape=jax.ShapeDtypeStruct((BT, D), jnp.float32),
        in_specs=[vmem() for _ in inputs],
        out_specs=vmem(),
        cost_estimate=pl.CostEstimate(flops=int(flops),
                                      transcendentals=int(transcendentals),
                                      bytes_accessed=bytes_accessed),
        # Single invocation (no grid): everything (~0.3 MiB) stays resident in VMEM, so no
        # pipelining / double-buffering is needed at these toy dims (see TODO at top for the
        # generation-specific production tiling plan).
    )(*inputs)
    return out.reshape(B, T, D)


def encoder_reference(x, params):
    # Pure-JAX f32 reference matching the PyTorch module (exact-erf GELU, exact softmax).
    (wq, bq, wk, bk, wv, bv, wp, bp, g1, be1, w1, b1, w2, b2, g2, be2) = params
    def ln(v, g, b):
        mu = jnp.mean(v, -1, keepdims=True)
        var = jnp.mean((v - mu) ** 2, -1, keepdims=True)
        return (v - mu) / jnp.sqrt(var + EPS) * g + b
    q = (x @ wq + bq).reshape(B, T, H, HD).transpose(0, 2, 1, 3)
    k = (x @ wk + bk).reshape(B, T, H, HD).transpose(0, 2, 1, 3)
    v = (x @ wv + bv).reshape(B, T, H, HD).transpose(0, 2, 1, 3)
    att = jax.nn.softmax(q @ jnp.swapaxes(k, -2, -1) / math.sqrt(HD), axis=-1)
    y = (att @ v).transpose(0, 2, 1, 3).reshape(B, T, D)
    x1 = ln(x + (y @ wp + bp), g1, be1)
    h = x1 @ w1 + b1
    h = 0.5 * h * (1.0 + jax.lax.erf(h / math.sqrt(2.0)))
    return ln(x1 + (h @ w2 + b2), g2, be2)


def init_params(key):
    ks = jax.random.split(key, 8)
    s = 0.02
    wq = jax.random.normal(ks[0], (D, D), jnp.float32) * s
    wk = jax.random.normal(ks[1], (D, D), jnp.float32) * s
    wv = jax.random.normal(ks[2], (D, D), jnp.float32) * s
    wp = jax.random.normal(ks[3], (D, D), jnp.float32) * s
    w1 = jax.random.normal(ks[4], (D, HID), jnp.float32) * s
    w2 = jax.random.normal(ks[5], (HID, D), jnp.float32) * s
    bq = jnp.zeros((1, D), jnp.float32)
    bk = jnp.full((1, D), 0.01, jnp.float32)
    bv = jnp.full((1, D), -0.01, jnp.float32)
    bp = jnp.zeros((1, D), jnp.float32)
    b1 = jnp.full((1, HID), 0.02, jnp.float32)
    b2 = jnp.zeros((1, D), jnp.float32)
    g1 = jnp.ones((1, D), jnp.float32)
    be1 = jnp.zeros((1, D), jnp.float32)
    g2 = jnp.ones((1, D), jnp.float32)
    be2 = jnp.zeros((1, D), jnp.float32)
    return (wq, bq, wk, bk, wv, bv, wp, bp, g1, be1, w1, b1, w2, b2, g2, be2)


if __name__ == "__main__":
    key = jax.random.PRNGKey(0)
    kx, kp = jax.random.split(key)
    x = jax.random.normal(kx, (B, T, D), jnp.float32)
    params = init_params(kp)

    out = jax.block_until_ready(encoder_forward(x, params))
    ref = encoder_reference(x, params)

    assert out.shape == (B, T, D)
    err = float(jnp.max(jnp.abs(out - ref)))
    # Tolerance covers: bf16 MXU operands (f32 accumulation), tanh-approx GELU vs exact erf,
    # and the approximate EUP reciprocal in the softmax. Everything else is f32.
    assert err < 2e-2, f"mismatch vs reference: {err}"
    print("KERNEL_OK")
</pallas_src>

<mosaic_0001>
module attributes {stable_mosaic.version = 11 : i64} {
  func.func @encoder_kernel(%arg0: memref<16x128xf32, #tpu.memory_space<vmem>>, %arg1: memref<128x384xbf16, #tpu.memory_space<vmem>>, %arg2: memref<1x384xf32, #tpu.memory_space<vmem>>, %arg3: memref<128x128xbf16, #tpu.memory_space<vmem>>, %arg4: memref<1x128xf32, #tpu.memory_space<vmem>>, %arg5: memref<1x128xf32, #tpu.memory_space<vmem>>, %arg6: memref<1x128xf32, #tpu.memory_space<vmem>>, %arg7: memref<128x256xbf16, #tpu.memory_space<vmem>>, %arg8: memref<1x256xf32, #tpu.memory_space<vmem>>, %arg9: memref<256x128xbf16, #tpu.memory_space<vmem>>, %arg10: memref<1x128xf32, #tpu.memory_space<vmem>>, %arg11: memref<1x128xf32, #tpu.memory_space<vmem>>, %arg12: memref<1x128xf32, #tpu.memory_space<vmem>>, %arg13: memref<16x128xf32, #tpu.memory_space<vmem>>) attributes {dimension_semantics = [], scalar_prefetch = 0 : i64, scratch_operands = 0 : i64, tpu.core_type = #tpu.core_type<tc>} {
    %c0 = arith.constant 0 : index
    %c0_0 = arith.constant 0 : index
    %0 = vector.load %arg0[%c0, %c0_0] : memref<16x128xf32, #tpu.memory_space<vmem>>, vector<16x128xf32>
    %1 = arith.truncf %0 : vector<16x128xf32> to vector<16x128xbf16>
    %c0_1 = arith.constant 0 : index
    %c0_2 = arith.constant 0 : index
    %2 = vector.load %arg1[%c0_1, %c0_2] : memref<128x384xbf16, #tpu.memory_space<vmem>>, vector<128x384xbf16>
    %cst = arith.constant dense<0.000000e+00> : vector<16x384xf32>
    %3 = tpu.matmul %1, %2, %cst {dimension_numbers = #tpu.dot_dimension_numbers<[1], [0], [0], [1], [0, 0, 1, 1], [], []>} : vector<16x128xbf16>, vector<128x384xbf16>, vector<16x384xf32> -> vector<16x384xf32>
    %c0_3 = arith.constant 0 : index
    %c0_4 = arith.constant 0 : index
    %4 = vector.load %arg2[%c0_3, %c0_4] : memref<1x384xf32, #tpu.memory_space<vmem>>, vector<1x384xf32>
    %5 = vector.broadcast %4 : vector<1x384xf32> to vector<16x384xf32>
    %6 = arith.addf %3, %5 : vector<16x384xf32>
    %7 = vector.extract_strided_slice %6 {offsets = [0, 0], sizes = [16, 8], strides = [1, 1]} : vector<16x384xf32> to vector<16x8xf32>
    %8 = arith.truncf %7 : vector<16x8xf32> to vector<16x8xbf16>
    %9 = vector.shape_cast %8 : vector<16x8xbf16> to vector<2x8x8xbf16>
    %10 = vector.extract_strided_slice %6 {offsets = [0, 128], sizes = [16, 8], strides = [1, 1]} : vector<16x384xf32> to vector<16x8xf32>
    %11 = arith.truncf %10 : vector<16x8xf32> to vector<16x8xbf16>
    %12 = vector.shape_cast %11 : vector<16x8xbf16> to vector<2x8x8xbf16>
    %13 = vector.extract_strided_slice %6 {offsets = [0, 256], sizes = [16, 8], strides = [1, 1]} : vector<16x384xf32> to vector<16x8xf32>
    %14 = arith.truncf %13 : vector<16x8xf32> to vector<16x8xbf16>
    %15 = vector.shape_cast %14 : vector<16x8xbf16> to vector<2x8x8xbf16>
    "tpu.trace_start"() <{level = 10 : i32, message = "bqd,bkd->bqk"}> : () -> ()
    %cst_5 = arith.constant dense<0.000000e+00> : vector<2x8x8xf32>
    %16 = tpu.matmul %9, %12, %cst_5 {dimension_numbers = #tpu.dot_dimension_numbers<[2], [2], [1], [1], [0, 0, 0, 1, 1, 1], [0], [0]>} : vector<2x8x8xbf16>, vector<2x8x8xbf16>, vector<2x8x8xf32> -> vector<2x8x8xf32>
    "tpu.trace_stop"() : () -> ()
    %cst_6 = arith.constant dense<0xFF800000> : vector<2x8xf32>
    %17 = vector.multi_reduction <maximumf>, %16, %cst_6 [2] : vector<2x8x8xf32> to vector<2x8xf32>
    %18 = vector.shape_cast %17 : vector<2x8xf32> to vector<2x8x1xf32>
    %19 = vector.broadcast %18 : vector<2x8x1xf32> to vector<2x8x8xf32>
    %20 = arith.subf %16, %19 : vector<2x8x8xf32>
    %21 = math.exp %20 : vector<2x8x8xf32>
    %cst_7 = arith.constant dense<0.000000e+00> : vector<2x8xf32>
    %22 = vector.multi_reduction <add>, %21, %cst_7 [2] : vector<2x8x8xf32> to vector<2x8xf32>
    %23 = vector.shape_cast %22 : vector<2x8xf32> to vector<2x8x1xf32>
    %24 = tpu.reciprocal %23 {approx = true} : vector<2x8x1xf32> -> vector<2x8x1xf32>
    %25 = vector.broadcast %24 : vector<2x8x1xf32> to vector<2x8x8xf32>
    %26 = arith.mulf %21, %25 : vector<2x8x8xf32>
    %27 = arith.truncf %26 : vector<2x8x8xf32> to vector<2x8x8xbf16>
    "tpu.trace_start"() <{level = 10 : i32, message = "bqk,bkd->bqd"}> : () -> ()
    %cst_8 = arith.constant dense<0.000000e+00> : vector<2x8x8xf32>
    %28 = tpu.matmul %27, %15, %cst_8 {dimension_numbers = #tpu.dot_dimension_numbers<[2], [1], [1], [2], [0, 0, 0, 1, 1, 2], [0], [0]>} : vector<2x8x8xbf16>, vector<2x8x8xbf16>, vector<2x8x8xf32> -> vector<2x8x8xf32>
    "tpu.trace_stop"() : () -> ()
    %29 = vector.shape_cast %28 : vector<2x8x8xf32> to vector<16x8xf32>
    %30 = vector.extract_strided_slice %6 {offsets = [0, 8], sizes = [16, 8], strides = [1, 1]} : vector<16x384xf32> to vector<16x8xf32>
    %31 = arith.truncf %30 : vector<16x8xf32> to vector<16x8xbf16>
    %32 = vector.shape_cast %31 : vector<16x8xbf16> to vector<2x8x8xbf16>
    %33 = vector.extract_strided_slice %6 {offsets = [0, 136], sizes = [16, 8], strides = [1, 1]} : vector<16x384xf32> to vector<16x8xf32>
    %34 = arith.truncf %33 : vector<16x8xf32> to vector<16x8xbf16>
    %35 = vector.shape_cast %34 : vector<16x8xbf16> to vector<2x8x8xbf16>
    %36 = vector.extract_strided_slice %6 {offsets = [0, 264], sizes = [16, 8], strides = [1, 1]} : vector<16x384xf32> to vector<16x8xf32>
    %37 = arith.truncf %36 : vector<16x8xf32> to vector<16x8xbf16>
    %38 = vector.shape_cast %37 : vector<16x8xbf16> to vector<2x8x8xbf16>
    "tpu.trace_start"() <{level = 10 : i32, message = "bqd,bkd->bqk"}> : () -> ()
    %cst_9 = arith.constant dense<0.000000e+00> : vector<2x8x8xf32>
    %39 = tpu.matmul %32, %35, %cst_9 {dimension_numbers = #tpu.dot_dimension_numbers<[2], [2], [1], [1], [0, 0, 0, 1, 1, 1], [0], [0]>} : vector<2x8x8xbf16>, vector<2x8x8xbf16>, vector<2x8x8xf32> -> vector<2x8x8xf32>
    "tpu.trace_stop"() : () -> ()
    %cst_10 = arith.constant dense<0xFF800000> : vector<2x8xf32>
    %40 = vector.multi_reduction <maximumf>, %39, %cst_10 [2] : vector<2x8x8xf32> to vector<2x8xf32>
    %41 = vector.shape_cast %40 : vector<2x8xf32> to vector<2x8x1xf32>
    %42 = vector.broadcast %41 : vector<2x8x1xf32> to vector<2x8x8xf32>
    %43 = arith.subf %39, %42 : vector<2x8x8xf32>
    %44 = math.exp %43 : vector<2x8x8xf32>
    %cst_11 = arith.constant dense<0.000000e+00> : vector<2x8xf32>
    %45 = vector.multi_reduction <add>, %44, %cst_11 [2] : vector<2x8x8xf32> to vector<2x8xf32>
    %46 = vector.shape_cast %45 : vector<2x8xf32> to vector<2x8x1xf32>
    %47 = tpu.reciprocal %46 {approx = true} : vector<2x8x1xf32> -> vector<2x8x1xf32>
    %48 = vector.broadcast %47 : vector<2x8x1xf32> to vector<2x8x8xf32>
    %49 = arith.mulf %44, %48 : vector<2x8x8xf32>
    %50 = arith.truncf %49 : vector<2x8x8xf32> to vector<2x8x8xbf16>
    "tpu.trace_start"() <{level = 10 : i32, message = "bqk,bkd->bqd"}> : () -> ()
    %cst_12 = arith.constant dense<0.000000e+00> : vector<2x8x8xf32>
    %51 = tpu.matmul %50, %38, %cst_12 {dimension_numbers = #tpu.dot_dimension_numbers<[2], [1], [1], [2], [0, 0, 0, 1, 1, 2], [0], [0]>} : vector<2x8x8xbf16>, vector<2x8x8xbf16>, vector<2x8x8xf32> -> vector<2x8x8xf32>
    "tpu.trace_stop"() : () -> ()
    %52 = vector.shape_cast %51 : vector<2x8x8xf32> to vector<16x8xf32>
    %53 = vector.extract_strided_slice %6 {offsets = [0, 16], sizes = [16, 8], strides = [1, 1]} : vector<16x384xf32> to vector<16x8xf32>
    %54 = arith.truncf %53 : vector<16x8xf32> to vector<16x8xbf16>
    %55 = vector.shape_cast %54 : vector<16x8xbf16> to vector<2x8x8xbf16>
    %56 = vector.extract_strided_slice %6 {offsets = [0, 144], sizes = [16, 8], strides = [1, 1]} : vector<16x384xf32> to vector<16x8xf32>
    %57 = arith.truncf %56 : vector<16x8xf32> to vector<16x8xbf16>
    %58 = vector.shape_cast %57 : vector<16x8xbf16> to vector<2x8x8xbf16>
    %59 = vector.extract_strided_slice %6 {offsets = [0, 272], sizes = [16, 8], strides = [1, 1]} : vector<16x384xf32> to vector<16x8xf32>
    %60 = arith.truncf %59 : vector<16x8xf32> to vector<16x8xbf16>
    %61 = vector.shape_cast %60 : vector<16x8xbf16> to vector<2x8x8xbf16>
    "tpu.trace_start"() <{level = 10 : i32, message = "bqd,bkd->bqk"}> : () -> ()
    %cst_13 = arith.constant dense<0.000000e+00> : vector<2x8x8xf32>
    %62 = tpu.matmul %55, %58, %cst_13 {dimension_numbers = #tpu.dot_dimension_numbers<[2], [2], [1], [1], [0, 0, 0, 1, 1, 1], [0], [0]>} : vector<2x8x8xbf16>, vector<2x8x8xbf16>, vector<2x8x8xf32> -> vector<2x8x8xf32>
    "tpu.trace_stop"() : () -> ()
    %cst_14 = arith.constant dense<0xFF800000> : vector<2x8xf32>
    %63 = vector.multi_reduction <maximumf>, %62, %cst_14 [2] : vector<2x8x8xf32> to vector<2x8xf32>
    %64 = vector.shape_cast %63 : vector<2x8xf32> to vector<2x8x1xf32>
    %65 = vector.broadcast %64 : vector<2x8x1xf32> to vector<2x8x8xf32>
    %66 = arith.subf %62, %65 : vector<2x8x8xf32>
    %67 = math.exp %66 : vector<2x8x8xf32>
    %cst_15 = arith.constant dense<0.000000e+00> : vector<2x8xf32>
    %68 = vector.multi_reduction <add>, %67, %cst_15 [2] : vector<2x8x8xf32> to vector<2x8xf32>
    %69 = vector.shape_cast %68 : vector<2x8xf32> to vector<2x8x1xf32>
    %70 = tpu.reciprocal %69 {approx = true} : vector<2x8x1xf32> -> vector<2x8x1xf32>
    %71 = vector.broadcast %70 : vector<2x8x1xf32> to vector<2x8x8xf32>
    %72 = arith.mulf %67, %71 : vector<2x8x8xf32>
    %73 = arith.truncf %72 : vector<2x8x8xf32> to vector<2x8x8xbf16>
    "tpu.trace_start"() <{level = 10 : i32, message = "bqk,bkd->bqd"}> : () -> ()
    %cst_16 = arith.constant dense<0.000000e+00> : vector<2x8x8xf32>
    %74 = tpu.matmul %73, %61, %cst_16 {dimension_numbers = #tpu.dot_dimension_numbers<[2], [1], [1], [2], [0, 0, 0, 1, 1, 2], [0], [0]>} : vector<2x8x8xbf16>, vector<2x8x8xbf16>, vector<2x8x8xf32> -> vector<2x8x8xf32>
    "tpu.trace_stop"() : () -> ()
    %75 = vector.shape_cast %74 : vector<2x8x8xf32> to vector<16x8xf32>
    %76 = vector.extract_strided_slice %6 {offsets = [0, 24], sizes = [16, 8], strides = [1, 1]} : vector<16x384xf32> to vector<16x8xf32>
    %77 = arith.truncf %76 : vector<16x8xf32> to vector<16x8xbf16>
    %78 = vector.shape_cast %77 : vector<16x8xbf16> to vector<2x8x8xbf16>
    %79 = vector.extract_strided_slice %6 {offsets = [0, 152], sizes = [16, 8], strides = [1, 1]} : vector<16x384xf32> to vector<16x8xf32>
    %80 = arith.truncf %79 : vector<16x8xf32> to vector<16x8xbf16>
    %81 = vector.shape_cast %80 : vector<16x8xbf16> to vector<2x8x8xbf16>
    %82 = vector.extract_strided_slice %6 {offsets = [0, 280], sizes = [16, 8], strides = [1, 1]} : vector<16x384xf32> to vector<16x8xf32>
    %83 = arith.truncf %82 : vector<16x8xf32> to vector<16x8xbf16>
    %84 = vector.shape_cast %83 : vector<16x8xbf16> to vector<2x8x8xbf16>
    "tpu.trace_start"() <{level = 10 : i32, message = "bqd,bkd->bqk"}> : () -> ()
    %cst_17 = arith.constant dense<0.000000e+00> : vector<2x8x8xf32>
    %85 = tpu.matmul %78, %81, %cst_17 {dimension_numbers = #tpu.dot_dimension_numbers<[2], [2], [1], [1], [0, 0, 0, 1, 1, 1], [0], [0]>} : vector<2x8x8xbf16>, vector<2x8x8xbf16>, vector<2x8x8xf32> -> vector<2x8x8xf32>
    "tpu.trace_stop"() : () -> ()
    %cst_18 = arith.constant dense<0xFF800000> : vector<2x8xf32>
    %86 = vector.multi_reduction <maximumf>, %85, %cst_18 [2] : vector<2x8x8xf32> to vector<2x8xf32>
    %87 = vector.shape_cast %86 : vector<2x8xf32> to vector<2x8x1xf32>
    %88 = vector.broadcast %87 : vector<2x8x1xf32> to vector<2x8x8xf32>
    %89 = arith.subf %85, %88 : vector<2x8x8xf32>
    %90 = math.exp %89 : vector<2x8x8xf32>
    %cst_19 = arith.constant dense<0.000000e+00> : vector<2x8xf32>
    %91 = vector.multi_reduction <add>, %90, %cst_19 [2] : vector<2x8x8xf32> to vector<2x8xf32>
    %92 = vector.shape_cast %91 : vector<2x8xf32> to vector<2x8x1xf32>
    %93 = tpu.reciprocal %92 {approx = true} : vector<2x8x1xf32> -> vector<2x8x1xf32>
    %94 = vector.broadcast %93 : vector<2x8x1xf32> to vector<2x8x8xf32>
    %95 = arith.mulf %90, %94 : vector<2x8x8xf32>
    %96 = arith.truncf %95 : vector<2x8x8xf32> to vector<2x8x8xbf16>
    "tpu.trace_start"() <{level = 10 : i32, message = "bqk,bkd->bqd"}> : () -> ()
    %cst_20 = arith.constant dense<0.000000e+00> : vector<2x8x8xf32>
    %97 = tpu.matmul %96, %84, %cst_20 {dimension_numbers = #tpu.dot_dimension_numbers<[2], [1], [1], [2], [0, 0, 0, 1, 1, 2], [0], [0]>} : vector<2x8x8xbf16>, vector<2x8x8xbf16>, vector<2x8x8xf32> -> vector<2x8x8xf32>
    "tpu.trace_stop"() : () -> ()
    %98 = vector.shape_cast %97 : vector<2x8x8xf32> to vector<16x8xf32>
    %99 = vector.extract_strided_slice %6 {offsets = [0, 32], sizes = [16, 8], strides = [1, 1]} : vector<16x384xf32> to vector<16x8xf32>
    %100 = arith.truncf %99 : vector<16x8xf32> to vector<16x8xbf16>
    %101 = vector.shape_cast %100 : vector<16x8xbf16> to vector<2x8x8xbf16>
    %102 = vector.extract_strided_slice %6 {offsets = [0, 160], sizes = [16, 8], strides = [1, 1]} : vector<16x384xf32> to vector<16x8xf32>
    %103 = arith.truncf %102 : vector<16x8xf32> to vector<16x8xbf16>
    %104 = vector.shape_cast %103 : vector<16x8xbf16> to vector<2x8x8xbf16>
    %105 = vector.extract_strided_slice %6 {offsets = [0, 288], sizes = [16, 8], strides = [1, 1]} : vector<16x384xf32> to vector<16x8xf32>
    %106 = arith.truncf %105 : vector<16x8xf32> to vector<16x8xbf16>
    %107 = vector.shape_cast %106 : vector<16x8xbf16> to vector<2x8x8xbf16>
    "tpu.trace_start"() <{level = 10 : i32, message = "bqd,bkd->bqk"}> : () -> ()
    %cst_21 = arith.constant dense<0.000000e+00> : vector<2x8x8xf32>
    %108 = tpu.matmul %101, %104, %cst_21 {dimension_numbers = #tpu.dot_dimension_numbers<[2], [2], [1], [1], [0, 0, 0, 1, 1, 1], [0], [0]>} : vector<2x8x8xbf16>, vector<2x8x8xbf16>, vector<2x8x8xf32> -> vector<2x8x8xf32>
    "tpu.trace_stop"() : () -> ()
    %cst_22 = arith.constant dense<0xFF800000> : vector<2x8xf32>
    %109 = vector.multi_reduction <maximumf>, %108, %cst_22 [2] : vector<2x8x8xf32> to vector<2x8xf32>
    %110 = vector.shape_cast %109 : vector<2x8xf32> to vector<2x8x1xf32>
    %111 = vector.broadcast %110 : vector<2x8x1xf32> to vector<2x8x8xf32>
    %112 = arith.subf %108, %111 : vector<2x8x8xf32>
    %113 = math.exp %112 : vector<2x8x8xf32>
    %cst_23 = arith.constant dense<0.000000e+00> : vector<2x8xf32>
    %114 = vector.multi_reduction <add>, %113, %cst_23 [2] : vector<2x8x8xf32> to vector<2x8xf32>
    %115 = vector.shape_cast %114 : vector<2x8xf32> to vector<2x8x1xf32>
    %116 = tpu.reciprocal %115 {approx = true} : vector<2x8x1xf32> -> vector<2x8x1xf32>
    %117 = vector.broadcast %116 : vector<2x8x1xf32> to vector<2x8x8xf32>
    %118 = arith.mulf %113, %117 : vector<2x8x8xf32>
    %119 = arith.truncf %118 : vector<2x8x8xf32> to vector<2x8x8xbf16>
    "tpu.trace_start"() <{level = 10 : i32, message = "bqk,bkd->bqd"}> : () -> ()
    %cst_24 = arith.constant dense<0.000000e+00> : vector<2x8x8xf32>
    %120 = tpu.matmul %119, %107, %cst_24 {dimension_numbers = #tpu.dot_dimension_numbers<[2], [1], [1], [2], [0, 0, 0, 1, 1, 2], [0], [0]>} : vector<2x8x8xbf16>, vector<2x8x8xbf16>, vector<2x8x8xf32> -> vector<2x8x8xf32>
    "tpu.trace_stop"() : () -> ()
    %121 = vector.shape_cast %120 : vector<2x8x8xf32> to vector<16x8xf32>
    %122 = vector.extract_strided_slice %6 {offsets = [0, 40], sizes = [16, 8], strides = [1, 1]} : vector<16x384xf32> to vector<16x8xf32>
    %123 = arith.truncf %122 : vector<16x8xf32> to vector<16x8xbf16>
    %124 = vector.shape_cast %123 : vector<16x8xbf16> to vector<2x8x8xbf16>
    %125 = vector.extract_strided_slice %6 {offsets = [0, 168], sizes = [16, 8], strides = [1, 1]} : vector<16x384xf32> to vector<16x8xf32>
    %126 = arith.truncf %125 : vector<16x8xf32> to vector<16x8xbf16>
    %127 = vector.shape_cast %126 : vector<16x8xbf16> to vector<2x8x8xbf16>
    %128 = vector.extract_strided_slice %6 {offsets = [0, 296], sizes = [16, 8], strides = [1, 1]} : vector<16x384xf32> to vector<16x8xf32>
    %129 = arith.truncf %128 : vector<16x8xf32> to vector<16x8xbf16>
    %130 = vector.shape_cast %129 : vector<16x8xbf16> to vector<2x8x8xbf16>
    "tpu.trace_start"() <{level = 10 : i32, message = "bqd,bkd->bqk"}> : () -> ()
    %cst_25 = arith.constant dense<0.000000e+00> : vector<2x8x8xf32>
    %131 = tpu.matmul %124, %127, %cst_25 {dimension_numbers = #tpu.dot_dimension_numbers<[2], [2], [1], [1], [0, 0, 0, 1, 1, 1], [0], [0]>} : vector<2x8x8xbf16>, vector<2x8x8xbf16>, vector<2x8x8xf32> -> vector<2x8x8xf32>
    "tpu.trace_stop"() : () -> ()
    %cst_26 = arith.constant dense<0xFF800000> : vector<2x8xf32>
    %132 = vector.multi_reduction <maximumf>, %131, %cst_26 [2] : vector<2x8x8xf32> to vector<2x8xf32>
    %133 = vector.shape_cast %132 : vector<2x8xf32> to vector<2x8x1xf32>
    %134 = vector.broadcast %133 : vector<2x8x1xf32> to vector<2x8x8xf32>
    %135 = arith.subf %131, %134 : vector<2x8x8xf32>
    %136 = math.exp %135 : vector<2x8x8xf32>
    %cst_27 = arith.constant dense<0.000000e+00> : vector<2x8xf32>
    %137 = vector.multi_reduction <add>, %136, %cst_27 [2] : vector<2x8x8xf32> to vector<2x8xf32>
    %138 = vector.shape_cast %137 : vector<2x8xf32> to vector<2x8x1xf32>
    %139 = tpu.reciprocal %138 {approx = true} : vector<2x8x1xf32> -> vector<2x8x1xf32>
    %140 = vector.broadcast %139 : vector<2x8x1xf32> to vector<2x8x8xf32>
    %141 = arith.mulf %136, %140 : vector<2x8x8xf32>
    %142 = arith.truncf %141 : vector<2x8x8xf32> to vector<2x8x8xbf16>
    "tpu.trace_start"() <{level = 10 : i32, message = "bqk,bkd->bqd"}> : () -> ()
    %cst_28 = arith.constant dense<0.000000e+00> : vector<2x8x8xf32>
    %143 = tpu.matmul %142, %130, %cst_28 {dimension_numbers = #tpu.dot_dimension_numbers<[2], [1], [1], [2], [0, 0, 0, 1, 1, 2], [0], [0]>} : vector<2x8x8xbf16>, vector<2x8x8xbf16>, vector<2x8x8xf32> -> vector<2x8x8xf32>
    "tpu.trace_stop"() : () -> ()
    %144 = vector.shape_cast %143 : vector<2x8x8xf32> to vector<16x8xf32>
    %145 = vector.extract_strided_slice %6 {offsets = [0, 48], sizes = [16, 8], strides = [1, 1]} : vector<16x384xf32> to vector<16x8xf32>
    %146 = arith.truncf %145 : vector<16x8xf32> to vector<16x8xbf16>
    %147 = vector.shape_cast %146 : vector<16x8xbf16> to vector<2x8x8xbf16>
    %148 = vector.extract_strided_slice %6 {offsets = [0, 176], sizes = [16, 8], strides = [1, 1]} : vector<16x384xf32> to vector<16x8xf32>
    %149 = arith.truncf %148 : vector<16x8xf32> to vector<16x8xbf16>
    %150 = vector.shape_cast %149 : vector<16x8xbf16> to vector<2x8x8xbf16>
    %151 = vector.extract_strided_slice %6 {offsets = [0, 304], sizes = [16, 8], strides = [1, 1]} : vector<16x384xf32> to vector<16x8xf32>
    %152 = arith.truncf %151 : vector<16x8xf32> to vector<16x8xbf16>
    %153 = vector.shape_cast %152 : vector<16x8xbf16> to vector<2x8x8xbf16>
    "tpu.trace_start"() <{level = 10 : i32, message = "bqd,bkd->bqk"}> : () -> ()
    %cst_29 = arith.constant dense<0.000000e+00> : vector<2x8x8xf32>
    %154 = tpu.matmul %147, %150, %cst_29 {dimension_numbers = #tpu.dot_dimension_numbers<[2], [2], [1], [1], [0, 0, 0, 1, 1, 1], [0], [0]>} : vector<2x8x8xbf16>, vector<2x8x8xbf16>, vector<2x8x8xf32> -> vector<2x8x8xf32>
    "tpu.trace_stop"() : () -> ()
    %cst_30 = arith.constant dense<0xFF800000> : vector<2x8xf32>
    %155 = vector.multi_reduction <maximumf>, %154, %cst_30 [2] : vector<2x8x8xf32> to vector<2x8xf32>
    %156 = vector.shape_cast %155 : vector<2x8xf32> to vector<2x8x1xf32>
    %157 = vector.broadcast %156 : vector<2x8x1xf32> to vector<2x8x8xf32>
    %158 = arith.subf %154, %157 : vector<2x8x8xf32>
    %159 = math.exp %158 : vector<2x8x8xf32>
    %cst_31 = arith.constant dense<0.000000e+00> : vector<2x8xf32>
    %160 = vector.multi_reduction <add>, %159, %cst_31 [2] : vector<2x8x8xf32> to vector<2x8xf32>
    %161 = vector.shape_cast %160 : vector<2x8xf32> to vector<2x8x1xf32>
    %162 = tpu.reciprocal %161 {approx = true} : vector<2x8x1xf32> -> vector<2x8x1xf32>
    %163 = vector.broadcast %162 : vector<2x8x1xf32> to vector<2x8x8xf32>
    %164 = arith.mulf %159, %163 : vector<2x8x8xf32>
    %165 = arith.truncf %164 : vector<2x8x8xf32> to vector<2x8x8xbf16>
    "tpu.trace_start"() <{level = 10 : i32, message = "bqk,bkd->bqd"}> : () -> ()
    %cst_32 = arith.constant dense<0.000000e+00> : vector<2x8x8xf32>
    %166 = tpu.matmul %165, %153, %cst_32 {dimension_numbers = #tpu.dot_dimension_numbers<[2], [1], [1], [2], [0, 0, 0, 1, 1, 2], [0], [0]>} : vector<2x8x8xbf16>, vector<2x8x8xbf16>, vector<2x8x8xf32> -> vector<2x8x8xf32>
    "tpu.trace_stop"() : () -> ()
    %167 = vector.shape_cast %166 : vector<2x8x8xf32> to vector<16x8xf32>
    %168 = vector.extract_strided_slice %6 {offsets = [0, 56], sizes = [16, 8], strides = [1, 1]} : vector<16x384xf32> to vector<16x8xf32>
    %169 = arith.truncf %168 : vector<16x8xf32> to vector<16x8xbf16>
    %170 = vector.shape_cast %169 : vector<16x8xbf16> to vector<2x8x8xbf16>
    %171 = vector.extract_strided_slice %6 {offsets = [0, 184], sizes = [16, 8], strides = [1, 1]} : vector<16x384xf32> to vector<16x8xf32>
    %172 = arith.truncf %171 : vector<16x8xf32> to vector<16x8xbf16>
    %173 = vector.shape_cast %172 : vector<16x8xbf16> to vector<2x8x8xbf16>
    %174 = vector.extract_strided_slice %6 {offsets = [0, 312], sizes = [16, 8], strides = [1, 1]} : vector<16x384xf32> to vector<16x8xf32>
    %175 = arith.truncf %174 : vector<16x8xf32> to vector<16x8xbf16>
    %176 = vector.shape_cast %175 : vector<16x8xbf16> to vector<2x8x8xbf16>
    "tpu.trace_start"() <{level = 10 : i32, message = "bqd,bkd->bqk"}> : () -> ()
    %cst_33 = arith.constant dense<0.000000e+00> : vector<2x8x8xf32>
    %177 = tpu.matmul %170, %173, %cst_33 {dimension_numbers = #tpu.dot_dimension_numbers<[2], [2], [1], [1], [0, 0, 0, 1, 1, 1], [0], [0]>} : vector<2x8x8xbf16>, vector<2x8x8xbf16>, vector<2x8x8xf32> -> vector<2x8x8xf32>
    "tpu.trace_stop"() : () -> ()
    %cst_34 = arith.constant dense<0xFF800000> : vector<2x8xf32>
    %178 = vector.multi_reduction <maximumf>, %177, %cst_34 [2] : vector<2x8x8xf32> to vector<2x8xf32>
    %179 = vector.shape_cast %178 : vector<2x8xf32> to vector<2x8x1xf32>
    %180 = vector.broadcast %179 : vector<2x8x1xf32> to vector<2x8x8xf32>
    %181 = arith.subf %177, %180 : vector<2x8x8xf32>
    %182 = math.exp %181 : vector<2x8x8xf32>
    %cst_35 = arith.constant dense<0.000000e+00> : vector<2x8xf32>
    %183 = vector.multi_reduction <add>, %182, %cst_35 [2] : vector<2x8x8xf32> to vector<2x8xf32>
    %184 = vector.shape_cast %183 : vector<2x8xf32> to vector<2x8x1xf32>
    %185 = tpu.reciprocal %184 {approx = true} : vector<2x8x1xf32> -> vector<2x8x1xf32>
    %186 = vector.broadcast %185 : vector<2x8x1xf32> to vector<2x8x8xf32>
    %187 = arith.mulf %182, %186 : vector<2x8x8xf32>
    %188 = arith.truncf %187 : vector<2x8x8xf32> to vector<2x8x8xbf16>
    "tpu.trace_start"() <{level = 10 : i32, message = "bqk,bkd->bqd"}> : () -> ()
    %cst_36 = arith.constant dense<0.000000e+00> : vector<2x8x8xf32>
    %189 = tpu.matmul %188, %176, %cst_36 {dimension_numbers = #tpu.dot_dimension_numbers<[2], [1], [1], [2], [0, 0, 0, 1, 1, 2], [0], [0]>} : vector<2x8x8xbf16>, vector<2x8x8xbf16>, vector<2x8x8xf32> -> vector<2x8x8xf32>
    "tpu.trace_stop"() : () -> ()
    %190 = vector.shape_cast %189 : vector<2x8x8xf32> to vector<16x8xf32>
    %191 = vector.extract_strided_slice %6 {offsets = [0, 64], sizes = [16, 8], strides = [1, 1]} : vector<16x384xf32> to vector<16x8xf32>
    %192 = arith.truncf %191 : vector<16x8xf32> to vector<16x8xbf16>
    %193 = vector.shape_cast %192 : vector<16x8xbf16> to vector<2x8x8xbf16>
    %194 = vector.extract_strided_slice %6 {offsets = [0, 192], sizes = [16, 8], strides = [1, 1]} : vector<16x384xf32> to vector<16x8xf32>
    %195 = arith.truncf %194 : vector<16x8xf32> to vector<16x8xbf16>
    %196 = vector.shape_cast %195 : vector<16x8xbf16> to vector<2x8x8xbf16>
    %197 = vector.extract_strided_slice %6 {offsets = [0, 320], sizes = [16, 8], strides = [1, 1]} : vector<16x384xf32> to vector<16x8xf32>
    %198 = arith.truncf %197 : vector<16x8xf32> to vector<16x8xbf16>
    %199 = vector.shape_cast %198 : vector<16x8xbf16> to vector<2x8x8xbf16>
    "tpu.trace_start"() <{level = 10 : i32, message = "bqd,bkd->bqk"}> : () -> ()
    %cst_37 = arith.constant dense<0.000000e+00> : vector<2x8x8xf32>
    %200 = tpu.matmul %193, %196, %cst_37 {dimension_numbers = #tpu.dot_dimension_numbers<[2], [2], [1], [1], [0, 0, 0, 1, 1, 1], [0], [0]>} : vector<2x8x8xbf16>, vector<2x8x8xbf16>, vector<2x8x8xf32> -> vector<2x8x8xf32>
    "tpu.trace_stop"() : () -> ()
    %cst_38 = arith.constant dense<0xFF800000> : vector<2x8xf32>
    %201 = vector.multi_reduction <maximumf>, %200, %cst_38 [2] : vector<2x8x8xf32> to vector<2x8xf32>
    %202 = vector.shape_cast %201 : vector<2x8xf32> to vector<2x8x1xf32>
    %203 = vector.broadcast %202 : vector<2x8x1xf32> to vector<2x8x8xf32>
    %204 = arith.subf %200, %203 : vector<2x8x8xf32>
    %205 = math.exp %204 : vector<2x8x8xf32>
    %cst_39 = arith.constant dense<0.000000e+00> : vector<2x8xf32>
    %206 = vector.multi_reduction <add>, %205, %cst_39 [2] : vector<2x8x8xf32> to vector<2x8xf32>
    %207 = vector.shape_cast %206 : vector<2x8xf32> to vector<2x8x1xf32>
    %208 = tpu.reciprocal %207 {approx = true} : vector<2x8x1xf32> -> vector<2x8x1xf32>
    %209 = vector.broadcast %208 : vector<2x8x1xf32> to vector<2x8x8xf32>
    %210 = arith.mulf %205, %209 : vector<2x8x8xf32>
    %211 = arith.truncf %210 : vector<2x8x8xf32> to vector<2x8x8xbf16>
    "tpu.trace_start"() <{level = 10 : i32, message = "bqk,bkd->bqd"}> : () -> ()
    %cst_40 = arith.constant dense<0.000000e+00> : vector<2x8x8xf32>
    %212 = tpu.matmul %211, %199, %cst_40 {dimension_numbers = #tpu.dot_dimension_numbers<[2], [1], [1], [2], [0, 0, 0, 1, 1, 2], [0], [0]>} : vector<2x8x8xbf16>, vector<2x8x8xbf16>, vector<2x8x8xf32> -> vector<2x8x8xf32>
    "tpu.trace_stop"() : () -> ()
    %213 = vector.shape_cast %212 : vector<2x8x8xf32> to vector<16x8xf32>
    %214 = vector.extract_strided_slice %6 {offsets = [0, 72], sizes = [16, 8], strides = [1, 1]} : vector<16x384xf32> to vector<16x8xf32>
    %215 = arith.truncf %214 : vector<16x8xf32> to vector<16x8xbf16>
    %216 = vector.shape_cast %215 : vector<16x8xbf16> to vector<2x8x8xbf16>
    %217 = vector.extract_strided_slice %6 {offsets = [0, 200], sizes = [16, 8], strides = [1, 1]} : vector<16x384xf32> to vector<16x8xf32>
    %218 = arith.truncf %217 : vector<16x8xf32> to vector<16x8xbf16>
    %219 = vector.shape_cast %218 : vector<16x8xbf16> to vector<2x8x8xbf16>
    %220 = vector.extract_strided_slice %6 {offsets = [0, 328], sizes = [16, 8], strides = [1, 1]} : vector<16x384xf32> to vector<16x8xf32>
    %221 = arith.truncf %220 : vector<16x8xf32> to vector<16x8xbf16>
    %222 = vector.shape_cast %221 : vector<16x8xbf16> to vector<2x8x8xbf16>
    "tpu.trace_start"() <{level = 10 : i32, message = "bqd,bkd->bqk"}> : () -> ()
    %cst_41 = arith.constant dense<0.000000e+00> : vector<2x8x8xf32>
    %223 = tpu.matmul %216, %219, %cst_41 {dimension_numbers = #tpu.dot_dimension_numbers<[2], [2], [1], [1], [0, 0, 0, 1, 1, 1], [0], [0]>} : vector<2x8x8xbf16>, vector<2x8x8xbf16>, vector<2x8x8xf32> -> vector<2x8x8xf32>
    "tpu.trace_stop"() : () -> ()
    %cst_42 = arith.constant dense<0xFF800000> : vector<2x8xf32>
    %224 = vector.multi_reduction <maximumf>, %223, %cst_42 [2] : vector<2x8x8xf32> to vector<2x8xf32>
    %225 = vector.shape_cast %224 : vector<2x8xf32> to vector<2x8x1xf32>
    %226 = vector.broadcast %225 : vector<2x8x1xf32> to vector<2x8x8xf32>
    %227 = arith.subf %223, %226 : vector<2x8x8xf32>
    %228 = math.exp %227 : vector<2x8x8xf32>
    %cst_43 = arith.constant dense<0.000000e+00> : vector<2x8xf32>
    %229 = vector.multi_reduction <add>, %228, %cst_43 [2] : vector<2x8x8xf32> to vector<2x8xf32>
    %230 = vector.shape_cast %229 : vector<2x8xf32> to vector<2x8x1xf32>
    %231 = tpu.reciprocal %230 {approx = true} : vector<2x8x1xf32> -> vector<2x8x1xf32>
    %232 = vector.broadcast %231 : vector<2x8x1xf32> to vector<2x8x8xf32>
    %233 = arith.mulf %228, %232 : vector<2x8x8xf32>
    %234 = arith.truncf %233 : vector<2x8x8xf32> to vector<2x8x8xbf16>
    "tpu.trace_start"() <{level = 10 : i32, message = "bqk,bkd->bqd"}> : () -> ()
    %cst_44 = arith.constant dense<0.000000e+00> : vector<2x8x8xf32>
    %235 = tpu.matmul %234, %222, %cst_44 {dimension_numbers = #tpu.dot_dimension_numbers<[2], [1], [1], [2], [0, 0, 0, 1, 1, 2], [0], [0]>} : vector<2x8x8xbf16>, vector<2x8x8xbf16>, vector<2x8x8xf32> -> vector<2x8x8xf32>
    "tpu.trace_stop"() : () -> ()
    %236 = vector.shape_cast %235 : vector<2x8x8xf32> to vector<16x8xf32>
    %237 = vector.extract_strided_slice %6 {offsets = [0, 80], sizes = [16, 8], strides = [1, 1]} : vector<16x384xf32> to vector<16x8xf32>
    %238 = arith.truncf %237 : vector<16x8xf32> to vector<16x8xbf16>
    %239 = vector.shape_cast %238 : vector<16x8xbf16> to vector<2x8x8xbf16>
    %240 = vector.extract_strided_slice %6 {offsets = [0, 208], sizes = [16, 8], strides = [1, 1]} : vector<16x384xf32> to vector<16x8xf32>
    %241 = arith.truncf %240 : vector<16x8xf32> to vector<16x8xbf16>
    %242 = vector.shape_cast %241 : vector<16x8xbf16> to vector<2x8x8xbf16>
    %243 = vector.extract_strided_slice %6 {offsets = [0, 336], sizes = [16, 8], strides = [1, 1]} : vector<16x384xf32> to vector<16x8xf32>
    %244 = arith.truncf %243 : vector<16x8xf32> to vector<16x8xbf16>
    %245 = vector.shape_cast %244 : vector<16x8xbf16> to vector<2x8x8xbf16>
    "tpu.trace_start"() <{level = 10 : i32, message = "bqd,bkd->bqk"}> : () -> ()
    %cst_45 = arith.constant dense<0.000000e+00> : vector<2x8x8xf32>
    %246 = tpu.matmul %239, %242, %cst_45 {dimension_numbers = #tpu.dot_dimension_numbers<[2], [2], [1], [1], [0, 0, 0, 1, 1, 1], [0], [0]>} : vector<2x8x8xbf16>, vector<2x8x8xbf16>, vector<2x8x8xf32> -> vector<2x8x8xf32>
    "tpu.trace_stop"() : () -> ()
    %cst_46 = arith.constant dense<0xFF800000> : vector<2x8xf32>
    %247 = vector.multi_reduction <maximumf>, %246, %cst_46 [2] : vector<2x8x8xf32> to vector<2x8xf32>
    %248 = vector.shape_cast %247 : vector<2x8xf32> to vector<2x8x1xf32>
    %249 = vector.broadcast %248 : vector<2x8x1xf32> to vector<2x8x8xf32>
    %250 = arith.subf %246, %249 : vector<2x8x8xf32>
    %251 = math.exp %250 : vector<2x8x8xf32>
    %cst_47 = arith.constant dense<0.000000e+00> : vector<2x8xf32>
    %252 = vector.multi_reduction <add>, %251, %cst_47 [2] : vector<2x8x8xf32> to vector<2x8xf32>
    %253 = vector.shape_cast %252 : vector<2x8xf32> to vector<2x8x1xf32>
    %254 = tpu.reciprocal %253 {approx = true} : vector<2x8x1xf32> -> vector<2x8x1xf32>
    %255 = vector.broadcast %254 : vector<2x8x1xf32> to vector<2x8x8xf32>
    %256 = arith.mulf %251, %255 : vector<2x8x8xf32>
    %257 = arith.truncf %256 : vector<2x8x8xf32> to vector<2x8x8xbf16>
    "tpu.trace_start"() <{level = 10 : i32, message = "bqk,bkd->bqd"}> : () -> ()
    %cst_48 = arith.constant dense<0.000000e+00> : vector<2x8x8xf32>
    %258 = tpu.matmul %257, %245, %cst_48 {dimension_numbers = #tpu.dot_dimension_numbers<[2], [1], [1], [2], [0, 0, 0, 1, 1, 2], [0], [0]>} : vector<2x8x8xbf16>, vector<2x8x8xbf16>, vector<2x8x8xf32> -> vector<2x8x8xf32>
    "tpu.trace_stop"() : () -> ()
    %259 = vector.shape_cast %258 : vector<2x8x8xf32> to vector<16x8xf32>
    %260 = vector.extract_strided_slice %6 {offsets = [0, 88], sizes = [16, 8], strides = [1, 1]} : vector<16x384xf32> to vector<16x8xf32>
    %261 = arith.truncf %260 : vector<16x8xf32> to vector<16x8xbf16>
    %262 = vector.shape_cast %261 : vector<16x8xbf16> to vector<2x8x8xbf16>
    %263 = vector.extract_strided_slice %6 {offsets = [0, 216], sizes = [16, 8], strides = [1, 1]} : vector<16x384xf32> to vector<16x8xf32>
    %264 = arith.truncf %263 : vector<16x8xf32> to vector<16x8xbf16>
    %265 = vector.shape_cast %264 : vector<16x8xbf16> to vector<2x8x8xbf16>
    %266 = vector.extract_strided_slice %6 {offsets = [0, 344], sizes = [16, 8], strides = [1, 1]} : vector<16x384xf32> to vector<16x8xf32>
    %267 = arith.truncf %266 : vector<16x8xf32> to vector<16x8xbf16>
    %268 = vector.shape_cast %267 : vector<16x8xbf16> to vector<2x8x8xbf16>
    "tpu.trace_start"() <{level = 10 : i32, message = "bqd,bkd->bqk"}> : () -> ()
    %cst_49 = arith.constant dense<0.000000e+00> : vector<2x8x8xf32>
    %269 = tpu.matmul %262, %265, %cst_49 {dimension_numbers = #tpu.dot_dimension_numbers<[2], [2], [1], [1], [0, 0, 0, 1, 1, 1], [0], [0]>} : vector<2x8x8xbf16>, vector<2x8x8xbf16>, vector<2x8x8xf32> -> vector<2x8x8xf32>
    "tpu.trace_stop"() : () -> ()
    %cst_50 = arith.constant dense<0xFF800000> : vector<2x8xf32>
    %270 = vector.multi_reduction <maximumf>, %269, %cst_50 [2] : vector<2x8x8xf32> to vector<2x8xf32>
    %271 = vector.shape_cast %270 : vector<2x8xf32> to vector<2x8x1xf32>
    %272 = vector.broadcast %271 : vector<2x8x1xf32> to vector<2x8x8xf32>
    %273 = arith.subf %269, %272 : vector<2x8x8xf32>
    %274 = math.exp %273 : vector<2x8x8xf32>
    %cst_51 = arith.constant dense<0.000000e+00> : vector<2x8xf32>
    %275 = vector.multi_reduction <add>, %274, %cst_51 [2] : vector<2x8x8xf32> to vector<2x8xf32>
    %276 = vector.shape_cast %275 : vector<2x8xf32> to vector<2x8x1xf32>
    %277 = tpu.reciprocal %276 {approx = true} : vector<2x8x1xf32> -> vector<2x8x1xf32>
    %278 = vector.broadcast %277 : vector<2x8x1xf32> to vector<2x8x8xf32>
    %279 = arith.mulf %274, %278 : vector<2x8x8xf32>
    %280 = arith.truncf %279 : vector<2x8x8xf32> to vector<2x8x8xbf16>
    "tpu.trace_start"() <{level = 10 : i32, message = "bqk,bkd->bqd"}> : () -> ()
    %cst_52 = arith.constant dense<0.000000e+00> : vector<2x8x8xf32>
    %281 = tpu.matmul %280, %268, %cst_52 {dimension_numbers = #tpu.dot_dimension_numbers<[2], [1], [1], [2], [0, 0, 0, 1, 1, 2], [0], [0]>} : vector<2x8x8xbf16>, vector<2x8x8xbf16>, vector<2x8x8xf32> -> vector<2x8x8xf32>
    "tpu.trace_stop"() : () -> ()
    %282 = vector.shape_cast %281 : vector<2x8x8xf32> to vector<16x8xf32>
    %283 = vector.extract_strided_slice %6 {offsets = [0, 96], sizes = [16, 8], strides = [1, 1]} : vector<16x384xf32> to vector<16x8xf32>
    %284 = arith.truncf %283 : vector<16x8xf32> to vector<16x8xbf16>
    %285 = vector.shape_cast %284 : vector<16x8xbf16> to vector<2x8x8xbf16>
    %286 = vector.extract_strided_slice %6 {offsets = [0, 224], sizes = [16, 8], strides = [1, 1]} : vector<16x384xf32> to vector<16x8xf32>
    %287 = arith.truncf %286 : vector<16x8xf32> to vector<16x8xbf16>
    %288 = vector.shape_cast %287 : vector<16x8xbf16> to vector<2x8x8xbf16>
    %289 = vector.extract_strided_slice %6 {offsets = [0, 352], sizes = [16, 8], strides = [1, 1]} : vector<16x384xf32> to vector<16x8xf32>
    %290 = arith.truncf %289 : vector<16x8xf32> to vector<16x8xbf16>
    %291 = vector.shape_cast %290 : vector<16x8xbf16> to vector<2x8x8xbf16>
    "tpu.trace_start"() <{level = 10 : i32, message = "bqd,bkd->bqk"}> : () -> ()
    %cst_53 = arith.constant dense<0.000000e+00> : vector<2x8x8xf32>
    %292 = tpu.matmul %285, %288, %cst_53 {dimension_numbers = #tpu.dot_dimension_numbers<[2], [2], [1], [1], [0, 0, 0, 1, 1, 1], [0], [0]>} : vector<2x8x8xbf16>, vector<2x8x8xbf16>, vector<2x8x8xf32> -> vector<2x8x8xf32>
    "tpu.trace_stop"() : () -> ()
    %cst_54 = arith.constant dense<0xFF800000> : vector<2x8xf32>
    %293 = vector.multi_reduction <maximumf>, %292, %cst_54 [2] : vector<2x8x8xf32> to vector<2x8xf32>
    %294 = vector.shape_cast %293 : vector<2x8xf32> to vector<2x8x1xf32>
    %295 = vector.broadcast %294 : vector<2x8x1xf32> to vector<2x8x8xf32>
    %296 = arith.subf %292, %295 : vector<2x8x8xf32>
    %297 = math.exp %296 : vector<2x8x8xf32>
    %cst_55 = arith.constant dense<0.000000e+00> : vector<2x8xf32>
    %298 = vector.multi_reduction <add>, %297, %cst_55 [2] : vector<2x8x8xf32> to vector<2x8xf32>
    %299 = vector.shape_cast %298 : vector<2x8xf32> to vector<2x8x1xf32>
    %300 = tpu.reciprocal %299 {approx = true} : vector<2x8x1xf32> -> vector<2x8x1xf32>
    %301 = vector.broadcast %300 : vector<2x8x1xf32> to vector<2x8x8xf32>
    %302 = arith.mulf %297, %301 : vector<2x8x8xf32>
    %303 = arith.truncf %302 : vector<2x8x8xf32> to vector<2x8x8xbf16>
    "tpu.trace_start"() <{level = 10 : i32, message = "bqk,bkd->bqd"}> : () -> ()
    %cst_56 = arith.constant dense<0.000000e+00> : vector<2x8x8xf32>
    %304 = tpu.matmul %303, %291, %cst_56 {dimension_numbers = #tpu.dot_dimension_numbers<[2], [1], [1], [2], [0, 0, 0, 1, 1, 2], [0], [0]>} : vector<2x8x8xbf16>, vector<2x8x8xbf16>, vector<2x8x8xf32> -> vector<2x8x8xf32>
    "tpu.trace_stop"() : () -> ()
    %305 = vector.shape_cast %304 : vector<2x8x8xf32> to vector<16x8xf32>
    %306 = vector.extract_strided_slice %6 {offsets = [0, 104], sizes = [16, 8], strides = [1, 1]} : vector<16x384xf32> to vector<16x8xf32>
    %307 = arith.truncf %306 : vector<16x8xf32> to vector<16x8xbf16>
    %308 = vector.shape_cast %307 : vector<16x8xbf16> to vector<2x8x8xbf16>
    %309 = vector.extract_strided_slice %6 {offsets = [0, 232], sizes = [16, 8], strides = [1, 1]} : vector<16x384xf32> to vector<16x8xf32>
    %310 = arith.truncf %309 : vector<16x8xf32> to vector<16x8xbf16>
    %311 = vector.shape_cast %310 : vector<16x8xbf16> to vector<2x8x8xbf16>
    %312 = vector.extract_strided_slice %6 {offsets = [0, 360], sizes = [16, 8], strides = [1, 1]} : vector<16x384xf32> to vector<16x8xf32>
    %313 = arith.truncf %312 : vector<16x8xf32> to vector<16x8xbf16>
    %314 = vector.shape_cast %313 : vector<16x8xbf16> to vector<2x8x8xbf16>
    "tpu.trace_start"() <{level = 10 : i32, message = "bqd,bkd->bqk"}> : () -> ()
    %cst_57 = arith.constant dense<0.000000e+00> : vector<2x8x8xf32>
    %315 = tpu.matmul %308, %311, %cst_57 {dimension_numbers = #tpu.dot_dimension_numbers<[2], [2], [1], [1], [0, 0, 0, 1, 1, 1], [0], [0]>} : vector<2x8x8xbf16>, vector<2x8x8xbf16>, vector<2x8x8xf32> -> vector<2x8x8xf32>
    "tpu.trace_stop"() : () -> ()
    %cst_58 = arith.constant dense<0xFF800000> : vector<2x8xf32>
    %316 = vector.multi_reduction <maximumf>, %315, %cst_58 [2] : vector<2x8x8xf32> to vector<2x8xf32>
    %317 = vector.shape_cast %316 : vector<2x8xf32> to vector<2x8x1xf32>
    %318 = vector.broadcast %317 : vector<2x8x1xf32> to vector<2x8x8xf32>
    %319 = arith.subf %315, %318 : vector<2x8x8xf32>
    %320 = math.exp %319 : vector<2x8x8xf32>
    %cst_59 = arith.constant dense<0.000000e+00> : vector<2x8xf32>
    %321 = vector.multi_reduction <add>, %320, %cst_59 [2] : vector<2x8x8xf32> to vector<2x8xf32>
    %322 = vector.shape_cast %321 : vector<2x8xf32> to vector<2x8x1xf32>
    %323 = tpu.reciprocal %322 {approx = true} : vector<2x8x1xf32> -> vector<2x8x1xf32>
    %324 = vector.broadcast %323 : vector<2x8x1xf32> to vector<2x8x8xf32>
    %325 = arith.mulf %320, %324 : vector<2x8x8xf32>
    %326 = arith.truncf %325 : vector<2x8x8xf32> to vector<2x8x8xbf16>
    "tpu.trace_start"() <{level = 10 : i32, message = "bqk,bkd->bqd"}> : () -> ()
    %cst_60 = arith.constant dense<0.000000e+00> : vector<2x8x8xf32>
    %327 = tpu.matmul %326, %314, %cst_60 {dimension_numbers = #tpu.dot_dimension_numbers<[2], [1], [1], [2], [0, 0, 0, 1, 1, 2], [0], [0]>} : vector<2x8x8xbf16>, vector<2x8x8xbf16>, vector<2x8x8xf32> -> vector<2x8x8xf32>
    "tpu.trace_stop"() : () -> ()
    %328 = vector.shape_cast %327 : vector<2x8x8xf32> to vector<16x8xf32>
    %329 = vector.extract_strided_slice %6 {offsets = [0, 112], sizes = [16, 8], strides = [1, 1]} : vector<16x384xf32> to vector<16x8xf32>
    %330 = arith.truncf %329 : vector<16x8xf32> to vector<16x8xbf16>
    %331 = vector.shape_cast %330 : vector<16x8xbf16> to vector<2x8x8xbf16>
    %332 = vector.extract_strided_slice %6 {offsets = [0, 240], sizes = [16, 8], strides = [1, 1]} : vector<16x384xf32> to vector<16x8xf32>
    %333 = arith.truncf %332 : vector<16x8xf32> to vector<16x8xbf16>
    %334 = vector.shape_cast %333 : vector<16x8xbf16> to vector<2x8x8xbf16>
    %335 = vector.extract_strided_slice %6 {offsets = [0, 368], sizes = [16, 8], strides = [1, 1]} : vector<16x384xf32> to vector<16x8xf32>
    %336 = arith.truncf %335 : vector<16x8xf32> to vector<16x8xbf16>
    %337 = vector.shape_cast %336 : vector<16x8xbf16> to vector<2x8x8xbf16>
    "tpu.trace_start"() <{level = 10 : i32, message = "bqd,bkd->bqk"}> : () -> ()
    %cst_61 = arith.constant dense<0.000000e+00> : vector<2x8x8xf32>
    %338 = tpu.matmul %331, %334, %cst_61 {dimension_numbers = #tpu.dot_dimension_numbers<[2], [2], [1], [1], [0, 0, 0, 1, 1, 1], [0], [0]>} : vector<2x8x8xbf16>, vector<2x8x8xbf16>, vector<2x8x8xf32> -> vector<2x8x8xf32>
    "tpu.trace_stop"() : () -> ()
    %cst_62 = arith.constant dense<0xFF800000> : vector<2x8xf32>
    %339 = vector.multi_reduction <maximumf>, %338, %cst_62 [2] : vector<2x8x8xf32> to vector<2x8xf32>
    %340 = vector.shape_cast %339 : vector<2x8xf32> to vector<2x8x1xf32>
    %341 = vector.broadcast %340 : vector<2x8x1xf32> to vector<2x8x8xf32>
    %342 = arith.subf %338, %341 : vector<2x8x8xf32>
    %343 = math.exp %342 : vector<2x8x8xf32>
    %cst_63 = arith.constant dense<0.000000e+00> : vector<2x8xf32>
    %344 = vector.multi_reduction <add>, %343, %cst_63 [2] : vector<2x8x8xf32> to vector<2x8xf32>
    %345 = vector.shape_cast %344 : vector<2x8xf32> to vector<2x8x1xf32>
    %346 = tpu.reciprocal %345 {approx = true} : vector<2x8x1xf32> -> vector<2x8x1xf32>
    %347 = vector.broadcast %346 : vector<2x8x1xf32> to vector<2x8x8xf32>
    %348 = arith.mulf %343, %347 : vector<2x8x8xf32>
    %349 = arith.truncf %348 : vector<2x8x8xf32> to vector<2x8x8xbf16>
    "tpu.trace_start"() <{level = 10 : i32, message = "bqk,bkd->bqd"}> : () -> ()
    %cst_64 = arith.constant dense<0.000000e+00> : vector<2x8x8xf32>
    %350 = tpu.matmul %349, %337, %cst_64 {dimension_numbers = #tpu.dot_dimension_numbers<[2], [1], [1], [2], [0, 0, 0, 1, 1, 2], [0], [0]>} : vector<2x8x8xbf16>, vector<2x8x8xbf16>, vector<2x8x8xf32> -> vector<2x8x8xf32>
    "tpu.trace_stop"() : () -> ()
    %351 = vector.shape_cast %350 : vector<2x8x8xf32> to vector<16x8xf32>
    %352 = vector.extract_strided_slice %6 {offsets = [0, 120], sizes = [16, 8], strides = [1, 1]} : vector<16x384xf32> to vector<16x8xf32>
    %353 = arith.truncf %352 : vector<16x8xf32> to vector<16x8xbf16>
    %354 = vector.shape_cast %353 : vector<16x8xbf16> to vector<2x8x8xbf16>
    %355 = vector.extract_strided_slice %6 {offsets = [0, 248], sizes = [16, 8], strides = [1, 1]} : vector<16x384xf32> to vector<16x8xf32>
    %356 = arith.truncf %355 : vector<16x8xf32> to vector<16x8xbf16>
    %357 = vector.shape_cast %356 : vector<16x8xbf16> to vector<2x8x8xbf16>
    %358 = vector.extract_strided_slice %6 {offsets = [0, 376], sizes = [16, 8], strides = [1, 1]} : vector<16x384xf32> to vector<16x8xf32>
    %359 = arith.truncf %358 : vector<16x8xf32> to vector<16x8xbf16>
    %360 = vector.shape_cast %359 : vector<16x8xbf16> to vector<2x8x8xbf16>
    "tpu.trace_start"() <{level = 10 : i32, message = "bqd,bkd->bqk"}> : () -> ()
    %cst_65 = arith.constant dense<0.000000e+00> : vector<2x8x8xf32>
    %361 = tpu.matmul %354, %357, %cst_65 {dimension_numbers = #tpu.dot_dimension_numbers<[2], [2], [1], [1], [0, 0, 0, 1, 1, 1], [0], [0]>} : vector<2x8x8xbf16>, vector<2x8x8xbf16>, vector<2x8x8xf32> -> vector<2x8x8xf32>
    "tpu.trace_stop"() : () -> ()
    %cst_66 = arith.constant dense<0xFF800000> : vector<2x8xf32>
    %362 = vector.multi_reduction <maximumf>, %361, %cst_66 [2] : vector<2x8x8xf32> to vector<2x8xf32>
    %363 = vector.shape_cast %362 : vector<2x8xf32> to vector<2x8x1xf32>
    %364 = vector.broadcast %363 : vector<2x8x1xf32> to vector<2x8x8xf32>
    %365 = arith.subf %361, %364 : vector<2x8x8xf32>
    %366 = math.exp %365 : vector<2x8x8xf32>
    %cst_67 = arith.constant dense<0.000000e+00> : vector<2x8xf32>
    %367 = vector.multi_reduction <add>, %366, %cst_67 [2] : vector<2x8x8xf32> to vector<2x8xf32>
    %368 = vector.shape_cast %367 : vector<2x8xf32> to vector<2x8x1xf32>
    %369 = tpu.reciprocal %368 {approx = true} : vector<2x8x1xf32> -> vector<2x8x1xf32>
    %370 = vector.broadcast %369 : vector<2x8x1xf32> to vector<2x8x8xf32>
    %371 = arith.mulf %366, %370 : vector<2x8x8xf32>
    %372 = arith.truncf %371 : vector<2x8x8xf32> to vector<2x8x8xbf16>
    "tpu.trace_start"() <{level = 10 : i32, message = "bqk,bkd->bqd"}> : () -> ()
    %cst_68 = arith.constant dense<0.000000e+00> : vector<2x8x8xf32>
    %373 = tpu.matmul %372, %360, %cst_68 {dimension_numbers = #tpu.dot_dimension_numbers<[2], [1], [1], [2], [0, 0, 0, 1, 1, 2], [0], [0]>} : vector<2x8x8xbf16>, vector<2x8x8xbf16>, vector<2x8x8xf32> -> vector<2x8x8xf32>
    "tpu.trace_stop"() : () -> ()
    %374 = vector.shape_cast %373 : vector<2x8x8xf32> to vector<16x8xf32>
    %375 = tpu.concatenate %29, %52, %75, %98, %121, %144, %167, %190, %213, %236, %259, %282, %305, %328, %351, %374 in 1 : vector<16x8xf32>, vector<16x8xf32>, vector<16x8xf32>, vector<16x8xf32>, vector<16x8xf32>, vector<16x8xf32>, vector<16x8xf32>, vector<16x8xf32>, vector<16x8xf32>, vector<16x8xf32>, vector<16x8xf32>, vector<16x8xf32>, vector<16x8xf32>, vector<16x8xf32>, vector<16x8xf32>, vector<16x8xf32> -> vector<16x128xf32>
    %376 = arith.truncf %375 : vector<16x128xf32> to vector<16x128xbf16>
    %c0_69 = arith.constant 0 : index
    %c0_70 = arith.constant 0 : index
    %377 = vector.load %arg3[%c0_69, %c0_70] : memref<128x128xbf16, #tpu.memory_space<vmem>>, vector<128x128xbf16>
    %cst_71 = arith.constant dense<0.000000e+00> : vector<16x128xf32>
    %378 = tpu.matmul %376, %377, %cst_71 {dimension_numbers = #tpu.dot_dimension_numbers<[1], [0], [0], [1], [0, 0, 1, 1], [], []>} : vector<16x128xbf16>, vector<128x128xbf16>, vector<16x128xf32> -> vector<16x128xf32>
    %c0_72 = arith.constant 0 : index
    %c0_73 = arith.constant 0 : index
    %379 = vector.load %arg4[%c0_72, %c0_73] : memref<1x128xf32, #tpu.memory_space<vmem>>, vector<1x128xf32>
    %380 = vector.broadcast %379 : vector<1x128xf32> to vector<16x128xf32>
    %381 = arith.addf %378, %380 : vector<16x128xf32>
    %382 = arith.addf %0, %381 : vector<16x128xf32>
    %c0_74 = arith.constant 0 : index
    %c0_75 = arith.constant 0 : index
    %383 = vector.load %arg5[%c0_74, %c0_75] : memref<1x128xf32, #tpu.memory_space<vmem>>, vector<1x128xf32>
    %c0_76 = arith.constant 0 : index
    %c0_77 = arith.constant 0 : index
    %384 = vector.load %arg6[%c0_76, %c0_77] : memref<1x128xf32, #tpu.memory_space<vmem>>, vector<1x128xf32>
    %cst_78 = arith.constant dense<0.000000e+00> : vector<16xf32>
    %385 = vector.multi_reduction <add>, %382, %cst_78 [1] : vector<16x128xf32> to vector<16xf32>
    %386 = vector.shape_cast %385 : vector<16xf32> to vector<16x1xf32>
    %cst_79 = arith.constant 1.280000e+02 : f32
    %387 = vector.broadcast %cst_79 : f32 to vector<16x1xf32>
    %388 = arith.divf %386, %387 : vector<16x1xf32>
    %389 = vector.broadcast %388 : vector<16x1xf32> to vector<16x128xf32>
    %390 = arith.subf %382, %389 : vector<16x128xf32>
    %391 = arith.mulf %390, %390 : vector<16x128xf32>
    %cst_80 = arith.constant dense<0.000000e+00> : vector<16xf32>
    %392 = vector.multi_reduction <add>, %391, %cst_80 [1] : vector<16x128xf32> to vector<16xf32>
    %393 = vector.shape_cast %392 : vector<16xf32> to vector<16x1xf32>
    %cst_81 = arith.constant 1.280000e+02 : f32
    %394 = vector.broadcast %cst_81 : f32 to vector<16x1xf32>
    %395 = arith.divf %393, %394 : vector<16x1xf32>
    %396 = vector.broadcast %388 : vector<16x1xf32> to vector<16x128xf32>
    %397 = arith.subf %382, %396 : vector<16x128xf32>
    %cst_82 = arith.constant 9.99999996E-13 : f32
    %398 = vector.broadcast %cst_82 : f32 to vector<16x1xf32>
    %399 = arith.addf %395, %398 : vector<16x1xf32>
    %400 = math.rsqrt %399 : vector<16x1xf32>
    %401 = vector.broadcast %400 : vector<16x1xf32> to vector<16x128xf32>
    %402 = arith.mulf %397, %401 : vector<16x128xf32>
    %403 = vector.broadcast %383 : vector<1x128xf32> to vector<16x128xf32>
    %404 = arith.mulf %402, %403 : vector<16x128xf32>
    %405 = vector.broadcast %384 : vector<1x128xf32> to vector<16x128xf32>
    %406 = arith.addf %404, %405 : vector<16x128xf32>
    %407 = arith.truncf %406 : vector<16x128xf32> to vector<16x128xbf16>
    %c0_83 = arith.constant 0 : index
    %c0_84 = arith.constant 0 : index
    %408 = vector.load %arg7[%c0_83, %c0_84] : memref<128x256xbf16, #tpu.memory_space<vmem>>, vector<128x256xbf16>
    %cst_85 = arith.constant dense<0.000000e+00> : vector<16x256xf32>
    %409 = tpu.matmul %407, %408, %cst_85 {dimension_numbers = #tpu.dot_dimension_numbers<[1], [0], [0], [1], [0, 0, 1, 1], [], []>} : vector<16x128xbf16>, vector<128x256xbf16>, vector<16x256xf32> -> vector<16x256xf32>
    %c0_86 = arith.constant 0 : index
    %c0_87 = arith.constant 0 : index
    %410 = vector.load %arg8[%c0_86, %c0_87] : memref<1x256xf32, #tpu.memory_space<vmem>>, vector<1x256xf32>
    %411 = vector.broadcast %410 : vector<1x256xf32> to vector<16x256xf32>
    %412 = arith.addf %409, %411 : vector<16x256xf32>
    %cst_88 = arith.constant 5.000000e-01 : f32
    %413 = vector.broadcast %cst_88 : f32 to vector<16x256xf32>
    %414 = arith.mulf %413, %412 : vector<16x256xf32>
    %cst_89 = arith.constant 4.471500e-02 : f32
    %415 = vector.broadcast %cst_89 : f32 to vector<16x256xf32>
    %416 = arith.mulf %415, %412 : vector<16x256xf32>
    %417 = arith.mulf %416, %412 : vector<16x256xf32>
    %418 = arith.mulf %417, %412 : vector<16x256xf32>
    %419 = arith.addf %412, %418 : vector<16x256xf32>
    %cst_90 = arith.constant 0.797884583 : f32
    %420 = vector.broadcast %cst_90 : f32 to vector<16x256xf32>
    %421 = arith.mulf %420, %419 : vector<16x256xf32>
    %422 = math.tanh %421 : vector<16x256xf32>
    %cst_91 = arith.constant 1.000000e+00 : f32
    %423 = vector.broadcast %cst_91 : f32 to vector<16x256xf32>
    %424 = arith.addf %423, %422 : vector<16x256xf32>
    %425 = arith.mulf %414, %424 : vector<16x256xf32>
    %426 = arith.truncf %425 : vector<16x256xf32> to vector<16x256xbf16>
    %c0_92 = arith.constant 0 : index
    %c0_93 = arith.constant 0 : index
    %427 = vector.load %arg9[%c0_92, %c0_93] : memref<256x128xbf16, #tpu.memory_space<vmem>>, vector<256x128xbf16>
    %cst_94 = arith.constant dense<0.000000e+00> : vector<16x128xf32>
    %428 = tpu.matmul %426, %427, %cst_94 {dimension_numbers = #tpu.dot_dimension_numbers<[1], [0], [0], [1], [0, 0, 1, 1], [], []>} : vector<16x256xbf16>, vector<256x128xbf16>, vector<16x128xf32> -> vector<16x128xf32>
    %c0_95 = arith.constant 0 : index
    %c0_96 = arith.constant 0 : index
    %429 = vector.load %arg10[%c0_95, %c0_96] : memref<1x128xf32, #tpu.memory_space<vmem>>, vector<1x128xf32>
    %430 = vector.broadcast %429 : vector<1x128xf32> to vector<16x128xf32>
    %431 = arith.addf %428, %430 : vector<16x128xf32>
    %432 = arith.addf %406, %431 : vector<16x128xf32>
    %c0_97 = arith.constant 0 : index
    %c0_98 = arith.constant 0 : index
    %433 = vector.load %arg11[%c0_97, %c0_98] : memref<1x128xf32, #tpu.memory_space<vmem>>, vector<1x128xf32>
    %c0_99 = arith.constant 0 : index
    %c0_100 = arith.constant 0 : index
    %434 = vector.load %arg12[%c0_99, %c0_100] : memref<1x128xf32, #tpu.memory_space<vmem>>, vector<1x128xf32>
    %cst_101 = arith.constant dense<0.000000e+00> : vector<16xf32>
    %435 = vector.multi_reduction <add>, %432, %cst_101 [1] : vector<16x128xf32> to vector<16xf32>
    %436 = vector.shape_cast %435 : vector<16xf32> to vector<16x1xf32>
    %cst_102 = arith.constant 1.280000e+02 : f32
    %437 = vector.broadcast %cst_102 : f32 to vector<16x1xf32>
    %438 = arith.divf %436, %437 : vector<16x1xf32>
    %439 = vector.broadcast %438 : vector<16x1xf32> to vector<16x128xf32>
    %440 = arith.subf %432, %439 : vector<16x128xf32>
    %441 = arith.mulf %440, %440 : vector<16x128xf32>
    %cst_103 = arith.constant dense<0.000000e+00> : vector<16xf32>
    %442 = vector.multi_reduction <add>, %441, %cst_103 [1] : vector<16x128xf32> to vector<16xf32>
    %443 = vector.shape_cast %442 : vector<16xf32> to vector<16x1xf32>
    %cst_104 = arith.constant 1.280000e+02 : f32
    %444 = vector.broadcast %cst_104 : f32 to vector<16x1xf32>
    %445 = arith.divf %443, %444 : vector<16x1xf32>
    %446 = vector.broadcast %438 : vector<16x1xf32> to vector<16x128xf32>
    %447 = arith.subf %432, %446 : vector<16x128xf32>
    %cst_105 = arith.constant 9.99999996E-13 : f32
    %448 = vector.broadcast %cst_105 : f32 to vector<16x1xf32>
    %449 = arith.addf %445, %448 : vector<16x1xf32>
    %450 = math.rsqrt %449 : vector<16x1xf32>
    %451 = vector.broadcast %450 : vector<16x1xf32> to vector<16x128xf32>
    %452 = arith.mulf %447, %451 : vector<16x128xf32>
    %453 = vector.broadcast %433 : vector<1x128xf32> to vector<16x128xf32>
    %454 = arith.mulf %452, %453 : vector<16x128xf32>
    %455 = vector.broadcast %434 : vector<1x128xf32> to vector<16x128xf32>
    %456 = arith.addf %454, %455 : vector<16x128xf32>
    %c0_106 = arith.constant 0 : index
    %c0_107 = arith.constant 0 : index
    %457 = vector.load %arg13[%c0_106, %c0_107] : memref<16x128xf32, #tpu.memory_space<vmem>>, vector<16x128xf32>
    tpu.vector_store %arg13[%c0_106, %c0_107], %456 {strides = array<i32>} : memref<16x128xf32, #tpu.memory_space<vmem>>, vector<16x128xf32>,
    return
  }
}

</mosaic_0001>

<llo_original>
// kernel: tpu_custom_call.1
$region0: #{tpu_custom_call.1}
  #allocation0 [shape = 'u32[]', space=smem, size = 0x4, offset = 0x4, fixed_abs, tag = 'smem constant byte address 0x4 - core index']
  #allocation1 [shape = 'u32[144,128]{1,0:T(1,128)}', space=vmem, size = 0x12000, scoped, tag = 'internal scratch']
  %s0 = inlined_call_operand.hbm [shape: f32[16,128], index: 0, kind: input, shape index: {}]
  %s1 = inlined_call_operand.hbm [shape: bf16[128,384], index: 1, kind: input, shape index: {}]
  %s2 = inlined_call_operand.vmem [shape: f32[1,384], index: 2, kind: input, shape index: {}]
  %s3 = inlined_call_operand.hbm [shape: bf16[128,128], index: 3, kind: input, shape index: {}]
  %s4 = inlined_call_operand.vmem [shape: f32[1,128], index: 4, kind: input, shape index: {}]
  %s5 = inlined_call_operand.vmem [shape: f32[1,128], index: 5, kind: input, shape index: {}]
  %s6 = inlined_call_operand.vmem [shape: f32[1,128], index: 6, kind: input, shape index: {}]
  %s7 = inlined_call_operand.hbm [shape: bf16[128,256], index: 7, kind: input, shape index: {}]
  %s8 = inlined_call_operand.vmem [shape: f32[1,256], index: 8, kind: input, shape index: {}]
  %s9 = inlined_call_operand.hbm [shape: bf16[256,128], index: 9, kind: input, shape index: {}]
  %s10 = inlined_call_operand.vmem [shape: f32[1,128], index: 10, kind: input, shape index: {}]
  %s11 = inlined_call_operand.vmem [shape: f32[1,128], index: 11, kind: input, shape index: {}]
  %s12 = inlined_call_operand.vmem [shape: f32[1,128], index: 12, kind: input, shape index: {}]
  %s13 = inlined_call_operand.hbm [shape: f32[16,128], index: 13, kind: output, shape index: {}]
  %s14 = sld [smem:[#allocation0]]
  $region82: #{tpu_custom_call.1} parent=0
    _
  %s16 = ssub.s32 1, %s14
  %s17 = scalar_select 0, %s16, %s14
  $region1: #{tpu_custom_call.1} parent=0
    #allocation2 [shape = 'u8[8192]{0}', space=vmem, size = 0x2000, scoped, tag = 'input window, operand 0, single buffered']
    #allocation3 [shape = 's32[1]{0}', space=sflag, size = 0x4, scoped, tag = 'scoped memory for tpu_custom_call.1']
    #allocation4 [shape = 's32[1]{0}', space=sflag, size = 0x4, scoped, tag = 'scoped memory for tpu_custom_call.1']
    #allocation5 [shape = 'u8[98304]{0}', space=vmem, size = 0x18000, scoped, tag = 'input window, operand 1, single buffered']
    #allocation6 [shape = 's32[1]{0}', space=sflag, size = 0x4, scoped, tag = 'scoped memory for tpu_custom_call.1']
    #allocation7 [shape = 'u8[32768]{0}', space=vmem, size = 0x8000, scoped, tag = 'input window, operand 3, single buffered']
    #allocation8 [shape = 'u8[65536]{0}', space=vmem, size = 0x10000, scoped, tag = 'input window, operand 7, single buffered']
    #allocation9 [shape = 's32[1]{0}', space=sflag, size = 0x4, scoped, tag = 'scoped memory for tpu_custom_call.1']
    #allocation10 [shape = 'u8[65536]{0}', space=vmem, size = 0x10000, scoped, tag = 'input window, operand 9, single buffered']
    #allocation11 [shape = 'u8[8192]{0}', space=vmem, size = 0x2000, scoped, tag = 'output window, operand 0, single buffered']
    %18 = vsyncpa [#allocation3], 0
    %19 = vsyncpa [#allocation6], 0
    %20 = vsyncpa [#allocation9], 0
    %21 = vsyncpa [#allocation4], 0
    // Predicated region
    $region2: #{tpu_custom_call.1} parent=1 // pred_check
      _
    $region3: #{tpu_custom_call.1} parent=1 // pred_check_branch
      %23 = sbr.rel (0) target = $region5
    $region4: #{tpu_custom_call.1} parent=1 // pred_region
      %s25 = ssub.s32 256, 256
      %26 = vsyncadd [#allocation3], %s25
      %s27 = sshll.u32 [#allocation2], 4
      %s28 = int_to_ptr.vmem [resolvable:$true] %s27
      %33 = dma.hbm_to_vmem [thread:$0]  %s0, 256, %s28, [#allocation3], 128, 128, 8
    $region5: #{tpu_custom_call.1} parent=1 // pred_fallthru
      _
    // Predicated region
    $region6: #{tpu_custom_call.1} parent=1 // pred_check
      _
    $region7: #{tpu_custom_call.1} parent=1 // pred_check_branch
      %35 = sbr.rel (0) target = $region9
    $region8: #{tpu_custom_call.1} parent=1 // pred_region
      %s37 = ssub.s32 3072, 3072
      %38 = vsyncadd [#allocation6], %s37
      %s39 = sshll.u32 [#allocation5], 4
      %s40 = int_to_ptr.vmem [resolvable:$true] %s39
      %45 = dma.hbm_to_vmem [thread:$0]  %s1, 3072, %s40, [#allocation6], 192, 192, 12
    $region9: #{tpu_custom_call.1} parent=1 // pred_fallthru
      _
    // Predicated region
    $region10: #{tpu_custom_call.1} parent=1 // pred_check
      _
    $region11: #{tpu_custom_call.1} parent=1 // pred_check_branch
      %47 = sbr.rel (0) target = $region13
    $region12: #{tpu_custom_call.1} parent=1 // pred_region
      _
    $region13: #{tpu_custom_call.1} parent=1 // pred_fallthru
      _
    // Predicated region
    $region14: #{tpu_custom_call.1} parent=1 // pred_check
      _
    $region15: #{tpu_custom_call.1} parent=1 // pred_check_branch
      %49 = sbr.rel (0) target = $region17
    $region16: #{tpu_custom_call.1} parent=1 // pred_region
      %s51 = ssub.s32 1024, 1024
      %52 = vsyncadd [#allocation6], %s51
      %s53 = sshll.u32 [#allocation7], 4
      %s54 = int_to_ptr.vmem [resolvable:$true] %s53
      %59 = dma.hbm_to_vmem [thread:$0]  %s3, 1024, %s54, [#allocation6], 64, 64, 4
    $region17: #{tpu_custom_call.1} parent=1 // pred_fallthru
      _
    // Predicated region
    $region18: #{tpu_custom_call.1} parent=1 // pred_check
      _
    $region19: #{tpu_custom_call.1} parent=1 // pred_check_branch
      %61 = sbr.rel (0) target = $region21
    $region20: #{tpu_custom_call.1} parent=1 // pred_region
      _
    $region21: #{tpu_custom_call.1} parent=1 // pred_fallthru
      _
    // Predicated region
    $region22: #{tpu_custom_call.1} parent=1 // pred_check
      _
    $region23: #{tpu_custom_call.1} parent=1 // pred_check_branch
      %63 = sbr.rel (0) target = $region25
    $region24: #{tpu_custom_call.1} parent=1 // pred_region
      _
    $region25: #{tpu_custom_call.1} parent=1 // pred_fallthru
      _
    // Predicated region
    $region26: #{tpu_custom_call.1} parent=1 // pred_check
      _
    $region27: #{tpu_custom_call.1} parent=1 // pred_check_branch
      %65 = sbr.rel (0) target = $region29
    $region28: #{tpu_custom_call.1} parent=1 // pred_region
      _
    $region29: #{tpu_custom_call.1} parent=1 // pred_fallthru
      _
    // Predicated region
    $region30: #{tpu_custom_call.1} parent=1 // pred_check
      _
    $region31: #{tpu_custom_call.1} parent=1 // pred_check_branch
      %67 = sbr.rel (0) target = $region33
    $region32: #{tpu_custom_call.1} parent=1 // pred_region
      %s69 = ssub.s32 2048, 2048
      %70 = vsyncadd [#allocation9], %s69
      %s71 = sshll.u32 [#allocation8], 4
      %s72 = int_to_ptr.vmem [resolvable:$true] %s71
      %77 = dma.hbm_to_vmem [thread:$0]  %s7, 2048, %s72, [#allocation9], 128, 128, 8
    $region33: #{tpu_custom_call.1} parent=1 // pred_fallthru
      _
    // Predicated region
    $region34: #{tpu_custom_call.1} parent=1 // pred_check
      _
    $region35: #{tpu_custom_call.1} parent=1 // pred_check_branch
      %79 = sbr.rel (0) target = $region37
    $region36: #{tpu_custom_call.1} parent=1 // pred_region
      _
    $region37: #{tpu_custom_call.1} parent=1 // pred_fallthru
      _
    // Predicated region
    $region38: #{tpu_custom_call.1} parent=1 // pred_check
      _
    $region39: #{tpu_custom_call.1} parent=1 // pred_check_branch
      %81 = sbr.rel (0) target = $region41
    $region40: #{tpu_custom_call.1} parent=1 // pred_region
      %s83 = ssub.s32 2048, 2048
      %84 = vsyncadd [#allocation9], %s83
      %s85 = sshll.u32 [#allocation10], 4
      %s86 = int_to_ptr.vmem [resolvable:$true] %s85
      %91 = dma.hbm_to_vmem [thread:$0]  %s9, 2048, %s86, [#allocation9], 64, 64, 4
    $region41: #{tpu_custom_call.1} parent=1 // pred_fallthru
      _
    // Predicated region
    $region42: #{tpu_custom_call.1} parent=1 // pred_check
      _
    $region43: #{tpu_custom_call.1} parent=1 // pred_check_branch
      %93 = sbr.rel (0) target = $region45
    $region44: #{tpu_custom_call.1} parent=1 // pred_region
      _
    $region45: #{tpu_custom_call.1} parent=1 // pred_fallthru
      _
    // Predicated region
    $region46: #{tpu_custom_call.1} parent=1 // pred_check
      _
    $region47: #{tpu_custom_call.1} parent=1 // pred_check_branch
      %95 = sbr.rel (0) target = $region49
    $region48: #{tpu_custom_call.1} parent=1 // pred_region
      _
    $region49: #{tpu_custom_call.1} parent=1 // pred_fallthru
      _
    // Predicated region
    $region50: #{tpu_custom_call.1} parent=1 // pred_check
      _
    $region51: #{tpu_custom_call.1} parent=1 // pred_check_branch
      %97 = sbr.rel (0) target = $region53
    $region52: #{tpu_custom_call.1} parent=1 // pred_region
      _
    $region53: #{tpu_custom_call.1} parent=1 // pred_fallthru
      _
    // Predicated region
    $region54: #{tpu_custom_call.1} parent=1 // pred_check
      _
    $region55: #{tpu_custom_call.1} parent=1 // pred_check_branch
      %99 = sbr.rel (0) target = $region57
    $region56: #{tpu_custom_call.1} parent=1 // pred_region
      %100 = dma.done [#allocation3], 256
    $region57: #{tpu_custom_call.1} parent=1 // pred_fallthru
      _
    // Predicated region
    $region58: #{tpu_custom_call.1} parent=1 // pred_check
      _
    $region59: #{tpu_custom_call.1} parent=1 // pred_check_branch
      %102 = sbr.rel (0) target = $region61
    $region60: #{tpu_custom_call.1} parent=1 // pred_region
      %103 = dma.done [#allocation6], 3072
    $region61: #{tpu_custom_call.1} parent=1 // pred_fallthru
      _
    // Predicated region
    $region62: #{tpu_custom_call.1} parent=1 // pred_check
      _
    $region63: #{tpu_custom_call.1} parent=1 // pred_check_branch
      %105 = sbr.rel (0) target = $region65
    $region64: #{tpu_custom_call.1} parent=1 // pred_region
      %106 = dma.done [#allocation6], 1024
    $region65: #{tpu_custom_call.1} parent=1 // pred_fallthru
      _
    // Predicated region
    $region66: #{tpu_custom_call.1} parent=1 // pred_check
      _
    $region67: #{tpu_custom_call.1} parent=1 // pred_check_branch
      %108 = sbr.rel (0) target = $region69
    $region68: #{tpu_custom_call.1} parent=1 // pred_region
      %109 = dma.done [#allocation9], 2048
    $region69: #{tpu_custom_call.1} parent=1 // pred_fallthru
      _
    // Predicated region
    $region70: #{tpu_custom_call.1} parent=1 // pred_check
      _
    $region71: #{tpu_custom_call.1} parent=1 // pred_check_branch
      %111 = sbr.rel (0) target = $region73
    $region72: #{tpu_custom_call.1} parent=1 // pred_region
      %112 = dma.done [#allocation9], 2048
    $region73: #{tpu_custom_call.1} parent=1 // pred_fallthru
      _
    %v114 = vld [vmem:[#allocation2] sm:$0xff]
    %v115 = vld [vmem:[#allocation2 + $0x8] sm:$0xff]
    %v116 = vpack.c.bf16 %v115, %v114
    %v117 = vld [vmem:[#allocation5] sm:$0xff]
    %v118 = vld [vmem:[#allocation5 + $0x8] sm:$0xf]
    %v119 = vld [vmem:[#allocation5 + $0xc] sm:$0xff]
    %v120 = vld [vmem:[#allocation5 + $0x14] sm:$0xf]
    %v121 = vld [vmem:[#allocation5 + $0x18] sm:$0xff]
    %v122 = vld [vmem:[#allocation5 + $0x20] sm:$0xf]
    %v123 = vld [vmem:[#allocation5 + $0x24] sm:$0xff]
    %v124 = vld [vmem:[#allocation5 + $0x2c] sm:$0xf]
    %v125 = vld [vmem:[#allocation5 + $0x30] sm:$0xff]
    %v126 = vld [vmem:[#allocation5 + $0x38] sm:$0xf]
    %v127 = vld [vmem:[#allocation5 + $0x3c] sm:$0xff]
    %v128 = vld [vmem:[#allocation5 + $0x44] sm:$0xf]
    %v129 = vld [vmem:[#allocation5 + $0x48] sm:$0xff]
    %v130 = vld [vmem:[#allocation5 + $0x50] sm:$0xf]
    %v131 = vld [vmem:[#allocation5 + $0x54] sm:$0xff]
    %v132 = vld [vmem:[#allocation5 + $0x5c] sm:$0xf]
    %v133 = vld [vmem:[#allocation5 + $0x60] sm:$0xff]
    %v134 = vld [vmem:[#allocation5 + $0x68] sm:$0xf]
    %v135 = vld [vmem:[#allocation5 + $0x6c] sm:$0xff]
    %v136 = vld [vmem:[#allocation5 + $0x74] sm:$0xf]
    %v137 = vld [vmem:[#allocation5 + $0x78] sm:$0xff]
    %v138 = vld [vmem:[#allocation5 + $0x80] sm:$0xf]
    %v139 = vld [vmem:[#allocation5 + $0x84] sm:$0xff]
    %v140 = vld [vmem:[#allocation5 + $0x8c] sm:$0xf]
    %v141 = vld [vmem:[#allocation5 + $0x90] sm:$0xff]
    %v142 = vld [vmem:[#allocation5 + $0x98] sm:$0xf]
    %v143 = vld [vmem:[#allocation5 + $0x9c] sm:$0xff]
    %v144 = vld [vmem:[#allocation5 + $0xa4] sm:$0xf]
    %v145 = vld [vmem:[#allocation5 + $0xa8] sm:$0xff]
    %v146 = vld [vmem:[#allocation5 + $0xb0] sm:$0xf]
    %v147 = vld [vmem:[#allocation5 + $0xb4] sm:$0xff]
    %v148 = vld [vmem:[#allocation5 + $0xbc] sm:$0xf]
    %v149 = vld [vmem:[%s2] sm:$0x7]
    %v151 = vlaneseq
    %v152 = vshrl.u32 %v151, 7
    %v153 = vsub.s32 0, %v152
    %v154 = vrot.slane %v149, %v153
    %v155 = vlaneseq
    %v156 = vshrl.u32 %v155, 7
    %v157 = vsub.s32 1, %v156
    %v158 = vrot.slane %v149, %v157
    %v159 = vlaneseq
    %v160 = vshrl.u32 %v159, 7
    %v161 = vsub.s32 2, %v160
    %v162 = vrot.slane %v149, %v161
    %v198 = vunpack.c.l.b16 %v117
    %v199 = vunpack.c.h.b16 %v117
    %v200 = vunpack.c.l.b16 %v118
    %v201 = vunpack.c.l.b16 %v119
    %v202 = vunpack.c.h.b16 %v119
    %v203 = vunpack.c.l.b16 %v120
    %v204 = vunpack.c.l.b16 %v121
    %v205 = vunpack.c.h.b16 %v121
    %v206 = vunpack.c.l.b16 %v122
    %v207 = vunpack.c.l.b16 %v123
    %v208 = vunpack.c.h.b16 %v123
    %v209 = vunpack.c.l.b16 %v124
    %v210 = vunpack.c.l.b16 %v125
    %v211 = vunpack.c.h.b16 %v125
    %v212 = vunpack.c.l.b16 %v126
    %v213 = vunpack.c.l.b16 %v127
    %v214 = vunpack.c.h.b16 %v127
    %v215 = vunpack.c.l.b16 %v128
    %v216 = vunpack.c.l.b16 %v129
    %v217 = vunpack.c.h.b16 %v129
    %v218 = vunpack.c.l.b16 %v130
    %v219 = vunpack.c.l.b16 %v131
    %v220 = vunpack.c.h.b16 %v131
    %v221 = vunpack.c.l.b16 %v132
    %v222 = vunpack.c.l.b16 %v133
    %v223 = vunpack.c.h.b16 %v133
    %v224 = vunpack.c.l.b16 %v134
    %v225 = vunpack.c.l.b16 %v135
    %v226 = vunpack.c.h.b16 %v135
    %v227 = vunpack.c.l.b16 %v136
    %v228 = vunpack.c.l.b16 %v137
    %v229 = vunpack.c.h.b16 %v137
    %v230 = vunpack.c.l.b16 %v138
    %v231 = vunpack.c.l.b16 %v139
    %v232 = vunpack.c.h.b16 %v139
    %v233 = vunpack.c.l.b16 %v140
    %v234 = vunpack.c.l.b16 %v141
    %v235 = vunpack.c.h.b16 %v141
    %v236 = vunpack.c.l.b16 %v142
    %v237 = vunpack.c.l.b16 %v143
    %v238 = vunpack.c.h.b16 %v143
    %v239 = vunpack.c.l.b16 %v144
    %v240 = vunpack.c.l.b16 %v145
    %v241 = vunpack.c.h.b16 %v145
    %v242 = vunpack.c.l.b16 %v146
    %v243 = vunpack.c.l.b16 %v147
    %v244 = vunpack.c.h.b16 %v147
    %v245 = vunpack.c.l.b16 %v148
    %v246 = vpack.c.b16 %v201, %v198
    %v247 = vpack.c.b16 %v202, %v199
    %v248 = vpack.c.b16 %v203, %v200
    %v249 = vpack.c.b16 %v207, %v204
    %v250 = vpack.c.b16 %v208, %v205
    %v251 = vpack.c.b16 %v209, %v206
    %v252 = vpack.c.b16 %v213, %v210
    %v253 = vpack.c.b16 %v214, %v211
    %v254 = vpack.c.b16 %v215, %v212
    %v255 = vpack.c.b16 %v219, %v216
    %v256 = vpack.c.b16 %v220, %v217
    %v257 = vpack.c.b16 %v221, %v218
    %v258 = vpack.c.b16 %v225, %v222
    %v259 = vpack.c.b16 %v226, %v223
    %v260 = vpack.c.b16 %v227, %v224
    %v261 = vpack.c.b16 %v231, %v228
    %v262 = vpack.c.b16 %v232, %v229
    %v263 = vpack.c.b16 %v233, %v230
    %v264 = vpack.c.b16 %v237, %v234
    %v265 = vpack.c.b16 %v238, %v235
    %v266 = vpack.c.b16 %v239, %v236
    %v267 = vpack.c.b16 %v243, %v240
    %v268 = vpack.c.b16 %v244, %v241
    %v269 = vpack.c.b16 %v245, %v242
    %294 = vmatprep.subr.bf16.mxu0 %v247
    %295 = vmatpush1.bf16.msra.mxu0 %v246
    %296 = vmatprep.subr.bf16.mxu0 %v250
    %297 = vmatpush1.bf16.msra.mxu0 %v249
    %298 = vmatprep.subr.bf16.mxu0 %v253
    %299 = vmatpush1.bf16.msra.mxu0 %v252
    %300 = vmatprep.subr.bf16.mxu0 %v256
    %301 = vmatpush1.bf16.msra.mxu0 %v255
    %302 = vmatprep.subr.bf16.mxu0 %v259
    %303 = vmatpush1.bf16.msra.mxu0 %v258
    %304 = vmatprep.subr.bf16.mxu0 %v262
    %305 = vmatpush1.bf16.msra.mxu0 %v261
    %306 = vmatprep.subr.bf16.mxu0 %v265
    %307 = vmatpush1.bf16.msra.mxu0 %v264
    %308 = vmatprep.subr.bf16.mxu0 %v268
    %309 = vmatpush1.bf16.msra.mxu0 %v267
    %310 = vmatprep.subr.bf16.mxu0 0
    %311 = vmatpush1.bf16.msra.mxu0 0
    %312 = vmatprep.subr.bf16.mxu0 0
    %313 = vmatpush1.bf16.msra.mxu0 0
    %314 = vmatprep.subr.bf16.mxu0 0
    %315 = vmatpush1.bf16.msra.mxu0 0
    %316 = vmatprep.subr.bf16.mxu0 0
    %317 = vmatpush1.bf16.msra.mxu0 0
    %318 = vmatprep.subr.bf16.mxu0 0
    %319 = vmatpush1.bf16.msra.mxu0 0
    %320 = vmatprep.subr.bf16.mxu0 0
    %321 = vmatpush1.bf16.msra.mxu0 0
    %322 = vmatprep.subr.bf16.mxu0 0
    %323 = vmatpush1.bf16.msra.mxu0 0
    %324 = vmatprep.subr.bf16.mxu0 0
    %325 = vmatpush1.bf16.msra.mxu0 0
    %326 = vmatprep.mubr.bf16.mxu0 0
    %327 = vmatmul.mubr.bf16.gmra.mrb[0].mxu0 %v116
    %v328 = vpop.f32.mrb[0].mxu0
    %v329 = vadd.f32 %v154, %v328
    %v330 = vpop.f32.mrb[0].mxu0
    %v331 = vadd.f32 %v158, %v330
    %v332 = vpop.f32.mrb[0].mxu0
    %v333 = vadd.f32 %v154, %v332
    %v334 = vpop.f32.mrb[0].mxu0
    %v335 = vadd.f32 %v158, %v334
    %336 = vdwg.mxu0
    %337 = vmatprep.subr.bf16.mxu0 0
    %338 = vmatpush1.bf16.msra.mxu0 %v248
    %339 = vmatprep.subr.bf16.mxu0 0
    %340 = vmatpush1.bf16.msra.mxu0 %v251
    %341 = vmatprep.subr.bf16.mxu0 0
    %342 = vmatpush1.bf16.msra.mxu0 %v254
    %343 = vmatprep.subr.bf16.mxu0 0
    %344 = vmatpush1.bf16.msra.mxu0 %v257
    %345 = vmatprep.subr.bf16.mxu0 0
    %346 = vmatpush1.bf16.msra.mxu0 %v260
    %347 = vmatprep.subr.bf16.mxu0 0
    %348 = vmatpush1.bf16.msra.mxu0 %v263
    %349 = vmatprep.subr.bf16.mxu0 0
    %350 = vmatpush1.bf16.msra.mxu0 %v266
    %351 = vmatprep.subr.bf16.mxu0 0
    %352 = vmatpush1.bf16.msra.mxu0 %v269
    %353 = vmatprep.subr.bf16.mxu0 0
    %354 = vmatpush1.bf16.msra.mxu0 0
    %355 = vmatprep.subr.bf16.mxu0 0
    %356 = vmatpush1.bf16.msra.mxu0 0
    %357 = vmatprep.subr.bf16.mxu0 0
    %358 = vmatpush1.bf16.msra.mxu0 0
    %359 = vmatprep.subr.bf16.mxu0 0
    %360 = vmatpush1.bf16.msra.mxu0 0
    %361 = vmatprep.subr.bf16.mxu0 0
    %362 = vmatpush1.bf16.msra.mxu0 0
    %363 = vmatprep.subr.bf16.mxu0 0
    %364 = vmatpush1.bf16.msra.mxu0 0
    %365 = vmatprep.subr.bf16.mxu0 0
    %366 = vmatpush1.bf16.msra.mxu0 0
    %367 = vmatprep.subr.bf16.mxu0 0
    %368 = vmatpush1.bf16.msra.mxu0 0
    %369 = vmatprep.mubr.bf16.mxu0 0
    %370 = vmatmul.mubr.bf16.gmra.mrb[0].mxu0 %v116
    %v371 = vpop.f32.mrb[0].mxu0
    %v372 = vadd.f32 %v162, %v371
    %v373 = vpop.f32.mrb[0].mxu0
    %v374 = vpop.f32.mrb[0].mxu0
    %v375 = vadd.f32 %v162, %v374
    %v376 = vpop.f32.mrb[0].mxu0
    %377 = vdwg.mxu0
    %v378 = vpack.c.bf16 %v333, %v329
    %v380 = vunpack.c.l.b16 %v378
    %v381 = vunpack.c.h.b16 %v378
    %v382 = vpack.c.b16 %v380, %v380
    %v383 = vpack.c.b16 %v381, %v381
    %v384 = vpack.c.bf16 %v335, %v331
    %v386 = vunpack.c.l.b16 %v384
    %v387 = vunpack.c.h.b16 %v384
    %v388 = vpack.c.b16 %v386, %v386
    %v389 = vpack.c.b16 %v387, %v387
    %v390 = vpack.c.bf16 %v375, %v372
    %v392 = vunpack.c.l.b16 %v390
    %v393 = vunpack.c.h.b16 %v390
    %v394 = vpack.c.b16 %v392, %v392
    %v395 = vpack.c.b16 %v393, %v393
    %vm396 = vcmask 64512
    %v398 = vsel %vm396, %v382, 0
    %v401 = vsel %vm396, %v388, 0
    %403 = vmatprep.subr.bf16.mxu0 0
    %404 = vmatpush1.bf16.xpose.msra.mxu0 %v401
    %405 = vmatprep.subr.bf16.mxu0 0
    %406 = vmatpush1.bf16.xpose.msra.mxu0 0
    %407 = vmatprep.subr.bf16.mxu0 0
    %408 = vmatpush1.bf16.xpose.msra.mxu0 0
    %409 = vmatprep.subr.bf16.mxu0 0
    %410 = vmatpush1.bf16.xpose.msra.mxu0 0
    %411 = vmatprep.subr.bf16.mxu0 0
    %412 = vmatpush1.bf16.xpose.msra.mxu0 0
    %413 = vmatprep.subr.bf16.mxu0 0
    %414 = vmatpush1.bf16.xpose.msra.mxu0 0
    %415 = vmatprep.subr.bf16.mxu0 0
    %416 = vmatpush1.bf16.xpose.msra.mxu0 0
    %417 = vmatprep.subr.bf16.mxu0 0
    %418 = vmatpush1.bf16.xpose.msra.mxu0 0
    %419 = vmatprep.subr.bf16.mxu0 0
    %420 = vmatpush1.bf16.xpose.msra.mxu0 0
    %421 = vmatprep.subr.bf16.mxu0 0
    %422 = vmatpush1.bf16.xpose.msra.mxu0 0
    %423 = vmatprep.subr.bf16.mxu0 0
    %424 = vmatpush1.bf16.xpose.msra.mxu0 0
    %425 = vmatprep.subr.bf16.mxu0 0
    %426 = vmatpush1.bf16.xpose.msra.mxu0 0
    %427 = vmatprep.subr.bf16.mxu0 0
    %428 = vmatpush1.bf16.xpose.msra.mxu0 0
    %429 = vmatprep.subr.bf16.mxu0 0
    %430 = vmatpush1.bf16.xpose.msra.mxu0 0
    %431 = vmatprep.subr.bf16.mxu0 0
    %432 = vmatpush1.bf16.xpose.msra.mxu0 0
    %433 = vmatprep.subr.bf16.mxu0 0
    %434 = vmatpush1.bf16.xpose.msra.mxu0 0
    %435 = vmatprep.mubr.bf16.mxu0 0
    %436 = vmatmul.mubr.bf16.gmra.mrb[0].mxu0 %v398
    %v437 = vpop.f32.mrb[0].mxu0
    %v438 = vadd.f32 0.0, %v437
    %v439 = vpop.f32.mrb[0].mxu0
    %v440 = vpop.f32.mrb[0].mxu0
    %v441 = vpop.f32.mrb[0].mxu0
    %442 = vdwg.mxu0
    %v444 = vsel %vm396, %v383, 0
    %v447 = vsel %vm396, %v389, 0
    %449 = vmatprep.subr.bf16.mxu0 0
    %450 = vmatpush1.bf16.xpose.msra.mxu0 %v447
    %451 = vmatprep.subr.bf16.mxu0 0
    %452 = vmatpush1.bf16.xpose.msra.mxu0 0
    %453 = vmatprep.subr.bf16.mxu0 0
    %454 = vmatpush1.bf16.xpose.msra.mxu0 0
    %455 = vmatprep.subr.bf16.mxu0 0
    %456 = vmatpush1.bf16.xpose.msra.mxu0 0
    %457 = vmatprep.subr.bf16.mxu0 0
    %458 = vmatpush1.bf16.xpose.msra.mxu0 0
    %459 = vmatprep.subr.bf16.mxu0 0
    %460 = vmatpush1.bf16.xpose.msra.mxu0 0
    %461 = vmatprep.subr.bf16.mxu0 0
    %462 = vmatpush1.bf16.xpose.msra.mxu0 0
    %463 = vmatprep.subr.bf16.mxu0 0
    %464 = vmatpush1.bf16.xpose.msra.mxu0 0
    %465 = vmatprep.subr.bf16.mxu0 0
    %466 = vmatpush1.bf16.xpose.msra.mxu0 0
    %467 = vmatprep.subr.bf16.mxu0 0
    %468 = vmatpush1.bf16.xpose.msra.mxu0 0
    %469 = vmatprep.subr.bf16.mxu0 0
    %470 = vmatpush1.bf16.xpose.msra.mxu0 0
    %471 = vmatprep.subr.bf16.mxu0 0
    %472 = vmatpush1.bf16.xpose.msra.mxu0 0
    %473 = vmatprep.subr.bf16.mxu0 0
    %474 = vmatpush1.bf16.xpose.msra.mxu0 0
    %475 = vmatprep.subr.bf16.mxu0 0
    %476 = vmatpush1.bf16.xpose.msra.mxu0 0
    %477 = vmatprep.subr.bf16.mxu0 0
    %478 = vmatpush1.bf16.xpose.msra.mxu0 0
    %479 = vmatprep.subr.bf16.mxu0 0
    %480 = vmatpush1.bf16.xpose.msra.mxu0 0
    %481 = vmatprep.mubr.bf16.mxu0 0
    %482 = vmatmul.mubr.bf16.gmra.mrb[0].mxu0 %v444
    %v483 = vpop.f32.mrb[0].mxu0
    %v484 = vadd.f32 0.0, %v483
    %v485 = vpop.f32.mrb[0].mxu0
    %v486 = vpop.f32.mrb[0].mxu0
    %v487 = vpop.f32.mrb[0].mxu0
    %488 = vdwg.mxu0
    %v489 = vsel %vm396, %v438, -inf
    %490 = vmax.xlane.f32.xlu0 %v489
    %v491 = vpop.xlane.xlu0 %490
    %v492 = vsel %vm396, %v484, -inf
    %493 = vmax.xlane.f32.xlu0 %v492
    %v494 = vpop.xlane.xlu0 %493
    %v495 = vsub.f32 %v438, %v491
    %v496 = vsub.f32 %v484, %v494
    %v497 = vmul.f32 %v495, 1.442695
    %v498 = vpow.pop %v497
    %v499 = vmul.f32 %v496, 1.442695
    %v500 = vpow.pop %v499
    %v501 = vsel %vm396, %v498, 0.0
    %502 = vadd.xlane.f32.xlu0 %v501
    %v503 = vpop.xlane.xlu0 %502
    %v504 = vsel %vm396, %v500, 0.0
    %505 = vadd.xlane.f32.xlu0 %v504
    %v506 = vpop.xlane.xlu0 %505
    %v507 = vrcp.pop %v503
    %v508 = vrcp.pop %v506
    %v509 = vmul.f32 %v498, %v507
    %v510 = vmul.f32 %v500, %v508
    %v511 = vpack.c.bf16 %v509, %v509
    %v512 = vpack.c.bf16 %v510, %v510
    %v514 = vsel %vm396, %v511, 0
    %vm516 = vcmask 1043456
    %v518 = vsel %vm516, %v394, 0
    %520 = vmatprep.subr.bf16.mxu0 0
    %521 = vmatpush1.bf16.msra.mxu0 %v518
    %522 = vmatprep.subr.bf16.mxu0 0
    %523 = vmatpush1.bf16.msra.mxu0 0
    %524 = vmatprep.subr.bf16.mxu0 0
    %525 = vmatpush1.bf16.msra.mxu0 0
    %526 = vmatprep.subr.bf16.mxu0 0
    %527 = vmatpush1.bf16.msra.mxu0 0
    %528 = vmatprep.subr.bf16.mxu0 0
    %529 = vmatpush1.bf16.msra.mxu0 0
    %530 = vmatprep.subr.bf16.mxu0 0
    %531 = vmatpush1.bf16.msra.mxu0 0
    %532 = vmatprep.subr.bf16.mxu0 0
    %533 = vmatpush1.bf16.msra.mxu0 0
    %534 = vmatprep.subr.bf16.mxu0 0
    %535 = vmatpush1.bf16.msra.mxu0 0
    %536 = vmatprep.subr.bf16.mxu0 0
    %537 = vmatpush1.bf16.msra.mxu0 0
    %538 = vmatprep.subr.bf16.mxu0 0
    %539 = vmatpush1.bf16.msra.mxu0 0
    %540 = vmatprep.subr.bf16.mxu0 0
    %541 = vmatpush1.bf16.msra.mxu0 0
    %542 = vmatprep.subr.bf16.mxu0 0
    %543 = vmatpush1.bf16.msra.mxu0 0
    %544 = vmatprep.subr.bf16.mxu0 0
    %545 = vmatpush1.bf16.msra.mxu0 0
    %546 = vmatprep.subr.bf16.mxu0 0
    %547 = vmatpush1.bf16.msra.mxu0 0
    %548 = vmatprep.subr.bf16.mxu0 0
    %549 = vmatpush1.bf16.msra.mxu0 0
    %550 = vmatprep.subr.bf16.mxu0 0
    %551 = vmatpush1.bf16.msra.mxu0 0
    %552 = vmatprep.mubr.bf16.mxu0 0
    %553 = vmatmul.mubr.bf16.gmra.mrb[0].mxu0 %v514
    %v554 = vpop.f32.mrb[0].mxu0
    %v555 = vadd.f32 0.0, %v554
    %v556 = vpop.f32.mrb[0].mxu0
    %v557 = vpop.f32.mrb[0].mxu0
    %v558 = vpop.f32.mrb[0].mxu0
    %559 = vdwg.mxu0
    %v561 = vsel %vm396, %v512, 0
    %v564 = vsel %vm516, %v395, 0
    %566 = vmatprep.subr.bf16.mxu0 0
    %567 = vmatpush1.bf16.msra.mxu0 %v564
    %568 = vmatprep.subr.bf16.mxu0 0
    %569 = vmatpush1.bf16.msra.mxu0 0
    %570 = vmatprep.subr.bf16.mxu0 0
    %571 = vmatpush1.bf16.msra.mxu0 0
    %572 = vmatprep.subr.bf16.mxu0 0
    %573 = vmatpush1.bf16.msra.mxu0 0
    %574 = vmatprep.subr.bf16.mxu0 0
    %575 = vmatpush1.bf16.msra.mxu0 0
    %576 = vmatprep.subr.bf16.mxu0 0
    %577 = vmatpush1.bf16.msra.mxu0 0
    %578 = vmatprep.subr.bf16.mxu0 0
    %579 = vmatpush1.bf16.msra.mxu0 0
    %580 = vmatprep.subr.bf16.mxu0 0
    %581 = vmatpush1.bf16.msra.mxu0 0
    %582 = vmatprep.subr.bf16.mxu0 0
    %583 = vmatpush1.bf16.msra.mxu0 0
    %584 = vmatprep.subr.bf16.mxu0 0
    %585 = vmatpush1.bf16.msra.mxu0 0
    %586 = vmatprep.subr.bf16.mxu0 0
    %587 = vmatpush1.bf16.msra.mxu0 0
    %588 = vmatprep.subr.bf16.mxu0 0
    %589 = vmatpush1.bf16.msra.mxu0 0
    %590 = vmatprep.subr.bf16.mxu0 0
    %591 = vmatpush1.bf16.msra.mxu0 0
    %592 = vmatprep.subr.bf16.mxu0 0
    %593 = vmatpush1.bf16.msra.mxu0 0
    %594 = vmatprep.subr.bf16.mxu0 0
    %595 = vmatpush1.bf16.msra.mxu0 0
    %596 = vmatprep.subr.bf16.mxu0 0
    %597 = vmatpush1.bf16.msra.mxu0 0
    %598 = vmatprep.mubr.bf16.mxu0 0
    %599 = vmatmul.mubr.bf16.gmra.mrb[0].mxu0 %v561
    %v600 = vpop.f32.mrb[0].mxu0
    %v601 = vadd.f32 0.0, %v600
    %v602 = vpop.f32.mrb[0].mxu0
    %v603 = vpop.f32.mrb[0].mxu0
    %v604 = vpop.f32.mrb[0].mxu0
    %605 = vdwg.mxu0
    %606 = vrot.lane.b32.xlu0 %v382, 120
    %v607 = vpop.permute.xlu0 %606
    %608 = vrot.lane.b32.xlu0 %v388, 120
    %v609 = vpop.permute.xlu0 %608
    %v611 = vsel %vm396, %v607, 0
    %v614 = vsel %vm396, %v609, 0
    %616 = vmatprep.subr.bf16.mxu0 0
    %617 = vmatpush1.bf16.xpose.msra.mxu0 %v614
    %618 = vmatprep.subr.bf16.mxu0 0
    %619 = vmatpush1.bf16.xpose.msra.mxu0 0
    %620 = vmatprep.subr.bf16.mxu0 0
    %621 = vmatpush1.bf16.xpose.msra.mxu0 0
    %622 = vmatprep.subr.bf16.mxu0 0
    %623 = vmatpush1.bf16.xpose.msra.mxu0 0
    %624 = vmatprep.subr.bf16.mxu0 0
    %625 = vmatpush1.bf16.xpose.msra.mxu0 0
    %626 = vmatprep.subr.bf16.mxu0 0
    %627 = vmatpush1.bf16.xpose.msra.mxu0 0
    %628 = vmatprep.subr.bf16.mxu0 0
    %629 = vmatpush1.bf16.xpose.msra.mxu0 0
    %630 = vmatprep.subr.bf16.mxu0 0
    %631 = vmatpush1.bf16.xpose.msra.mxu0 0
    %632 = vmatprep.subr.bf16.mxu0 0
    %633 = vmatpush1.bf16.xpose.msra.mxu0 0
    %634 = vmatprep.subr.bf16.mxu0 0
    %635 = vmatpush1.bf16.xpose.msra.mxu0 0
    %636 = vmatprep.subr.bf16.mxu0 0
    %637 = vmatpush1.bf16.xpose.msra.mxu0 0
    %638 = vmatprep.subr.bf16.mxu0 0
    %639 = vmatpush1.bf16.xpose.msra.mxu0 0
    %640 = vmatprep.subr.bf16.mxu0 0
    %641 = vmatpush1.bf16.xpose.msra.mxu0 0
    %642 = vmatprep.subr.bf16.mxu0 0
    %643 = vmatpush1.bf16.xpose.msra.mxu0 0
    %644 = vmatprep.subr.bf16.mxu0 0
    %645 = vmatpush1.bf16.xpose.msra.mxu0 0
    %646 = vmatprep.subr.bf16.mxu0 0
    %647 = vmatpush1.bf16.xpose.msra.mxu0 0
    %648 = vmatprep.mubr.bf16.mxu0 0
    %649 = vmatmul.mubr.bf16.gmra.mrb[0].mxu0 %v611
    %v650 = vpop.f32.mrb[0].mxu0
    %v651 = vadd.f32 0.0, %v650
    %v652 = vpop.f32.mrb[0].mxu0
    %v653 = vpop.f32.mrb[0].mxu0
    %v654 = vpop.f32.mrb[0].mxu0
    %655 = vdwg.mxu0
    %656 = vrot.lane.b32.xlu0 %v383, 120
    %v657 = vpop.permute.xlu0 %656
    %658 = vrot.lane.b32.xlu0 %v389, 120
    %v659 = vpop.permute.xlu0 %658
    %v661 = vsel %vm396, %v657, 0
    %v664 = vsel %vm396, %v659, 0
    %666 = vmatprep.subr.bf16.mxu0 0
    %667 = vmatpush1.bf16.xpose.msra.mxu0 %v664
    %668 = vmatprep.subr.bf16.mxu0 0
    %669 = vmatpush1.bf16.xpose.msra.mxu0 0
    %670 = vmatprep.subr.bf16.mxu0 0
    %671 = vmatpush1.bf16.xpose.msra.mxu0 0
    %672 = vmatprep.subr.bf16.mxu0 0
    %673 = vmatpush1.bf16.xpose.msra.mxu0 0
    %674 = vmatprep.subr.bf16.mxu0 0
    %675 = vmatpush1.bf16.xpose.msra.mxu0 0
    %676 = vmatprep.subr.bf16.mxu0 0
    %677 = vmatpush1.bf16.xpose.msra.mxu0 0
    %678 = vmatprep.subr.bf16.mxu0 0
    %679 = vmatpush1.bf16.xpose.msra.mxu0 0
    %680 = vmatprep.subr.bf16.mxu0 0
    %681 = vmatpush1.bf16.xpose.msra.mxu0 0
    %682 = vmatprep.subr.bf16.mxu0 0
    %683 = vmatpush1.bf16.xpose.msra.mxu0 0
    %684 = vmatprep.subr.bf16.mxu0 0
    %685 = vmatpush1.bf16.xpose.msra.mxu0 0
    %686 = vmatprep.subr.bf16.mxu0 0
    %687 = vmatpush1.bf16.xpose.msra.mxu0 0
    %688 = vmatprep.subr.bf16.mxu0 0
    %689 = vmatpush1.bf16.xpose.msra.mxu0 0
    %690 = vmatprep.subr.bf16.mxu0 0
    %691 = vmatpush1.bf16.xpose.msra.mxu0 0
    %692 = vmatprep.subr.bf16.mxu0 0
    %693 = vmatpush1.bf16.xpose.msra.mxu0 0
    %694 = vmatprep.subr.bf16.mxu0 0
    %695 = vmatpush1.bf16.xpose.msra.mxu0 0
    %696 = vmatprep.subr.bf16.mxu0 0
    %697 = vmatpush1.bf16.xpose.msra.mxu0 0
    %698 = vmatprep.mubr.bf16.mxu0 0
    %699 = vmatmul.mubr.bf16.gmra.mrb[0].mxu0 %v661
    %v700 = vpop.f32.mrb[0].mxu0
    %v701 = vadd.f32 0.0, %v700
    %v702 = vpop.f32.mrb[0].mxu0
    %v703 = vpop.f32.mrb[0].mxu0
    %v704 = vpop.f32.mrb[0].mxu0
    %705 = vdwg.mxu0
    %v706 = vsel %vm396, %v651, -inf
    %707 = vmax.xlane.f32.xlu0 %v706
    %v708 = vpop.xlane.xlu0 %707
    %v709 = vsel %vm396, %v701, -inf
    %710 = vmax.xlane.f32.xlu0 %v709
    %v711 = vpop.xlane.xlu0 %710
    %v712 = vsub.f32 %v651, %v708
    %v713 = vsub.f32 %v701, %v711
    %v714 = vmul.f32 %v712, 1.442695
    %v715 = vpow.pop %v714
    %v716 = vmul.f32 %v713, 1.442695
    %v717 = vpow.pop %v716
    %v718 = vsel %vm396, %v715, 0.0
    %719 = vadd.xlane.f32.xlu0 %v718
    %v720 = vpop.xlane.xlu0 %719
    %v721 = vsel %vm396, %v717, 0.0
    %722 = vadd.xlane.f32.xlu0 %v721
    %v723 = vpop.xlane.xlu0 %722
    %v724 = vrcp.pop %v720
    %v725 = vrcp.pop %v723
    %v726 = vmul.f32 %v715, %v724
    %v727 = vmul.f32 %v717, %v725
    %v728 = vpack.c.bf16 %v726, %v726
    %v729 = vpack.c.bf16 %v727, %v727
    %730 = vrot.lane.b32.xlu0 %v394, 120
    %v731 = vpop.permute.xlu0 %730
    %v733 = vsel %vm396, %v728, 0
    %v736 = vsel %vm516, %v731, 0
    %738 = vmatprep.subr.bf16.mxu0 0
    %739 = vmatpush1.bf16.msra.mxu0 %v736
    %740 = vmatprep.subr.bf16.mxu0 0
    %741 = vmatpush1.bf16.msra.mxu0 0
    %742 = vmatprep.subr.bf16.mxu0 0
    %743 = vmatpush1.bf16.msra.mxu0 0
    %744 = vmatprep.subr.bf16.mxu0 0
    %745 = vmatpush1.bf16.msra.mxu0 0
    %746 = vmatprep.subr.bf16.mxu0 0
    %747 = vmatpush1.bf16.msra.mxu0 0
    %748 = vmatprep.subr.bf16.mxu0 0
    %749 = vmatpush1.bf16.msra.mxu0 0
    %750 = vmatprep.subr.bf16.mxu0 0
    %751 = vmatpush1.bf16.msra.mxu0 0
    %752 = vmatprep.subr.bf16.mxu0 0
    %753 = vmatpush1.bf16.msra.mxu0 0
    %754 = vmatprep.subr.bf16.mxu0 0
    %755 = vmatpush1.bf16.msra.mxu0 0
    %756 = vmatprep.subr.bf16.mxu0 0
    %757 = vmatpush1.bf16.msra.mxu0 0
    %758 = vmatprep.subr.bf16.mxu0 0
    %759 = vmatpush1.bf16.msra.mxu0 0
    %760 = vmatprep.subr.bf16.mxu0 0
    %761 = vmatpush1.bf16.msra.mxu0 0
    %762 = vmatprep.subr.bf16.mxu0 0
    %763 = vmatpush1.bf16.msra.mxu0 0
    %764 = vmatprep.subr.bf16.mxu0 0
    %765 = vmatpush1.bf16.msra.mxu0 0
    %766 = vmatprep.subr.bf16.mxu0 0
    %767 = vmatpush1.bf16.msra.mxu0 0
    %768 = vmatprep.subr.bf16.mxu0 0
    %769 = vmatpush1.bf16.msra.mxu0 0
    %770 = vmatprep.mubr.bf16.mxu0 0
    %771 = vmatmul.mubr.bf16.gmra.mrb[0].mxu0 %v733
    %v772 = vpop.f32.mrb[0].mxu0
    %v773 = vadd.f32 0.0, %v772
    %v774 = vpop.f32.mrb[0].mxu0
    %v775 = vpop.f32.mrb[0].mxu0
    %v776 = vpop.f32.mrb[0].mxu0
    %777 = vdwg.mxu0
    %778 = vrot.lane.b32.xlu0 %v395, 120
    %v779 = vpop.permute.xlu0 %778
    %v781 = vsel %vm396, %v729, 0
    %v784 = vsel %vm516, %v779, 0
    %786 = vmatprep.subr.bf16.mxu0 0
    %787 = vmatpush1.bf16.msra.mxu0 %v784
    %788 = vmatprep.subr.bf16.mxu0 0
    %789 = vmatpush1.bf16.msra.mxu0 0
    %790 = vmatprep.subr.bf16.mxu0 0
    %791 = vmatpush1.bf16.msra.mxu0 0
    %792 = vmatprep.subr.bf16.mxu0 0
    %793 = vmatpush1.bf16.msra.mxu0 0
    %794 = vmatprep.subr.bf16.mxu0 0
    %795 = vmatpush1.bf16.msra.mxu0 0
    %796 = vmatprep.subr.bf16.mxu0 0
    %797 = vmatpush1.bf16.msra.mxu0 0
    %798 = vmatprep.subr.bf16.mxu0 0
    %799 = vmatpush1.bf16.msra.mxu0 0
    %800 = vmatprep.subr.bf16.mxu0 0
    %801 = vmatpush1.bf16.msra.mxu0 0
    %802 = vmatprep.subr.bf16.mxu0 0
    %803 = vmatpush1.bf16.msra.mxu0 0
    %804 = vmatprep.subr.bf16.mxu0 0
    %805 = vmatpush1.bf16.msra.mxu0 0
    %806 = vmatprep.subr.bf16.mxu0 0
    %807 = vmatpush1.bf16.msra.mxu0 0
    %808 = vmatprep.subr.bf16.mxu0 0
    %809 = vmatpush1.bf16.msra.mxu0 0
    %810 = vmatprep.subr.bf16.mxu0 0
    %811 = vmatpush1.bf16.msra.mxu0 0
    %812 = vmatprep.subr.bf16.mxu0 0
    %813 = vmatpush1.bf16.msra.mxu0 0
    %814 = vmatprep.subr.bf16.mxu0 0
    %815 = vmatpush1.bf16.msra.mxu0 0
    %816 = vmatprep.subr.bf16.mxu0 0
    %817 = vmatpush1.bf16.msra.mxu0 0
    %818 = vmatprep.mubr.bf16.mxu0 0
    %819 = vmatmul.mubr.bf16.gmra.mrb[0].mxu0 %v781
    %v820 = vpop.f32.mrb[0].mxu0
    %v821 = vadd.f32 0.0, %v820
    %v822 = vpop.f32.mrb[0].mxu0
    %v823 = vpop.f32.mrb[0].mxu0
    %v824 = vpop.f32.mrb[0].mxu0
    %825 = vdwg.mxu0
    %826 = vrot.lane.b32.xlu0 %v382, 112
    %v827 = vpop.permute.xlu0 %826
    %828 = vrot.lane.b32.xlu0 %v388, 112
    %v829 = vpop.permute.xlu0 %828
    %v831 = vsel %vm396, %v827, 0
    %v834 = vsel %vm396, %v829, 0
    %836 = vmatprep.subr.bf16.mxu0 0
    %837 = vmatpush1.bf16.xpose.msra.mxu0 %v834
    %838 = vmatprep.subr.bf16.mxu0 0
    %839 = vmatpush1.bf16.xpose.msra.mxu0 0
    %840 = vmatprep.subr.bf16.mxu0 0
    %841 = vmatpush1.bf16.xpose.msra.mxu0 0
    %842 = vmatprep.subr.bf16.mxu0 0
    %843 = vmatpush1.bf16.xpose.msra.mxu0 0
    %844 = vmatprep.subr.bf16.mxu0 0
    %845 = vmatpush1.bf16.xpose.msra.mxu0 0
    %846 = vmatprep.subr.bf16.mxu0 0
    %847 = vmatpush1.bf16.xpose.msra.mxu0 0
    %848 = vmatprep.subr.bf16.mxu0 0
    %849 = vmatpush1.bf16.xpose.msra.mxu0 0
    %850 = vmatprep.subr.bf16.mxu0 0
    %851 = vmatpush1.bf16.xpose.msra.mxu0 0
    %852 = vmatprep.subr.bf16.mxu0 0
    %853 = vmatpush1.bf16.xpose.msra.mxu0 0
    %854 = vmatprep.subr.bf16.mxu0 0
    %855 = vmatpush1.bf16.xpose.msra.mxu0 0
    %856 = vmatprep.subr.bf16.mxu0 0
    %857 = vmatpush1.bf16.xpose.msra.mxu0 0
    %858 = vmatprep.subr.bf16.mxu0 0
    %859 = vmatpush1.bf16.xpose.msra.mxu0 0
    %860 = vmatprep.subr.bf16.mxu0 0
    %861 = vmatpush1.bf16.xpose.msra.mxu0 0
    %862 = vmatprep.subr.bf16.mxu0 0
    %863 = vmatpush1.bf16.xpose.msra.mxu0 0
    %864 = vmatprep.subr.bf16.mxu0 0
    %865 = vmatpush1.bf16.xpose.msra.mxu0 0
    %866 = vmatprep.subr.bf16.mxu0 0
    %867 = vmatpush1.bf16.xpose.msra.mxu0 0
    %868 = vmatprep.mubr.bf16.mxu0 0
    %869 = vmatmul.mubr.bf16.gmra.mrb[0].mxu0 %v831
    %v870 = vpop.f32.mrb[0].mxu0
    %v871 = vadd.f32 0.0, %v870
    %v872 = vpop.f32.mrb[0].mxu0
    %v873 = vpop.f32.mrb[0].mxu0
    %v874 = vpop.f32.mrb[0].mxu0
    %875 = vdwg.mxu0
    %876 = vrot.lane.b32.xlu0 %v383, 112
    %v877 = vpop.permute.xlu0 %876
    %878 = vrot.lane.b32.xlu0 %v389, 112
    %v879 = vpop.permute.xlu0 %878
    %v881 = vsel %vm396, %v877, 0
    %v884 = vsel %vm396, %v879, 0
    %886 = vmatprep.subr.bf16.mxu0 0
    %887 = vmatpush1.bf16.xpose.msra.mxu0 %v884
    %888 = vmatprep.subr.bf16.mxu0 0
    %889 = vmatpush1.bf16.xpose.msra.mxu0 0
    %890 = vmatprep.subr.bf16.mxu0 0
    %891 = vmatpush1.bf16.xpose.msra.mxu0 0
    %892 = vmatprep.subr.bf16.mxu0 0
    %893 = vmatpush1.bf16.xpose.msra.mxu0 0
    %894 = vmatprep.subr.bf16.mxu0 0
    %895 = vmatpush1.bf16.xpose.msra.mxu0 0
    %896 = vmatprep.subr.bf16.mxu0 0
    %897 = vmatpush1.bf16.xpose.msra.mxu0 0
    %898 = vmatprep.subr.bf16.mxu0 0
    %899 = vmatpush1.bf16.xpose.msra.mxu0 0
    %900 = vmatprep.subr.bf16.mxu0 0
    %901 = vmatpush1.bf16.xpose.msra.mxu0 0
    %902 = vmatprep.subr.bf16.mxu0 0
    %903 = vmatpush1.bf16.xpose.msra.mxu0 0
    %904 = vmatprep.subr.bf16.mxu0 0
    %905 = vmatpush1.bf16.xpose.msra.mxu0 0
    %906 = vmatprep.subr.bf16.mxu0 0
    %907 = vmatpush1.bf16.xpose.msra.mxu0 0
    %908 = vmatprep.subr.bf16.mxu0 0
    %909 = vmatpush1.bf16.xpose.msra.mxu0 0
    %910 = vmatprep.subr.bf16.mxu0 0
    %911 = vmatpush1.bf16.xpose.msra.mxu0 0
    %912 = vmatprep.subr.bf16.mxu0 0
    %913 = vmatpush1.bf16.xpose.msra.mxu0 0
    %914 = vmatprep.subr.bf16.mxu0 0
    %915 = vmatpush1.bf16.xpose.msra.mxu0 0
    %916 = vmatprep.subr.bf16.mxu0 0
    %917 = vmatpush1.bf16.xpose.msra.mxu0 0
    %918 = vmatprep.mubr.bf16.mxu0 0
    %919 = vmatmul.mubr.bf16.gmra.mrb[0].mxu0 %v881
    %v920 = vpop.f32.mrb[0].mxu0
    %v921 = vadd.f32 0.0, %v920
    %v922 = vpop.f32.mrb[0].mxu0
    %v923 = vpop.f32.mrb[0].mxu0
    %v924 = vpop.f32.mrb[0].mxu0
    %925 = vdwg.mxu0
    %v926 = vsel %vm396, %v871, -inf
    %927 = vmax.xlane.f32.xlu0 %v926
    %v928 = vpop.xlane.xlu0 %927
    %v929 = vsel %vm396, %v921, -inf
    %930 = vmax.xlane.f32.xlu0 %v929
    %v931 = vpop.xlane.xlu0 %930
    %v932 = vsub.f32 %v871, %v928
    %v933 = vsub.f32 %v921, %v931
    %v934 = vmul.f32 %v932, 1.442695
    %v935 = vpow.pop %v934
    %v936 = vmul.f32 %v933, 1.442695
    %v937 = vpow.pop %v936
    %v938 = vsel %vm396, %v935, 0.0
    %939 = vadd.xlane.f32.xlu0 %v938
    %v940 = vpop.xlane.xlu0 %939
    %v941 = vsel %vm396, %v937, 0.0
    %942 = vadd.xlane.f32.xlu0 %v941
    %v943 = vpop.xlane.xlu0 %942
    %v944 = vrcp.pop %v940
    %v945 = vrcp.pop %v943
    %v946 = vmul.f32 %v935, %v944
    %v947 = vmul.f32 %v937, %v945
    %v948 = vpack.c.bf16 %v946, %v946
    %v949 = vpack.c.bf16 %v947, %v947
    %950 = vrot.lane.b32.xlu0 %v394, 112
    %v951 = vpop.permute.xlu0 %950
    %v953 = vsel %vm396, %v948, 0
    %v956 = vsel %vm516, %v951, 0
    %958 = vmatprep.subr.bf16.mxu0 0
    %959 = vmatpush1.bf16.msra.mxu0 %v956
    %960 = vmatprep.subr.bf16.mxu0 0
    %961 = vmatpush1.bf16.msra.mxu0 0
    %962 = vmatprep.subr.bf16.mxu0 0
    %963 = vmatpush1.bf16.msra.mxu0 0
    %964 = vmatprep.subr.bf16.mxu0 0
    %965 = vmatpush1.bf16.msra.mxu0 0
    %966 = vmatprep.subr.bf16.mxu0 0
    %967 = vmatpush1.bf16.msra.mxu0 0
    %968 = vmatprep.subr.bf16.mxu0 0
    %969 = vmatpush1.bf16.msra.mxu0 0
    %970 = vmatprep.subr.bf16.mxu0 0
    %971 = vmatpush1.bf16.msra.mxu0 0
    %972 = vmatprep.subr.bf16.mxu0 0
    %973 = vmatpush1.bf16.msra.mxu0 0
    %974 = vmatprep.subr.bf16.mxu0 0
    %975 = vmatpush1.bf16.msra.mxu0 0
    %976 = vmatprep.subr.bf16.mxu0 0
    %977 = vmatpush1.bf16.msra.mxu0 0
    %978 = vmatprep.subr.bf16.mxu0 0
    %979 = vmatpush1.bf16.msra.mxu0 0
    %980 = vmatprep.subr.bf16.mxu0 0
    %981 = vmatpush1.bf16.msra.mxu0 0
    %982 = vmatprep.subr.bf16.mxu0 0
    %983 = vmatpush1.bf16.msra.mxu0 0
    %984 = vmatprep.subr.bf16.mxu0 0
    %985 = vmatpush1.bf16.msra.mxu0 0
    %986 = vmatprep.subr.bf16.mxu0 0
    %987 = vmatpush1.bf16.msra.mxu0 0
    %988 = vmatprep.subr.bf16.mxu0 0
    %989 = vmatpush1.bf16.msra.mxu0 0
    %990 = vmatprep.mubr.bf16.mxu0 0
    %991 = vmatmul.mubr.bf16.gmra.mrb[0].mxu0 %v953
    %v992 = vpop.f32.mrb[0].mxu0
    %v993 = vadd.f32 0.0, %v992
    %v994 = vpop.f32.mrb[0].mxu0
    %v995 = vpop.f32.mrb[0].mxu0
    %v996 = vpop.f32.mrb[0].mxu0
    %997 = vdwg.mxu0
    %998 = vrot.lane.b32.xlu0 %v395, 112
    %v999 = vpop.permute.xlu0 %998
    %v1001 = vsel %vm396, %v949, 0
    %v1004 = vsel %vm516, %v999, 0
    %1006 = vmatprep.subr.bf16.mxu0 0
    %1007 = vmatpush1.bf16.msra.mxu0 %v1004
    %1008 = vmatprep.subr.bf16.mxu0 0
    %1009 = vmatpush1.bf16.msra.mxu0 0
    %1010 = vmatprep.subr.bf16.mxu0 0
    %1011 = vmatpush1.bf16.msra.mxu0 0
    %1012 = vmatprep.subr.bf16.mxu0 0
    %1013 = vmatpush1.bf16.msra.mxu0 0
    %1014 = vmatprep.subr.bf16.mxu0 0
    %1015 = vmatpush1.bf16.msra.mxu0 0
    %1016 = vmatprep.subr.bf16.mxu0 0
    %1017 = vmatpush1.bf16.msra.mxu0 0
    %1018 = vmatprep.subr.bf16.mxu0 0
    %1019 = vmatpush1.bf16.msra.mxu0 0
    %1020 = vmatprep.subr.bf16.mxu0 0
    %1021 = vmatpush1.bf16.msra.mxu0 0
    %1022 = vmatprep.subr.bf16.mxu0 0
    %1023 = vmatpush1.bf16.msra.mxu0 0
    %1024 = vmatprep.subr.bf16.mxu0 0
    %1025 = vmatpush1.bf16.msra.mxu0 0
    %1026 = vmatprep.subr.bf16.mxu0 0
    %1027 = vmatpush1.bf16.msra.mxu0 0
    %1028 = vmatprep.subr.bf16.mxu0 0
    %1029 = vmatpush1.bf16.msra.mxu0 0
    %1030 = vmatprep.subr.bf16.mxu0 0
    %1031 = vmatpush1.bf16.msra.mxu0 0
    %1032 = vmatprep.subr.bf16.mxu0 0
    %1033 = vmatpush1.bf16.msra.mxu0 0
    %1034 = vmatprep.subr.bf16.mxu0 0
    %1035 = vmatpush1.bf16.msra.mxu0 0
    %1036 = vmatprep.subr.bf16.mxu0 0
    %1037 = vmatpush1.bf16.msra.mxu0 0
    %1038 = vmatprep.mubr.bf16.mxu0 0
    %1039 = vmatmul.mubr.bf16.gmra.mrb[0].mxu0 %v1001
    %v1040 = vpop.f32.mrb[0].mxu0
    %v1041 = vadd.f32 0.0, %v1040
    %v1042 = vpop.f32.mrb[0].mxu0
    %v1043 = vpop.f32.mrb[0].mxu0
    %v1044 = vpop.f32.mrb[0].mxu0
    %1045 = vdwg.mxu0
    %1046 = vrot.lane.b32.xlu0 %v382, 104
    %v1047 = vpop.permute.xlu0 %1046
    %1048 = vrot.lane.b32.xlu0 %v388, 104
    %v1049 = vpop.permute.xlu0 %1048
    %v1051 = vsel %vm396, %v1047, 0
    %v1054 = vsel %vm396, %v1049, 0
    %1056 = vmatprep.subr.bf16.mxu0 0
    %1057 = vmatpush1.bf16.xpose.msra.mxu0 %v1054
    %1058 = vmatprep.subr.bf16.mxu0 0
    %1059 = vmatpush1.bf16.xpose.msra.mxu0 0
    %1060 = vmatprep.subr.bf16.mxu0 0
    %1061 = vmatpush1.bf16.xpose.msra.mxu0 0
    %1062 = vmatprep.subr.bf16.mxu0 0
    %1063 = vmatpush1.bf16.xpose.msra.mxu0 0
    %1064 = vmatprep.subr.bf16.mxu0 0
    %1065 = vmatpush1.bf16.xpose.msra.mxu0 0
    %1066 = vmatprep.subr.bf16.mxu0 0
    %1067 = vmatpush1.bf16.xpose.msra.mxu0 0
    %1068 = vmatprep.subr.bf16.mxu0 0
    %1069 = vmatpush1.bf16.xpose.msra.mxu0 0
    %1070 = vmatprep.subr.bf16.mxu0 0
    %1071 = vmatpush1.bf16.xpose.msra.mxu0 0
    %1072 = vmatprep.subr.bf16.mxu0 0
    %1073 = vmatpush1.bf16.xpose.msra.mxu0 0
    %1074 = vmatprep.subr.bf16.mxu0 0
    %1075 = vmatpush1.bf16.xpose.msra.mxu0 0
    %1076 = vmatprep.subr.bf16.mxu0 0
    %1077 = vmatpush1.bf16.xpose.msra.mxu0 0
    %1078 = vmatprep.subr.bf16.mxu0 0
    %1079 = vmatpush1.bf16.xpose.msra.mxu0 0
    %1080 = vmatprep.subr.bf16.mxu0 0
    %1081 = vmatpush1.bf16.xpose.msra.mxu0 0
    %1082 = vmatprep.subr.bf16.mxu0 0
    %1083 = vmatpush1.bf16.xpose.msra.mxu0 0
    %1084 = vmatprep.subr.bf16.mxu0 0
    %1085 = vmatpush1.bf16.xpose.msra.mxu0 0
    %1086 = vmatprep.subr.bf16.mxu0 0
    %1087 = vmatpush1.bf16.xpose.msra.mxu0 0
    %1088 = vmatprep.mubr.bf16.mxu0 0
    %1089 = vmatmul.mubr.bf16.gmra.mrb[0].mxu0 %v1051
    %v1090 = vpop.f32.mrb[0].mxu0
    %v1091 = vadd.f32 0.0, %v1090
    %v1092 = vpop.f32.mrb[0].mxu0
    %v1093 = vpop.f32.mrb[0].mxu0
    %v1094 = vpop.f32.mrb[0].mxu0
    %1095 = vdwg.mxu0
    %1096 = vrot.lane.b32.xlu0 %v383, 104
    %v1097 = vpop.permute.xlu0 %1096
    %1098 = vrot.lane.b32.xlu0 %v389, 104
    %v1099 = vpop.permute.xlu0 %1098
    %v1101 = vsel %vm396, %v1097, 0
    %v1104 = vsel %vm396, %v1099, 0
    %1106 = vmatprep.subr.bf16.mxu0 0
    %1107 = vmatpush1.bf16.xpose.msra.mxu0 %v1104
    %1108 = vmatprep.subr.bf16.mxu0 0
    %1109 = vmatpush1.bf16.xpose.msra.mxu0 0
    %1110 = vmatprep.subr.bf16.mxu0 0
    %1111 = vmatpush1.bf16.xpose.msra.mxu0 0
    %1112 = vmatprep.subr.bf16.mxu0 0
    %1113 = vmatpush1.bf16.xpose.msra.mxu0 0
    %1114 = vmatprep.subr.bf16.mxu0 0
    %1115 = vmatpush1.bf16.xpose.msra.mxu0 0
    %1116 = vmatprep.subr.bf16.mxu0 0
    %1117 = vmatpush1.bf16.xpose.msra.mxu0 0
    %1118 = vmatprep.subr.bf16.mxu0 0
    %1119 = vmatpush1.bf16.xpose.msra.mxu0 0
    %1120 = vmatprep.subr.bf16.mxu0 0
    %1121 = vmatpush1.bf16.xpose.msra.mxu0 0
    %1122 = vmatprep.subr.bf16.mxu0 0
    %1123 = vmatpush1.bf16.xpose.msra.mxu0 0
    %1124 = vmatprep.subr.bf16.mxu0 0
    %1125 = vmatpush1.bf16.xpose.msra.mxu0 0
    %1126 = vmatprep.subr.bf16.mxu0 0
    %1127 = vmatpush1.bf16.xpose.msra.mxu0 0
    %1128 = vmatprep.subr.bf16.mxu0 0
    %1129 = vmatpush1.bf16.xpose.msra.mxu0 0
    %1130 = vmatprep.subr.bf16.mxu0 0
    %1131 = vmatpush1.bf16.xpose.msra.mxu0 0
    %1132 = vmatprep.subr.bf16.mxu0 0
    %1133 = vmatpush1.bf16.xpose.msra.mxu0 0
    %1134 = vmatprep.subr.bf16.mxu0 0
    %1135 = vmatpush1.bf16.xpose.msra.mxu0 0
    %1136 = vmatprep.subr.bf16.mxu0 0
    %1137 = vmatpush1.bf16.xpose.msra.mxu0 0
    %1138 = vmatprep.mubr.bf16.mxu0 0
    %1139 = vmatmul.mubr.bf16.gmra.mrb[0].mxu0 %v1101
    %v1140 = vpop.f32.mrb[0].mxu0
    %v1141 = vadd.f32 0.0, %v1140
    %v1142 = vpop.f32.mrb[0].mxu0
    %v1143 = vpop.f32.mrb[0].mxu0
    %v1144 = vpop.f32.mrb[0].mxu0
    %1145 = vdwg.mxu0
    %v1146 = vsel %vm396, %v1091, -inf
    %1147 = vmax.xlane.f32.xlu0 %v1146
    %v1148 = vpop.xlane.xlu0 %1147
    %v1149 = vsel %vm396, %v1141, -inf
    %1150 = vmax.xlane.f32.xlu0 %v1149
    %v1151 = vpop.xlane.xlu0 %1150
    %v1152 = vsub.f32 %v1091, %v1148
    %v1153 = vsub.f32 %v1141, %v1151
    %v1154 = vmul.f32 %v1152, 1.442695
    %v1155 = vpow.pop %v1154
    %v1156 = vmul.f32 %v1153, 1.442695
    %v1157 = vpow.pop %v1156
    %v1158 = vsel %vm396, %v1155, 0.0
    %1159 = vadd.xlane.f32.xlu0 %v1158
    %v1160 = vpop.xlane.xlu0 %1159
    %v1161 = vsel %vm396, %v1157, 0.0
    %1162 = vadd.xlane.f32.xlu0 %v1161
    %v1163 = vpop.xlane.xlu0 %1162
    %v1164 = vrcp.pop %v1160
    %v1165 = vrcp.pop %v1163
    %v1166 = vmul.f32 %v1155, %v1164
    %v1167 = vmul.f32 %v1157, %v1165
    %v1168 = vpack.c.bf16 %v1166, %v1166
    %v1169 = vpack.c.bf16 %v1167, %v1167
    %1170 = vrot.lane.b32.xlu0 %v394, 104
    %v1171 = vpop.permute.xlu0 %1170
    %v1173 = vsel %vm396, %v1168, 0
    %v1176 = vsel %vm516, %v1171, 0
    %1178 = vmatprep.subr.bf16.mxu0 0
    %1179 = vmatpush1.bf16.msra.mxu0 %v1176
    %1180 = vmatprep.subr.bf16.mxu0 0
    %1181 = vmatpush1.bf16.msra.mxu0 0
    %1182 = vmatprep.subr.bf16.mxu0 0
    %1183 = vmatpush1.bf16.msra.mxu0 0
    %1184 = vmatprep.subr.bf16.mxu0 0
    %1185 = vmatpush1.bf16.msra.mxu0 0
    %1186 = vmatprep.subr.bf16.mxu0 0
    %1187 = vmatpush1.bf16.msra.mxu0 0
    %1188 = vmatprep.subr.bf16.mxu0 0
    %1189 = vmatpush1.bf16.msra.mxu0 0
    %1190 = vmatprep.subr.bf16.mxu0 0
    %1191 = vmatpush1.bf16.msra.mxu0 0
    %1192 = vmatprep.subr.bf16.mxu0 0
    %1193 = vmatpush1.bf16.msra.mxu0 0
    %1194 = vmatprep.subr.bf16.mxu0 0
    %1195 = vmatpush1.bf16.msra.mxu0 0
    %1196 = vmatprep.subr.bf16.mxu0 0
    %1197 = vmatpush1.bf16.msra.mxu0 0
    %1198 = vmatprep.subr.bf16.mxu0 0
    %1199 = vmatpush1.bf16.msra.mxu0 0
    %1200 = vmatprep.subr.bf16.mxu0 0
    %1201 = vmatpush1.bf16.msra.mxu0 0
    %1202 = vmatprep.subr.bf16.mxu0 0
    %1203 = vmatpush1.bf16.msra.mxu0 0
    %1204 = vmatprep.subr.bf16.mxu0 0
    %1205 = vmatpush1.bf16.msra.mxu0 0
    %1206 = vmatprep.subr.bf16.mxu0 0
    %1207 = vmatpush1.bf16.msra.mxu0 0
    %1208 = vmatprep.subr.bf16.mxu0 0
    %1209 = vmatpush1.bf16.msra.mxu0 0
    %1210 = vmatprep.mubr.bf16.mxu0 0
    %1211 = vmatmul.mubr.bf16.gmra.mrb[0].mxu0 %v1173
    %v1212 = vpop.f32.mrb[0].mxu0
    %v1213 = vadd.f32 0.0, %v1212
    %v1214 = vpop.f32.mrb[0].mxu0
    %v1215 = vpop.f32.mrb[0].mxu0
    %v1216 = vpop.f32.mrb[0].mxu0
    %1217 = vdwg.mxu0
    %1218 = vrot.lane.b32.xlu0 %v395, 104
    %v1219 = vpop.permute.xlu0 %1218
    %v1221 = vsel %vm396, %v1169, 0
    %v1224 = vsel %vm516, %v1219, 0
    %1226 = vmatprep.subr.bf16.mxu0 0
    %1227 = vmatpush1.bf16.msra.mxu0 %v1224
    %1228 = vmatprep.subr.bf16.mxu0 0
    %1229 = vmatpush1.bf16.msra.mxu0 0
    %1230 = vmatprep.subr.bf16.mxu0 0
    %1231 = vmatpush1.bf16.msra.mxu0 0
    %1232 = vmatprep.subr.bf16.mxu0 0
    %1233 = vmatpush1.bf16.msra.mxu0 0
    %1234 = vmatprep.subr.bf16.mxu0 0
    %1235 = vmatpush1.bf16.msra.mxu0 0
    %1236 = vmatprep.subr.bf16.mxu0 0
    %1237 = vmatpush1.bf16.msra.mxu0 0
    %1238 = vmatprep.subr.bf16.mxu0 0
    %1239 = vmatpush1.bf16.msra.mxu0 0
    %1240 = vmatprep.subr.bf16.mxu0 0
    %1241 = vmatpush1.bf16.msra.mxu0 0
    %1242 = vmatprep.subr.bf16.mxu0 0
    %1243 = vmatpush1.bf16.msra.mxu0 0
    %1244 = vmatprep.subr.bf16.mxu0 0
    %1245 = vmatpush1.bf16.msra.mxu0 0
    %1246 = vmatprep.subr.bf16.mxu0 0
    %1247 = vmatpush1.bf16.msra.mxu0 0
    %1248 = vmatprep.subr.bf16.mxu0 0
    %1249 = vmatpush1.bf16.msra.mxu0 0
    %1250 = vmatprep.subr.bf16.mxu0 0
    %1251 = vmatpush1.bf16.msra.mxu0 0
    %1252 = vmatprep.subr.bf16.mxu0 0
    %1253 = vmatpush1.bf16.msra.mxu0 0
    %1254 = vmatprep.subr.bf16.mxu0 0
    %1255 = vmatpush1.bf16.msra.mxu0 0
    %1256 = vmatprep.subr.bf16.mxu0 0
    %1257 = vmatpush1.bf16.msra.mxu0 0
    %1258 = vmatprep.mubr.bf16.mxu0 0
    %1259 = vmatmul.mubr.bf16.gmra.mrb[0].mxu0 %v1221
    %v1260 = vpop.f32.mrb[0].mxu0
    %v1261 = vadd.f32 0.0, %v1260
    %v1262 = vpop.f32.mrb[0].mxu0
    %v1263 = vpop.f32.mrb[0].mxu0
    %v1264 = vpop.f32.mrb[0].mxu0
    %1265 = vdwg.mxu0
    %1266 = vrot.lane.b32.xlu0 %v382, 96
    %v1267 = vpop.permute.xlu0 %1266
    %1268 = vrot.lane.b32.xlu0 %v388, 96
    %v1269 = vpop.permute.xlu0 %1268
    %v1271 = vsel %vm396, %v1267, 0
    %v1274 = vsel %vm396, %v1269, 0
    %1276 = vmatprep.subr.bf16.mxu0 0
    %1277 = vmatpush1.bf16.xpose.msra.mxu0 %v1274
    %1278 = vmatprep.subr.bf16.mxu0 0
    %1279 = vmatpush1.bf16.xpose.msra.mxu0 0
    %1280 = vmatprep.subr.bf16.mxu0 0
    %1281 = vmatpush1.bf16.xpose.msra.mxu0 0
    %1282 = vmatprep.subr.bf16.mxu0 0
    %1283 = vmatpush1.bf16.xpose.msra.mxu0 0
    %1284 = vmatprep.subr.bf16.mxu0 0
    %1285 = vmatpush1.bf16.xpose.msra.mxu0 0
    %1286 = vmatprep.subr.bf16.mxu0 0
    %1287 = vmatpush1.bf16.xpose.msra.mxu0 0
    %1288 = vmatprep.subr.bf16.mxu0 0
    %1289 = vmatpush1.bf16.xpose.msra.mxu0 0
    %1290 = vmatprep.subr.bf16.mxu0 0
    %1291 = vmatpush1.bf16.xpose.msra.mxu0 0
    %1292 = vmatprep.subr.bf16.mxu0 0
    %1293 = vmatpush1.bf16.xpose.msra.mxu0 0
    %1294 = vmatprep.subr.bf16.mxu0 0
    %1295 = vmatpush1.bf16.xpose.msra.mxu0 0
    %1296 = vmatprep.subr.bf16.mxu0 0
    %1297 = vmatpush1.bf16.xpose.msra.mxu0 0
    %1298 = vmatprep.subr.bf16.mxu0 0
    %1299 = vmatpush1.bf16.xpose.msra.mxu0 0
    %1300 = vmatprep.subr.bf16.mxu0 0
    %1301 = vmatpush1.bf16.xpose.msra.mxu0 0
    %1302 = vmatprep.subr.bf16.mxu0 0
    %1303 = vmatpush1.bf16.xpose.msra.mxu0 0
    %1304 = vmatprep.subr.bf16.mxu0 0
    %1305 = vmatpush1.bf16.xpose.msra.mxu0 0
    %1306 = vmatprep.subr.bf16.mxu0 0
    %1307 = vmatpush1.bf16.xpose.msra.mxu0 0
    %1308 = vmatprep.mubr.bf16.mxu0 0
    %1309 = vmatmul.mubr.bf16.gmra.mrb[0].mxu0 %v1271
    %v1310 = vpop.f32.mrb[0].mxu0
    %v1311 = vadd.f32 0.0, %v1310
    %v1312 = vpop.f32.mrb[0].mxu0
    %v1313 = vpop.f32.mrb[0].mxu0
    %v1314 = vpop.f32.mrb[0].mxu0
    %1315 = vdwg.mxu0
    %1316 = vrot.lane.b32.xlu0 %v383, 96
    %v1317 = vpop.permute.xlu0 %1316
    %1318 = vrot.lane.b32.xlu0 %v389, 96
    %v1319 = vpop.permute.xlu0 %1318
    %v1321 = vsel %vm396, %v1317, 0
    %v1324 = vsel %vm396, %v1319, 0
    %1326 = vmatprep.subr.bf16.mxu0 0
    %1327 = vmatpush1.bf16.xpose.msra.mxu0 %v1324
    %1328 = vmatprep.subr.bf16.mxu0 0
    %1329 = vmatpush1.bf16.xpose.msra.mxu0 0
    %1330 = vmatprep.subr.bf16.mxu0 0
    %1331 = vmatpush1.bf16.xpose.msra.mxu0 0
    %1332 = vmatprep.subr.bf16.mxu0 0
    %1333 = vmatpush1.bf16.xpose.msra.mxu0 0
    %1334 = vmatprep.subr.bf16.mxu0 0
    %1335 = vmatpush1.bf16.xpose.msra.mxu0 0
    %1336 = vmatprep.subr.bf16.mxu0 0
    %1337 = vmatpush1.bf16.xpose.msra.mxu0 0
    %1338 = vmatprep.subr.bf16.mxu0 0
    %1339 = vmatpush1.bf16.xpose.msra.mxu0 0
    %1340 = vmatprep.subr.bf16.mxu0 0
    %1341 = vmatpush1.bf16.xpose.msra.mxu0 0
    %1342 = vmatprep.subr.bf16.mxu0 0
    %1343 = vmatpush1.bf16.xpose.msra.mxu0 0
    %1344 = vmatprep.subr.bf16.mxu0 0
    %1345 = vmatpush1.bf16.xpose.msra.mxu0 0
    %1346 = vmatprep.subr.bf16.mxu0 0
    %1347 = vmatpush1.bf16.xpose.msra.mxu0 0
    %1348 = vmatprep.subr.bf16.mxu0 0
    %1349 = vmatpush1.bf16.xpose.msra.mxu0 0
    %1350 = vmatprep.subr.bf16.mxu0 0
    %1351 = vmatpush1.bf16.xpose.msra.mxu0 0
    %1352 = vmatprep.subr.bf16.mxu0 0
    %1353 = vmatpush1.bf16.xpose.msra.mxu0 0
    %1354 = vmatprep.subr.bf16.mxu0 0
    %1355 = vmatpush1.bf16.xpose.msra.mxu0 0
    %1356 = vmatprep.subr.bf16.mxu0 0
    %1357 = vmatpush1.bf16.xpose.msra.mxu0 0
    %1358 = vmatprep.mubr.bf16.mxu0 0
    %1359 = vmatmul.mubr.bf16.gmra.mrb[0].mxu0 %v1321
    %v1360 = vpop.f32.mrb[0].mxu0
    %v1361 = vadd.f32 0.0, %v1360
    %v1362 = vpop.f32.mrb[0].mxu0
    %v1363 = vpop.f32.mrb[0].mxu0
    %v1364 = vpop.f32.mrb[0].mxu0
    %1365 = vdwg.mxu0
    %v1366 = vsel %vm396, %v1311, -inf
    %1367 = vmax.xlane.f32.xlu0 %v1366
    %v1368 = vpop.xlane.xlu0 %1367
    %v1369 = vsel %vm396, %v1361, -inf
    %1370 = vmax.xlane.f32.xlu0 %v1369
    %v1371 = vpop.xlane.xlu0 %1370
    %v1372 = vsub.f32 %v1311, %v1368
    %v1373 = vsub.f32 %v1361, %v1371
    %v1374 = vmul.f32 %v1372, 1.442695
    %v1375 = vpow.pop %v1374
    %v1376 = vmul.f32 %v1373, 1.442695
    %v1377 = vpow.pop %v1376
    %v1378 = vsel %vm396, %v1375, 0.0
    %1379 = vadd.xlane.f32.xlu0 %v1378
    %v1380 = vpop.xlane.xlu0 %1379
    %v1381 = vsel %vm396, %v1377, 0.0
    %1382 = vadd.xlane.f32.xlu0 %v1381
    %v1383 = vpop.xlane.xlu0 %1382
    %v1384 = vrcp.pop %v1380
    %v1385 = vrcp.pop %v1383
    %v1386 = vmul.f32 %v1375, %v1384
    %v1387 = vmul.f32 %v1377, %v1385
    %v1388 = vpack.c.bf16 %v1386, %v1386
    %v1389 = vpack.c.bf16 %v1387, %v1387
    %1390 = vrot.lane.b32.xlu0 %v394, 96
    %v1391 = vpop.permute.xlu0 %1390
    %v1393 = vsel %vm396, %v1388, 0
    %v1396 = vsel %vm516, %v1391, 0
    %1398 = vmatprep.subr.bf16.mxu0 0
    %1399 = vmatpush1.bf16.msra.mxu0 %v1396
    %1400 = vmatprep.subr.bf16.mxu0 0
    %1401 = vmatpush1.bf16.msra.mxu0 0
    %1402 = vmatprep.subr.bf16.mxu0 0
    %1403 = vmatpush1.bf16.msra.mxu0 0
    %1404 = vmatprep.subr.bf16.mxu0 0
    %1405 = vmatpush1.bf16.msra.mxu0 0
    %1406 = vmatprep.subr.bf16.mxu0 0
    %1407 = vmatpush1.bf16.msra.mxu0 0
    %1408 = vmatprep.subr.bf16.mxu0 0
    %1409 = vmatpush1.bf16.msra.mxu0 0
    %1410 = vmatprep.subr.bf16.mxu0 0
    %1411 = vmatpush1.bf16.msra.mxu0 0
    %1412 = vmatprep.subr.bf16.mxu0 0
    %1413 = vmatpush1.bf16.msra.mxu0 0
    %1414 = vmatprep.subr.bf16.mxu0 0
    %1415 = vmatpush1.bf16.msra.mxu0 0
    %1416 = vmatprep.subr.bf16.mxu0 0
    %1417 = vmatpush1.bf16.msra.mxu0 0
    %1418 = vmatprep.subr.bf16.mxu0 0
    %1419 = vmatpush1.bf16.msra.mxu0 0
    %1420 = vmatprep.subr.bf16.mxu0 0
    %1421 = vmatpush1.bf16.msra.mxu0 0
    %1422 = vmatprep.subr.bf16.mxu0 0
    %1423 = vmatpush1.bf16.msra.mxu0 0
    %1424 = vmatprep.subr.bf16.mxu0 0
    %1425 = vmatpush1.bf16.msra.mxu0 0
    %1426 = vmatprep.subr.bf16.mxu0 0
    %1427 = vmatpush1.bf16.msra.mxu0 0
    %1428 = vmatprep.subr.bf16.mxu0 0
    %1429 = vmatpush1.bf16.msra.mxu0 0
    %1430 = vmatprep.mubr.bf16.mxu0 0
    %1431 = vmatmul.mubr.bf16.gmra.mrb[0].mxu0 %v1393
    %v1432 = vpop.f32.mrb[0].mxu0
    %v1433 = vadd.f32 0.0, %v1432
    %v1434 = vpop.f32.mrb[0].mxu0
    %v1435 = vpop.f32.mrb[0].mxu0
    %v1436 = vpop.f32.mrb[0].mxu0
    %1437 = vdwg.mxu0
    %1438 = vrot.lane.b32.xlu0 %v395, 96
    %v1439 = vpop.permute.xlu0 %1438
    %v1441 = vsel %vm396, %v1389, 0
    %v1444 = vsel %vm516, %v1439, 0
    %1446 = vmatprep.subr.bf16.mxu0 0
    %1447 = vmatpush1.bf16.msra.mxu0 %v1444
    %1448 = vmatprep.subr.bf16.mxu0 0
    %1449 = vmatpush1.bf16.msra.mxu0 0
    %1450 = vmatprep.subr.bf16.mxu0 0
    %1451 = vmatpush1.bf16.msra.mxu0 0
    %1452 = vmatprep.subr.bf16.mxu0 0
    %1453 = vmatpush1.bf16.msra.mxu0 0
    %1454 = vmatprep.subr.bf16.mxu0 0
    %1455 = vmatpush1.bf16.msra.mxu0 0
    %1456 = vmatprep.subr.bf16.mxu0 0
    %1457 = vmatpush1.bf16.msra.mxu0 0
    %1458 = vmatprep.subr.bf16.mxu0 0
    %1459 = vmatpush1.bf16.msra.mxu0 0
    %1460 = vmatprep.subr.bf16.mxu0 0
    %1461 = vmatpush1.bf16.msra.mxu0 0
    %1462 = vmatprep.subr.bf16.mxu0 0
    %1463 = vmatpush1.bf16.msra.mxu0 0
    %1464 = vmatprep.subr.bf16.mxu0 0
    %1465 = vmatpush1.bf16.msra.mxu0 0
    %1466 = vmatprep.subr.bf16.mxu0 0
    %1467 = vmatpush1.bf16.msra.mxu0 0
    %1468 = vmatprep.subr.bf16.mxu0 0
    %1469 = vmatpush1.bf16.msra.mxu0 0
    %1470 = vmatprep.subr.bf16.mxu0 0
    %1471 = vmatpush1.bf16.msra.mxu0 0
    %1472 = vmatprep.subr.bf16.mxu0 0
    %1473 = vmatpush1.bf16.msra.mxu0 0
    %1474 = vmatprep.subr.bf16.mxu0 0
    %1475 = vmatpush1.bf16.msra.mxu0 0
    %1476 = vmatprep.subr.bf16.mxu0 0
    %1477 = vmatpush1.bf16.msra.mxu0 0
    %1478 = vmatprep.mubr.bf16.mxu0 0
    %1479 = vmatmul.mubr.bf16.gmra.mrb[0].mxu0 %v1441
    %v1480 = vpop.f32.mrb[0].mxu0
    %v1481 = vadd.f32 0.0, %v1480
    %v1482 = vpop.f32.mrb[0].mxu0
    %v1483 = vpop.f32.mrb[0].mxu0
    %v1484 = vpop.f32.mrb[0].mxu0
    %1485 = vdwg.mxu0
    %1486 = vrot.lane.b32.xlu0 %v382, 88
    %v1487 = vpop.permute.xlu0 %1486
    %1488 = vrot.lane.b32.xlu0 %v388, 88
    %v1489 = vpop.permute.xlu0 %1488
    %v1491 = vsel %vm396, %v1487, 0
    %v1494 = vsel %vm396, %v1489, 0
    %1496 = vmatprep.subr.bf16.mxu0 0
    %1497 = vmatpush1.bf16.xpose.msra.mxu0 %v1494
    %1498 = vmatprep.subr.bf16.mxu0 0
    %1499 = vmatpush1.bf16.xpose.msra.mxu0 0
    %1500 = vmatprep.subr.bf16.mxu0 0
    %1501 = vmatpush1.bf16.xpose.msra.mxu0 0
    %1502 = vmatprep.subr.bf16.mxu0 0
    %1503 = vmatpush1.bf16.xpose.msra.mxu0 0
    %1504 = vmatprep.subr.bf16.mxu0 0
    %1505 = vmatpush1.bf16.xpose.msra.mxu0 0
    %1506 = vmatprep.subr.bf16.mxu0 0
    %1507 = vmatpush1.bf16.xpose.msra.mxu0 0
    %1508 = vmatprep.subr.bf16.mxu0 0
    %1509 = vmatpush1.bf16.xpose.msra.mxu0 0
    %1510 = vmatprep.subr.bf16.mxu0 0
    %1511 = vmatpush1.bf16.xpose.msra.mxu0 0
    %1512 = vmatprep.subr.bf16.mxu0 0
    %1513 = vmatpush1.bf16.xpose.msra.mxu0 0
    %1514 = vmatprep.subr.bf16.mxu0 0
    %1515 = vmatpush1.bf16.xpose.msra.mxu0 0
    %1516 = vmatprep.subr.bf16.mxu0 0
    %1517 = vmatpush1.bf16.xpose.msra.mxu0 0
    %1518 = vmatprep.subr.bf16.mxu0 0
    %1519 = vmatpush1.bf16.xpose.msra.mxu0 0
    %1520 = vmatprep.subr.bf16.mxu0 0
    %1521 = vmatpush1.bf16.xpose.msra.mxu0 0
    %1522 = vmatprep.subr.bf16.mxu0 0
    %1523 = vmatpush1.bf16.xpose.msra.mxu0 0
    %1524 = vmatprep.subr.bf16.mxu0 0
    %1525 = vmatpush1.bf16.xpose.msra.mxu0 0
    %1526 = vmatprep.subr.bf16.mxu0 0
    %1527 = vmatpush1.bf16.xpose.msra.mxu0 0
    %1528 = vmatprep.mubr.bf16.mxu0 0
    %1529 = vmatmul.mubr.bf16.gmra.mrb[0].mxu0 %v1491
    %v1530 = vpop.f32.mrb[0].mxu0
    %v1531 = vadd.f32 0.0, %v1530
    %v1532 = vpop.f32.mrb[0].mxu0
    %v1533 = vpop.f32.mrb[0].mxu0
    %v1534 = vpop.f32.mrb[0].mxu0
    %1535 = vdwg.mxu0
    %1536 = vrot.lane.b32.xlu0 %v383, 88
    %v1537 = vpop.permute.xlu0 %1536
    %1538 = vrot.lane.b32.xlu0 %v389, 88
    %v1539 = vpop.permute.xlu0 %1538
    %v1541 = vsel %vm396, %v1537, 0
    %v1544 = vsel %vm396, %v1539, 0
    %1546 = vmatprep.subr.bf16.mxu0 0
    %1547 = vmatpush1.bf16.xpose.msra.mxu0 %v1544
    %1548 = vmatprep.subr.bf16.mxu0 0
    %1549 = vmatpush1.bf16.xpose.msra.mxu0 0
    %1550 = vmatprep.subr.bf16.mxu0 0
    %1551 = vmatpush1.bf16.xpose.msra.mxu0 0
    %1552 = vmatprep.subr.bf16.mxu0 0
    %1553 = vmatpush1.bf16.xpose.msra.mxu0 0
    %1554 = vmatprep.subr.bf16.mxu0 0
    %1555 = vmatpush1.bf16.xpose.msra.mxu0 0
    %1556 = vmatprep.subr.bf16.mxu0 0
    %1557 = vmatpush1.bf16.xpose.msra.mxu0 0
    %1558 = vmatprep.subr.bf16.mxu0 0
    %1559 = vmatpush1.bf16.xpose.msra.mxu0 0
    %1560 = vmatprep.subr.bf16.mxu0 0
    %1561 = vmatpush1.bf16.xpose.msra.mxu0 0
    %1562 = vmatprep.subr.bf16.mxu0 0
    %1563 = vmatpush1.bf16.xpose.msra.mxu0 0
    %1564 = vmatprep.subr.bf16.mxu0 0
    %1565 = vmatpush1.bf16.xpose.msra.mxu0 0
    %1566 = vmatprep.subr.bf16.mxu0 0
    %1567 = vmatpush1.bf16.xpose.msra.mxu0 0
    %1568 = vmatprep.subr.bf16.mxu0 0
    %1569 = vmatpush1.bf16.xpose.msra.mxu0 0
    %1570 = vmatprep.subr.bf16.mxu0 0
    %1571 = vmatpush1.bf16.xpose.msra.mxu0 0
    %1572 = vmatprep.subr.bf16.mxu0 0
    %1573 = vmatpush1.bf16.xpose.msra.mxu0 0
    %1574 = vmatprep.subr.bf16.mxu0 0
    %1575 = vmatpush1.bf16.xpose.msra.mxu0 0
    %1576 = vmatprep.subr.bf16.mxu0 0
    %1577 = vmatpush1.bf16.xpose.msra.mxu0 0
    %1578 = vmatprep.mubr.bf16.mxu0 0
    %1579 = vmatmul.mubr.bf16.gmra.mrb[0].mxu0 %v1541
    %v1580 = vpop.f32.mrb[0].mxu0
    %v1581 = vadd.f32 0.0, %v1580
    %v1582 = vpop.f32.mrb[0].mxu0
    %v1583 = vpop.f32.mrb[0].mxu0
    %v1584 = vpop.f32.mrb[0].mxu0
    %1585 = vdwg.mxu0
    %v1586 = vsel %vm396, %v1531, -inf
    %1587 = vmax.xlane.f32.xlu0 %v1586
    %v1588 = vpop.xlane.xlu0 %1587
    %v1589 = vsel %vm396, %v1581, -inf
    %1590 = vmax.xlane.f32.xlu0 %v1589
    %v1591 = vpop.xlane.xlu0 %1590
    %v1592 = vsub.f32 %v1531, %v1588
    %v1593 = vsub.f32 %v1581, %v1591
    %v1594 = vmul.f32 %v1592, 1.442695
    %v1595 = vpow.pop %v1594
    %v1596 = vmul.f32 %v1593, 1.442695
    %v1597 = vpow.pop %v1596
    %v1598 = vsel %vm396, %v1595, 0.0
    %1599 = vadd.xlane.f32.xlu0 %v1598
    %v1600 = vpop.xlane.xlu0 %1599
    %v1601 = vsel %vm396, %v1597, 0.0
    %1602 = vadd.xlane.f32.xlu0 %v1601
    %v1603 = vpop.xlane.xlu0 %1602
    %v1604 = vrcp.pop %v1600
    %v1605 = vrcp.pop %v1603
    %v1606 = vmul.f32 %v1595, %v1604
    %v1607 = vmul.f32 %v1597, %v1605
    %v1608 = vpack.c.bf16 %v1606, %v1606
    %v1609 = vpack.c.bf16 %v1607, %v1607
    %1610 = vrot.lane.b32.xlu0 %v394, 88
    %v1611 = vpop.permute.xlu0 %1610
    %v1613 = vsel %vm396, %v1608, 0
    %v1616 = vsel %vm516, %v1611, 0
    %1618 = vmatprep.subr.bf16.mxu0 0
    %1619 = vmatpush1.bf16.msra.mxu0 %v1616
    %1620 = vmatprep.subr.bf16.mxu0 0
    %1621 = vmatpush1.bf16.msra.mxu0 0
    %1622 = vmatprep.subr.bf16.mxu0 0
    %1623 = vmatpush1.bf16.msra.mxu0 0
    %1624 = vmatprep.subr.bf16.mxu0 0
    %1625 = vmatpush1.bf16.msra.mxu0 0
    %1626 = vmatprep.subr.bf16.mxu0 0
    %1627 = vmatpush1.bf16.msra.mxu0 0
    %1628 = vmatprep.subr.bf16.mxu0 0
    %1629 = vmatpush1.bf16.msra.mxu0 0
    %1630 = vmatprep.subr.bf16.mxu0 0
    %1631 = vmatpush1.bf16.msra.mxu0 0
    %1632 = vmatprep.subr.bf16.mxu0 0
    %1633 = vmatpush1.bf16.msra.mxu0 0
    %1634 = vmatprep.subr.bf16.mxu0 0
    %1635 = vmatpush1.bf16.msra.mxu0 0
    %1636 = vmatprep.subr.bf16.mxu0 0
    %1637 = vmatpush1.bf16.msra.mxu0 0
    %1638 = vmatprep.subr.bf16.mxu0 0
    %1639 = vmatpush1.bf16.msra.mxu0 0
    %1640 = vmatprep.subr.bf16.mxu0 0
    %1641 = vmatpush1.bf16.msra.mxu0 0
    %1642 = vmatprep.subr.bf16.mxu0 0
    %1643 = vmatpush1.bf16.msra.mxu0 0
    %1644 = vmatprep.subr.bf16.mxu0 0
    %1645 = vmatpush1.bf16.msra.mxu0 0
    %1646 = vmatprep.subr.bf16.mxu0 0
    %1647 = vmatpush1.bf16.msra.mxu0 0
    %1648 = vmatprep.subr.bf16.mxu0 0
    %1649 = vmatpush1.bf16.msra.mxu0 0
    %1650 = vmatprep.mubr.bf16.mxu0 0
    %1651 = vmatmul.mubr.bf16.gmra.mrb[0].mxu0 %v1613
    %v1652 = vpop.f32.mrb[0].mxu0
    %v1653 = vadd.f32 0.0, %v1652
    %v1654 = vpop.f32.mrb[0].mxu0
    %v1655 = vpop.f32.mrb[0].mxu0
    %v1656 = vpop.f32.mrb[0].mxu0
    %1657 = vdwg.mxu0
    %1658 = vrot.lane.b32.xlu0 %v395, 88
    %v1659 = vpop.permute.xlu0 %1658
    %v1661 = vsel %vm396, %v1609, 0
    %v1664 = vsel %vm516, %v1659, 0
    %1666 = vmatprep.subr.bf16.mxu0 0
    %1667 = vmatpush1.bf16.msra.mxu0 %v1664
    %1668 = vmatprep.subr.bf16.mxu0 0
    %1669 = vmatpush1.bf16.msra.mxu0 0
    %1670 = vmatprep.subr.bf16.mxu0 0
    %1671 = vmatpush1.bf16.msra.mxu0 0
    %1672 = vmatprep.subr.bf16.mxu0 0
    %1673 = vmatpush1.bf16.msra.mxu0 0
    %1674 = vmatprep.subr.bf16.mxu0 0
    %1675 = vmatpush1.bf16.msra.mxu0 0
    %1676 = vmatprep.subr.bf16.mxu0 0
    %1677 = vmatpush1.bf16.msra.mxu0 0
    %1678 = vmatprep.subr.bf16.mxu0 0
    %1679 = vmatpush1.bf16.msra.mxu0 0
    %1680 = vmatprep.subr.bf16.mxu0 0
    %1681 = vmatpush1.bf16.msra.mxu0 0
    %1682 = vmatprep.subr.bf16.mxu0 0
    %1683 = vmatpush1.bf16.msra.mxu0 0
    %1684 = vmatprep.subr.bf16.mxu0 0
    %1685 = vmatpush1.bf16.msra.mxu0 0
    %1686 = vmatprep.subr.bf16.mxu0 0
    %1687 = vmatpush1.bf16.msra.mxu0 0
    %1688 = vmatprep.subr.bf16.mxu0 0
    %1689 = vmatpush1.bf16.msra.mxu0 0
    %1690 = vmatprep.subr.bf16.mxu0 0
    %1691 = vmatpush1.bf16.msra.mxu0 0
    %1692 = vmatprep.subr.bf16.mxu0 0
    %1693 = vmatpush1.bf16.msra.mxu0 0
    %1694 = vmatprep.subr.bf16.mxu0 0
    %1695 = vmatpush1.bf16.msra.mxu0 0
    %1696 = vmatprep.subr.bf16.mxu0 0
    %1697 = vmatpush1.bf16.msra.mxu0 0
    %1698 = vmatprep.mubr.bf16.mxu0 0
    %1699 = vmatmul.mubr.bf16.gmra.mrb[0].mxu0 %v1661
    %v1700 = vpop.f32.mrb[0].mxu0
    %v1701 = vadd.f32 0.0, %v1700
    %v1702 = vpop.f32.mrb[0].mxu0
    %v1703 = vpop.f32.mrb[0].mxu0
    %v1704 = vpop.f32.mrb[0].mxu0
    %1705 = vdwg.mxu0
    %1706 = vrot.lane.b32.xlu0 %v382, 80
    %v1707 = vpop.permute.xlu0 %1706
    %1708 = vrot.lane.b32.xlu0 %v388, 80
    %v1709 = vpop.permute.xlu0 %1708
    %v1711 = vsel %vm396, %v1707, 0
    %v1714 = vsel %vm396, %v1709, 0
    %1716 = vmatprep.subr.bf16.mxu0 0
    %1717 = vmatpush1.bf16.xpose.msra.mxu0 %v1714
    %1718 = vmatprep.subr.bf16.mxu0 0
    %1719 = vmatpush1.bf16.xpose.msra.mxu0 0
    %1720 = vmatprep.subr.bf16.mxu0 0
    %1721 = vmatpush1.bf16.xpose.msra.mxu0 0
    %1722 = vmatprep.subr.bf16.mxu0 0
    %1723 = vmatpush1.bf16.xpose.msra.mxu0 0
    %1724 = vmatprep.subr.bf16.mxu0 0
    %1725 = vmatpush1.bf16.xpose.msra.mxu0 0
    %1726 = vmatprep.subr.bf16.mxu0 0
    %1727 = vmatpush1.bf16.xpose.msra.mxu0 0
    %1728 = vmatprep.subr.bf16.mxu0 0
    %1729 = vmatpush1.bf16.xpose.msra.mxu0 0
    %1730 = vmatprep.subr.bf16.mxu0 0
    %1731 = vmatpush1.bf16.xpose.msra.mxu0 0
    %1732 = vmatprep.subr.bf16.mxu0 0
    %1733 = vmatpush1.bf16.xpose.msra.mxu0 0
    %1734 = vmatprep.subr.bf16.mxu0 0
    %1735 = vmatpush1.bf16.xpose.msra.mxu0 0
    %1736 = vmatprep.subr.bf16.mxu0 0
    %1737 = vmatpush1.bf16.xpose.msra.mxu0 0
    %1738 = vmatprep.subr.bf16.mxu0 0
    %1739 = vmatpush1.bf16.xpose.msra.mxu0 0
    %1740 = vmatprep.subr.bf16.mxu0 0
    %1741 = vmatpush1.bf16.xpose.msra.mxu0 0
    %1742 = vmatprep.subr.bf16.mxu0 0
    %1743 = vmatpush1.bf16.xpose.msra.mxu0 0
    %1744 = vmatprep.subr.bf16.mxu0 0
    %1745 = vmatpush1.bf16.xpose.msra.mxu0 0
    %1746 = vmatprep.subr.bf16.mxu0 0
    %1747 = vmatpush1.bf16.xpose.msra.mxu0 0
    %1748 = vmatprep.mubr.bf16.mxu0 0
    %1749 = vmatmul.mubr.bf16.gmra.mrb[0].mxu0 %v1711
    %v1750 = vpop.f32.mrb[0].mxu0
    %v1751 = vadd.f32 0.0, %v1750
    %v1752 = vpop.f32.mrb[0].mxu0
    %v1753 = vpop.f32.mrb[0].mxu0
    %v1754 = vpop.f32.mrb[0].mxu0
    %1755 = vdwg.mxu0
    %1756 = vrot.lane.b32.xlu0 %v383, 80
    %v1757 = vpop.permute.xlu0 %1756
    %1758 = vrot.lane.b32.xlu0 %v389, 80
    %v1759 = vpop.permute.xlu0 %1758
    %v1761 = vsel %vm396, %v1757, 0
    %v1764 = vsel %vm396, %v1759, 0
    %1766 = vmatprep.subr.bf16.mxu0 0
    %1767 = vmatpush1.bf16.xpose.msra.mxu0 %v1764
    %1768 = vmatprep.subr.bf16.mxu0 0
    %1769 = vmatpush1.bf16.xpose.msra.mxu0 0
    %1770 = vmatprep.subr.bf16.mxu0 0
    %1771 = vmatpush1.bf16.xpose.msra.mxu0 0
    %1772 = vmatprep.subr.bf16.mxu0 0
    %1773 = vmatpush1.bf16.xpose.msra.mxu0 0
    %1774 = vmatprep.subr.bf16.mxu0 0
    %1775 = vmatpush1.bf16.xpose.msra.mxu0 0
    %1776 = vmatprep.subr.bf16.mxu0 0
    %1777 = vmatpush1.bf16.xpose.msra.mxu0 0
    %1778 = vmatprep.subr.bf16.mxu0 0
    %1779 = vmatpush1.bf16.xpose.msra.mxu0 0
    %1780 = vmatprep.subr.bf16.mxu0 0
    %1781 = vmatpush1.bf16.xpose.msra.mxu0 0
    %1782 = vmatprep.subr.bf16.mxu0 0
    %1783 = vmatpush1.bf16.xpose.msra.mxu0 0
    %1784 = vmatprep.subr.bf16.mxu0 0
    %1785 = vmatpush1.bf16.xpose.msra.mxu0 0
    %1786 = vmatprep.subr.bf16.mxu0 0
    %1787 = vmatpush1.bf16.xpose.msra.mxu0 0
    %1788 = vmatprep.subr.bf16.mxu0 0
    %1789 = vmatpush1.bf16.xpose.msra.mxu0 0
    %1790 = vmatprep.subr.bf16.mxu0 0
    %1791 = vmatpush1.bf16.xpose.msra.mxu0 0
    %1792 = vmatprep.subr.bf16.mxu0 0
    %1793 = vmatpush1.bf16.xpose.msra.mxu0 0
    %1794 = vmatprep.subr.bf16.mxu0 0
    %1795 = vmatpush1.bf16.xpose.msra.mxu0 0
    %1796 = vmatprep.subr.bf16.mxu0 0
    %1797 = vmatpush1.bf16.xpose.msra.mxu0 0
    %1798 = vmatprep.mubr.bf16.mxu0 0
    %1799 = vmatmul.mubr.bf16.gmra.mrb[0].mxu0 %v1761
    %v1800 = vpop.f32.mrb[0].mxu0
    %v1801 = vadd.f32 0.0, %v1800
    %v1802 = vpop.f32.mrb[0].mxu0
    %v1803 = vpop.f32.mrb[0].mxu0
    %v1804 = vpop.f32.mrb[0].mxu0
    %1805 = vdwg.mxu0
    %v1806 = vsel %vm396, %v1751, -inf
    %1807 = vmax.xlane.f32.xlu0 %v1806
    %v1808 = vpop.xlane.xlu0 %1807
    %v1809 = vsel %vm396, %v1801, -inf
    %1810 = vmax.xlane.f32.xlu0 %v1809
    %v1811 = vpop.xlane.xlu0 %1810
    %v1812 = vsub.f32 %v1751, %v1808
    %v1813 = vsub.f32 %v1801, %v1811
    %v1814 = vmul.f32 %v1812, 1.442695
    %v1815 = vpow.pop %v1814
    %v1816 = vmul.f32 %v1813, 1.442695
    %v1817 = vpow.pop %v1816
    %v1818 = vsel %vm396, %v1815, 0.0
    %1819 = vadd.xlane.f32.xlu0 %v1818
    %v1820 = vpop.xlane.xlu0 %1819
    %v1821 = vsel %vm396, %v1817, 0.0
    %1822 = vadd.xlane.f32.xlu0 %v1821
    %v1823 = vpop.xlane.xlu0 %1822
    %v1824 = vrcp.pop %v1820
    %v1825 = vrcp.pop %v1823
    %v1826 = vmul.f32 %v1815, %v1824
    %v1827 = vmul.f32 %v1817, %v1825
    %v1828 = vpack.c.bf16 %v1826, %v1826
    %v1829 = vpack.c.bf16 %v1827, %v1827
    %1830 = vrot.lane.b32.xlu0 %v394, 80
    %v1831 = vpop.permute.xlu0 %1830
    %v1833 = vsel %vm396, %v1828, 0
    %v1836 = vsel %vm516, %v1831, 0
    %1838 = vmatprep.subr.bf16.mxu0 0
    %1839 = vmatpush1.bf16.msra.mxu0 %v1836
    %1840 = vmatprep.subr.bf16.mxu0 0
    %1841 = vmatpush1.bf16.msra.mxu0 0
    %1842 = vmatprep.subr.bf16.mxu0 0
    %1843 = vmatpush1.bf16.msra.mxu0 0
    %1844 = vmatprep.subr.bf16.mxu0 0
    %1845 = vmatpush1.bf16.msra.mxu0 0
    %1846 = vmatprep.subr.bf16.mxu0 0
    %1847 = vmatpush1.bf16.msra.mxu0 0
    %1848 = vmatprep.subr.bf16.mxu0 0
    %1849 = vmatpush1.bf16.msra.mxu0 0
    %1850 = vmatprep.subr.bf16.mxu0 0
    %1851 = vmatpush1.bf16.msra.mxu0 0
    %1852 = vmatprep.subr.bf16.mxu0 0
    %1853 = vmatpush1.bf16.msra.mxu0 0
    %1854 = vmatprep.subr.bf16.mxu0 0
    %1855 = vmatpush1.bf16.msra.mxu0 0
    %1856 = vmatprep.subr.bf16.mxu0 0
    %1857 = vmatpush1.bf16.msra.mxu0 0
    %1858 = vmatprep.subr.bf16.mxu0 0
    %1859 = vmatpush1.bf16.msra.mxu0 0
    %1860 = vmatprep.subr.bf16.mxu0 0
    %1861 = vmatpush1.bf16.msra.mxu0 0
    %1862 = vmatprep.subr.bf16.mxu0 0
    %1863 = vmatpush1.bf16.msra.mxu0 0
    %1864 = vmatprep.subr.bf16.mxu0 0
    %1865 = vmatpush1.bf16.msra.mxu0 0
    %1866 = vmatprep.subr.bf16.mxu0 0
    %1867 = vmatpush1.bf16.msra.mxu0 0
    %1868 = vmatprep.subr.bf16.mxu0 0
    %1869 = vmatpush1.bf16.msra.mxu0 0
    %1870 = vmatprep.mubr.bf16.mxu0 0
    %1871 = vmatmul.mubr.bf16.gmra.mrb[0].mxu0 %v1833
    %v1872 = vpop.f32.mrb[0].mxu0
    %v1873 = vadd.f32 0.0, %v1872
    %v1874 = vpop.f32.mrb[0].mxu0
    %v1875 = vpop.f32.mrb[0].mxu0
    %v1876 = vpop.f32.mrb[0].mxu0
    %1877 = vdwg.mxu0
    %1878 = vrot.lane.b32.xlu0 %v395, 80
    %v1879 = vpop.permute.xlu0 %1878
    %v1881 = vsel %vm396, %v1829, 0
    %v1884 = vsel %vm516, %v1879, 0
    %1886 = vmatprep.subr.bf16.mxu0 0
    %1887 = vmatpush1.bf16.msra.mxu0 %v1884
    %1888 = vmatprep.subr.bf16.mxu0 0
    %1889 = vmatpush1.bf16.msra.mxu0 0
    %1890 = vmatprep.subr.bf16.mxu0 0
    %1891 = vmatpush1.bf16.msra.mxu0 0
    %1892 = vmatprep.subr.bf16.mxu0 0
    %1893 = vmatpush1.bf16.msra.mxu0 0
    %1894 = vmatprep.subr.bf16.mxu0 0
    %1895 = vmatpush1.bf16.msra.mxu0 0
    %1896 = vmatprep.subr.bf16.mxu0 0
    %1897 = vmatpush1.bf16.msra.mxu0 0
    %1898 = vmatprep.subr.bf16.mxu0 0
    %1899 = vmatpush1.bf16.msra.mxu0 0
    %1900 = vmatprep.subr.bf16.mxu0 0
    %1901 = vmatpush1.bf16.msra.mxu0 0
    %1902 = vmatprep.subr.bf16.mxu0 0
    %1903 = vmatpush1.bf16.msra.mxu0 0
    %1904 = vmatprep.subr.bf16.mxu0 0
    %1905 = vmatpush1.bf16.msra.mxu0 0
    %1906 = vmatprep.subr.bf16.mxu0 0
    %1907 = vmatpush1.bf16.msra.mxu0 0
    %1908 = vmatprep.subr.bf16.mxu0 0
    %1909 = vmatpush1.bf16.msra.mxu0 0
    %1910 = vmatprep.subr.bf16.mxu0 0
    %1911 = vmatpush1.bf16.msra.mxu0 0
    %1912 = vmatprep.subr.bf16.mxu0 0
    %1913 = vmatpush1.bf16.msra.mxu0 0
    %1914 = vmatprep.subr.bf16.mxu0 0
    %1915 = vmatpush1.bf16.msra.mxu0 0
    %1916 = vmatprep.subr.bf16.mxu0 0
    %1917 = vmatpush1.bf16.msra.mxu0 0
    %1918 = vmatprep.mubr.bf16.mxu0 0
    %1919 = vmatmul.mubr.bf16.gmra.mrb[0].mxu0 %v1881
    %v1920 = vpop.f32.mrb[0].mxu0
    %v1921 = vadd.f32 0.0, %v1920
    %v1922 = vpop.f32.mrb[0].mxu0
    %v1923 = vpop.f32.mrb[0].mxu0
    %v1924 = vpop.f32.mrb[0].mxu0
    %1925 = vdwg.mxu0
    %1926 = vrot.lane.b32.xlu0 %v382, 72
    %v1927 = vpop.permute.xlu0 %1926
    %1928 = vrot.lane.b32.xlu0 %v388, 72
    %v1929 = vpop.permute.xlu0 %1928
    %v1931 = vsel %vm396, %v1927, 0
    %v1934 = vsel %vm396, %v1929, 0
    %1936 = vmatprep.subr.bf16.mxu0 0
    %1937 = vmatpush1.bf16.xpose.msra.mxu0 %v1934
    %1938 = vmatprep.subr.bf16.mxu0 0
    %1939 = vmatpush1.bf16.xpose.msra.mxu0 0
    %1940 = vmatprep.subr.bf16.mxu0 0
    %1941 = vmatpush1.bf16.xpose.msra.mxu0 0
    %1942 = vmatprep.subr.bf16.mxu0 0
    %1943 = vmatpush1.bf16.xpose.msra.mxu0 0
    %1944 = vmatprep.subr.bf16.mxu0 0
    %1945 = vmatpush1.bf16.xpose.msra.mxu0 0
    %1946 = vmatprep.subr.bf16.mxu0 0
    %1947 = vmatpush1.bf16.xpose.msra.mxu0 0
    %1948 = vmatprep.subr.bf16.mxu0 0
    %1949 = vmatpush1.bf16.xpose.msra.mxu0 0
    %1950 = vmatprep.subr.bf16.mxu0 0
    %1951 = vmatpush1.bf16.xpose.msra.mxu0 0
    %1952 = vmatprep.subr.bf16.mxu0 0
    %1953 = vmatpush1.bf16.xpose.msra.mxu0 0
    %1954 = vmatprep.subr.bf16.mxu0 0
    %1955 = vmatpush1.bf16.xpose.msra.mxu0 0
    %1956 = vmatprep.subr.bf16.mxu0 0
    %1957 = vmatpush1.bf16.xpose.msra.mxu0 0
    %1958 = vmatprep.subr.bf16.mxu0 0
    %1959 = vmatpush1.bf16.xpose.msra.mxu0 0
    %1960 = vmatprep.subr.bf16.mxu0 0
    %1961 = vmatpush1.bf16.xpose.msra.mxu0 0
    %1962 = vmatprep.subr.bf16.mxu0 0
    %1963 = vmatpush1.bf16.xpose.msra.mxu0 0
    %1964 = vmatprep.subr.bf16.mxu0 0
    %1965 = vmatpush1.bf16.xpose.msra.mxu0 0
    %1966 = vmatprep.subr.bf16.mxu0 0
    %1967 = vmatpush1.bf16.xpose.msra.mxu0 0
    %1968 = vmatprep.mubr.bf16.mxu0 0
    %1969 = vmatmul.mubr.bf16.gmra.mrb[0].mxu0 %v1931
    %v1970 = vpop.f32.mrb[0].mxu0
    %v1971 = vadd.f32 0.0, %v1970
    %v1972 = vpop.f32.mrb[0].mxu0
    %v1973 = vpop.f32.mrb[0].mxu0
    %v1974 = vpop.f32.mrb[0].mxu0
    %1975 = vdwg.mxu0
    %1976 = vrot.lane.b32.xlu0 %v383, 72
    %v1977 = vpop.permute.xlu0 %1976
    %1978 = vrot.lane.b32.xlu0 %v389, 72
    %v1979 = vpop.permute.xlu0 %1978
    %v1981 = vsel %vm396, %v1977, 0
    %v1984 = vsel %vm396, %v1979, 0
    %1986 = vmatprep.subr.bf16.mxu0 0
    %1987 = vmatpush1.bf16.xpose.msra.mxu0 %v1984
    %1988 = vmatprep.subr.bf16.mxu0 0
    %1989 = vmatpush1.bf16.xpose.msra.mxu0 0
    %1990 = vmatprep.subr.bf16.mxu0 0
    %1991 = vmatpush1.bf16.xpose.msra.mxu0 0
    %1992 = vmatprep.subr.bf16.mxu0 0
    %1993 = vmatpush1.bf16.xpose.msra.mxu0 0
    %1994 = vmatprep.subr.bf16.mxu0 0
    %1995 = vmatpush1.bf16.xpose.msra.mxu0 0
    %1996 = vmatprep.subr.bf16.mxu0 0
    %1997 = vmatpush1.bf16.xpose.msra.mxu0 0
    %1998 = vmatprep.subr.bf16.mxu0 0
    %1999 = vmatpush1.bf16.xpose.msra.mxu0 0
    %2000 = vmatprep.subr.bf16.mxu0 0
    %2001 = vmatpush1.bf16.xpose.msra.mxu0 0
    %2002 = vmatprep.subr.bf16.mxu0 0
    %2003 = vmatpush1.bf16.xpose.msra.mxu0 0
    %2004 = vmatprep.subr.bf16.mxu0 0
    %2005 = vmatpush1.bf16.xpose.msra.mxu0 0
    %2006 = vmatprep.subr.bf16.mxu0 0
    %2007 = vmatpush1.bf16.xpose.msra.mxu0 0
    %2008 = vmatprep.subr.bf16.mxu0 0
    %2009 = vmatpush1.bf16.xpose.msra.mxu0 0
    %2010 = vmatprep.subr.bf16.mxu0 0
    %2011 = vmatpush1.bf16.xpose.msra.mxu0 0
    %2012 = vmatprep.subr.bf16.mxu0 0
    %2013 = vmatpush1.bf16.xpose.msra.mxu0 0
    %2014 = vmatprep.subr.bf16.mxu0 0
    %2015 = vmatpush1.bf16.xpose.msra.mxu0 0
    %2016 = vmatprep.subr.bf16.mxu0 0
    %2017 = vmatpush1.bf16.xpose.msra.mxu0 0
    %2018 = vmatprep.mubr.bf16.mxu0 0
    %2019 = vmatmul.mubr.bf16.gmra.mrb[0].mxu0 %v1981
    %v2020 = vpop.f32.mrb[0].mxu0
    %v2021 = vadd.f32 0.0, %v2020
    %v2022 = vpop.f32.mrb[0].mxu0
    %v2023 = vpop.f32.mrb[0].mxu0
    %v2024 = vpop.f32.mrb[0].mxu0
    %2025 = vdwg.mxu0
    %v2026 = vsel %vm396, %v1971, -inf
    %2027 = vmax.xlane.f32.xlu0 %v2026
    %v2028 = vpop.xlane.xlu0 %2027
    %v2029 = vsel %vm396, %v2021, -inf
    %2030 = vmax.xlane.f32.xlu0 %v2029
    %v2031 = vpop.xlane.xlu0 %2030
    %v2032 = vsub.f32 %v1971, %v2028
    %v2033 = vsub.f32 %v2021, %v2031
    %v2034 = vmul.f32 %v2032, 1.442695
    %v2035 = vpow.pop %v2034
    %v2036 = vmul.f32 %v2033, 1.442695
    %v2037 = vpow.pop %v2036
    %v2038 = vsel %vm396, %v2035, 0.0
    %2039 = vadd.xlane.f32.xlu0 %v2038
    %v2040 = vpop.xlane.xlu0 %2039
    %v2041 = vsel %vm396, %v2037, 0.0
    %2042 = vadd.xlane.f32.xlu0 %v2041
    %v2043 = vpop.xlane.xlu0 %2042
    %v2044 = vrcp.pop %v2040
    %v2045 = vrcp.pop %v2043
    %v2046 = vmul.f32 %v2035, %v2044
    %v2047 = vmul.f32 %v2037, %v2045
    %v2048 = vpack.c.bf16 %v2046, %v2046
    %v2049 = vpack.c.bf16 %v2047, %v2047
    %2050 = vrot.lane.b32.xlu0 %v394, 72
    %v2051 = vpop.permute.xlu0 %2050
    %v2053 = vsel %vm396, %v2048, 0
    %v2056 = vsel %vm516, %v2051, 0
    %2058 = vmatprep.subr.bf16.mxu0 0
    %2059 = vmatpush1.bf16.msra.mxu0 %v2056
    %2060 = vmatprep.subr.bf16.mxu0 0
    %2061 = vmatpush1.bf16.msra.mxu0 0
    %2062 = vmatprep.subr.bf16.mxu0 0
    %2063 = vmatpush1.bf16.msra.mxu0 0
    %2064 = vmatprep.subr.bf16.mxu0 0
    %2065 = vmatpush1.bf16.msra.mxu0 0
    %2066 = vmatprep.subr.bf16.mxu0 0
    %2067 = vmatpush1.bf16.msra.mxu0 0
    %2068 = vmatprep.subr.bf16.mxu0 0
    %2069 = vmatpush1.bf16.msra.mxu0 0
    %2070 = vmatprep.subr.bf16.mxu0 0
    %2071 = vmatpush1.bf16.msra.mxu0 0
    %2072 = vmatprep.subr.bf16.mxu0 0
    %2073 = vmatpush1.bf16.msra.mxu0 0
    %2074 = vmatprep.subr.bf16.mxu0 0
    %2075 = vmatpush1.bf16.msra.mxu0 0
    %2076 = vmatprep.subr.bf16.mxu0 0
    %2077 = vmatpush1.bf16.msra.mxu0 0
    %2078 = vmatprep.subr.bf16.mxu0 0
    %2079 = vmatpush1.bf16.msra.mxu0 0
    %2080 = vmatprep.subr.bf16.mxu0 0
    %2081 = vmatpush1.bf16.msra.mxu0 0
    %2082 = vmatprep.subr.bf16.mxu0 0
    %2083 = vmatpush1.bf16.msra.mxu0 0
    %2084 = vmatprep.subr.bf16.mxu0 0
    %2085 = vmatpush1.bf16.msra.mxu0 0
    %2086 = vmatprep.subr.bf16.mxu0 0
    %2087 = vmatpush1.bf16.msra.mxu0 0
    %2088 = vmatprep.subr.bf16.mxu0 0
    %2089 = vmatpush1.bf16.msra.mxu0 0
    %2090 = vmatprep.mubr.bf16.mxu0 0
    %2091 = vmatmul.mubr.bf16.gmra.mrb[0].mxu0 %v2053
    %v2092 = vpop.f32.mrb[0].mxu0
    %v2093 = vadd.f32 0.0, %v2092
    %v2094 = vpop.f32.mrb[0].mxu0
    %v2095 = vpop.f32.mrb[0].mxu0
    %v2096 = vpop.f32.mrb[0].mxu0
    %2097 = vdwg.mxu0
    %2098 = vrot.lane.b32.xlu0 %v395, 72
    %v2099 = vpop.permute.xlu0 %2098
    %v2101 = vsel %vm396, %v2049, 0
    %v2104 = vsel %vm516, %v2099, 0
    %2106 = vmatprep.subr.bf16.mxu0 0
    %2107 = vmatpush1.bf16.msra.mxu0 %v2104
    %2108 = vmatprep.subr.bf16.mxu0 0
    %2109 = vmatpush1.bf16.msra.mxu0 0
    %2110 = vmatprep.subr.bf16.mxu0 0
    %2111 = vmatpush1.bf16.msra.mxu0 0
    %2112 = vmatprep.subr.bf16.mxu0 0
    %2113 = vmatpush1.bf16.msra.mxu0 0
    %2114 = vmatprep.subr.bf16.mxu0 0
    %2115 = vmatpush1.bf16.msra.mxu0 0
    %2116 = vmatprep.subr.bf16.mxu0 0
    %2117 = vmatpush1.bf16.msra.mxu0 0
    %2118 = vmatprep.subr.bf16.mxu0 0
    %2119 = vmatpush1.bf16.msra.mxu0 0
    %2120 = vmatprep.subr.bf16.mxu0 0
    %2121 = vmatpush1.bf16.msra.mxu0 0
    %2122 = vmatprep.subr.bf16.mxu0 0
    %2123 = vmatpush1.bf16.msra.mxu0 0
    %2124 = vmatprep.subr.bf16.mxu0 0
    %2125 = vmatpush1.bf16.msra.mxu0 0
    %2126 = vmatprep.subr.bf16.mxu0 0
    %2127 = vmatpush1.bf16.msra.mxu0 0
    %2128 = vmatprep.subr.bf16.mxu0 0
    %2129 = vmatpush1.bf16.msra.mxu0 0
    %2130 = vmatprep.subr.bf16.mxu0 0
    %2131 = vmatpush1.bf16.msra.mxu0 0
    %2132 = vmatprep.subr.bf16.mxu0 0
    %2133 = vmatpush1.bf16.msra.mxu0 0
    %2134 = vmatprep.subr.bf16.mxu0 0
    %2135 = vmatpush1.bf16.msra.mxu0 0
    %2136 = vmatprep.subr.bf16.mxu0 0
    %2137 = vmatpush1.bf16.msra.mxu0 0
    %2138 = vmatprep.mubr.bf16.mxu0 0
    %2139 = vmatmul.mubr.bf16.gmra.mrb[0].mxu0 %v2101
    %v2140 = vpop.f32.mrb[0].mxu0
    %v2141 = vadd.f32 0.0, %v2140
    %v2142 = vpop.f32.mrb[0].mxu0
    %v2143 = vpop.f32.mrb[0].mxu0
    %v2144 = vpop.f32.mrb[0].mxu0
    %2145 = vdwg.mxu0
    %2146 = vrot.lane.b32.xlu0 %v382, 64
    %v2147 = vpop.permute.xlu0 %2146
    %2148 = vrot.lane.b32.xlu0 %v388, 64
    %v2149 = vpop.permute.xlu0 %2148
    %v2151 = vsel %vm396, %v2147, 0
    %v2154 = vsel %vm396, %v2149, 0
    %2156 = vmatprep.subr.bf16.mxu0 0
    %2157 = vmatpush1.bf16.xpose.msra.mxu0 %v2154
    %2158 = vmatprep.subr.bf16.mxu0 0
    %2159 = vmatpush1.bf16.xpose.msra.mxu0 0
    %2160 = vmatprep.subr.bf16.mxu0 0
    %2161 = vmatpush1.bf16.xpose.msra.mxu0 0
    %2162 = vmatprep.subr.bf16.mxu0 0
    %2163 = vmatpush1.bf16.xpose.msra.mxu0 0
    %2164 = vmatprep.subr.bf16.mxu0 0
    %2165 = vmatpush1.bf16.xpose.msra.mxu0 0
    %2166 = vmatprep.subr.bf16.mxu0 0
    %2167 = vmatpush1.bf16.xpose.msra.mxu0 0
    %2168 = vmatprep.subr.bf16.mxu0 0
    %2169 = vmatpush1.bf16.xpose.msra.mxu0 0
    %2170 = vmatprep.subr.bf16.mxu0 0
    %2171 = vmatpush1.bf16.xpose.msra.mxu0 0
    %2172 = vmatprep.subr.bf16.mxu0 0
    %2173 = vmatpush1.bf16.xpose.msra.mxu0 0
    %2174 = vmatprep.subr.bf16.mxu0 0
    %2175 = vmatpush1.bf16.xpose.msra.mxu0 0
    %2176 = vmatprep.subr.bf16.mxu0 0
    %2177 = vmatpush1.bf16.xpose.msra.mxu0 0
    %2178 = vmatprep.subr.bf16.mxu0 0
    %2179 = vmatpush1.bf16.xpose.msra.mxu0 0
    %2180 = vmatprep.subr.bf16.mxu0 0
    %2181 = vmatpush1.bf16.xpose.msra.mxu0 0
    %2182 = vmatprep.subr.bf16.mxu0 0
    %2183 = vmatpush1.bf16.xpose.msra.mxu0 0
    %2184 = vmatprep.subr.bf16.mxu0 0
    %2185 = vmatpush1.bf16.xpose.msra.mxu0 0
    %2186 = vmatprep.subr.bf16.mxu0 0
    %2187 = vmatpush1.bf16.xpose.msra.mxu0 0
    %2188 = vmatprep.mubr.bf16.mxu0 0
    %2189 = vmatmul.mubr.bf16.gmra.mrb[0].mxu0 %v2151
    %v2190 = vpop.f32.mrb[0].mxu0
    %v2191 = vadd.f32 0.0, %v2190
    %v2192 = vpop.f32.mrb[0].mxu0
    %v2193 = vpop.f32.mrb[0].mxu0
    %v2194 = vpop.f32.mrb[0].mxu0
    %2195 = vdwg.mxu0
    %2196 = vrot.lane.b32.xlu0 %v383, 64
    %v2197 = vpop.permute.xlu0 %2196
    %2198 = vrot.lane.b32.xlu0 %v389, 64
    %v2199 = vpop.permute.xlu0 %2198
    %v2201 = vsel %vm396, %v2197, 0
    %v2204 = vsel %vm396, %v2199, 0
    %2206 = vmatprep.subr.bf16.mxu0 0
    %2207 = vmatpush1.bf16.xpose.msra.mxu0 %v2204
    %2208 = vmatprep.subr.bf16.mxu0 0
    %2209 = vmatpush1.bf16.xpose.msra.mxu0 0
    %2210 = vmatprep.subr.bf16.mxu0 0
    %2211 = vmatpush1.bf16.xpose.msra.mxu0 0
    %2212 = vmatprep.subr.bf16.mxu0 0
    %2213 = vmatpush1.bf16.xpose.msra.mxu0 0
    %2214 = vmatprep.subr.bf16.mxu0 0
    %2215 = vmatpush1.bf16.xpose.msra.mxu0 0
    %2216 = vmatprep.subr.bf16.mxu0 0
    %2217 = vmatpush1.bf16.xpose.msra.mxu0 0
    %2218 = vmatprep.subr.bf16.mxu0 0
    %2219 = vmatpush1.bf16.xpose.msra.mxu0 0
    %2220 = vmatprep.subr.bf16.mxu0 0
    %2221 = vmatpush1.bf16.xpose.msra.mxu0 0
    %2222 = vmatprep.subr.bf16.mxu0 0
    %2223 = vmatpush1.bf16.xpose.msra.mxu0 0
    %2224 = vmatprep.subr.bf16.mxu0 0
    %2225 = vmatpush1.bf16.xpose.msra.mxu0 0
    %2226 = vmatprep.subr.bf16.mxu0 0
    %2227 = vmatpush1.bf16.xpose.msra.mxu0 0
    %2228 = vmatprep.subr.bf16.mxu0 0
    %2229 = vmatpush1.bf16.xpose.msra.mxu0 0
    %2230 = vmatprep.subr.bf16.mxu0 0
    %2231 = vmatpush1.bf16.xpose.msra.mxu0 0
    %2232 = vmatprep.subr.bf16.mxu0 0
    %2233 = vmatpush1.bf16.xpose.msra.mxu0 0
    %2234 = vmatprep.subr.bf16.mxu0 0
    %2235 = vmatpush1.bf16.xpose.msra.mxu0 0
    %2236 = vmatprep.subr.bf16.mxu0 0
    %2237 = vmatpush1.bf16.xpose.msra.mxu0 0
    %2238 = vmatprep.mubr.bf16.mxu0 0
    %2239 = vmatmul.mubr.bf16.gmra.mrb[0].mxu0 %v2201
    %v2240 = vpop.f32.mrb[0].mxu0
    %v2241 = vadd.f32 0.0, %v2240
    %v2242 = vpop.f32.mrb[0].mxu0
    %v2243 = vpop.f32.mrb[0].mxu0
    %v2244 = vpop.f32.mrb[0].mxu0
    %2245 = vdwg.mxu0
    %v2246 = vsel %vm396, %v2191, -inf
    %2247 = vmax.xlane.f32.xlu0 %v2246
    %v2248 = vpop.xlane.xlu0 %2247
    %v2249 = vsel %vm396, %v2241, -inf
    %2250 = vmax.xlane.f32.xlu0 %v2249
    %v2251 = vpop.xlane.xlu0 %2250
    %v2252 = vsub.f32 %v2191, %v2248
    %v2253 = vsub.f32 %v2241, %v2251
    %v2254 = vmul.f32 %v2252, 1.442695
    %v2255 = vpow.pop %v2254
    %v2256 = vmul.f32 %v2253, 1.442695
    %v2257 = vpow.pop %v2256
    %v2258 = vsel %vm396, %v2255, 0.0
    %2259 = vadd.xlane.f32.xlu0 %v2258
    %v2260 = vpop.xlane.xlu0 %2259
    %v2261 = vsel %vm396, %v2257, 0.0
    %2262 = vadd.xlane.f32.xlu0 %v2261
    %v2263 = vpop.xlane.xlu0 %2262
    %v2264 = vrcp.pop %v2260
    %v2265 = vrcp.pop %v2263
    %v2266 = vmul.f32 %v2255, %v2264
    %v2267 = vmul.f32 %v2257, %v2265
    %v2268 = vpack.c.bf16 %v2266, %v2266
    %v2269 = vpack.c.bf16 %v2267, %v2267
    %2270 = vrot.lane.b32.xlu0 %v394, 64
    %v2271 = vpop.permute.xlu0 %2270
    %v2273 = vsel %vm396, %v2268, 0
    %v2276 = vsel %vm516, %v2271, 0
    %2278 = vmatprep.subr.bf16.mxu0 0
    %2279 = vmatpush1.bf16.msra.mxu0 %v2276
    %2280 = vmatprep.subr.bf16.mxu0 0
    %2281 = vmatpush1.bf16.msra.mxu0 0
    %2282 = vmatprep.subr.bf16.mxu0 0
    %2283 = vmatpush1.bf16.msra.mxu0 0
    %2284 = vmatprep.subr.bf16.mxu0 0
    %2285 = vmatpush1.bf16.msra.mxu0 0
    %2286 = vmatprep.subr.bf16.mxu0 0
    %2287 = vmatpush1.bf16.msra.mxu0 0
    %2288 = vmatprep.subr.bf16.mxu0 0
    %2289 = vmatpush1.bf16.msra.mxu0 0
    %2290 = vmatprep.subr.bf16.mxu0 0
    %2291 = vmatpush1.bf16.msra.mxu0 0
    %2292 = vmatprep.subr.bf16.mxu0 0
    %2293 = vmatpush1.bf16.msra.mxu0 0
    %2294 = vmatprep.subr.bf16.mxu0 0
    %2295 = vmatpush1.bf16.msra.mxu0 0
    %2296 = vmatprep.subr.bf16.mxu0 0
    %2297 = vmatpush1.bf16.msra.mxu0 0
    %2298 = vmatprep.subr.bf16.mxu0 0
    %2299 = vmatpush1.bf16.msra.mxu0 0
    %2300 = vmatprep.subr.bf16.mxu0 0
    %2301 = vmatpush1.bf16.msra.mxu0 0
    %2302 = vmatprep.subr.bf16.mxu0 0
    %2303 = vmatpush1.bf16.msra.mxu0 0
    %2304 = vmatprep.subr.bf16.mxu0 0
    %2305 = vmatpush1.bf16.msra.mxu0 0
    %2306 = vmatprep.subr.bf16.mxu0 0
    %2307 = vmatpush1.bf16.msra.mxu0 0
    %2308 = vmatprep.subr.bf16.mxu0 0
    %2309 = vmatpush1.bf16.msra.mxu0 0
    %2310 = vmatprep.mubr.bf16.mxu0 0
    %2311 = vmatmul.mubr.bf16.gmra.mrb[0].mxu0 %v2273
    %v2312 = vpop.f32.mrb[0].mxu0
    %v2313 = vadd.f32 0.0, %v2312
    %v2314 = vpop.f32.mrb[0].mxu0
    %v2315 = vpop.f32.mrb[0].mxu0
    %v2316 = vpop.f32.mrb[0].mxu0
    %2317 = vdwg.mxu0
    %2318 = vrot.lane.b32.xlu0 %v395, 64
    %v2319 = vpop.permute.xlu0 %2318
    %v2321 = vsel %vm396, %v2269, 0
    %v2324 = vsel %vm516, %v2319, 0
    %2326 = vmatprep.subr.bf16.mxu0 0
    %2327 = vmatpush1.bf16.msra.mxu0 %v2324
    %2328 = vmatprep.subr.bf16.mxu0 0
    %2329 = vmatpush1.bf16.msra.mxu0 0
    %2330 = vmatprep.subr.bf16.mxu0 0
    %2331 = vmatpush1.bf16.msra.mxu0 0
    %2332 = vmatprep.subr.bf16.mxu0 0
    %2333 = vmatpush1.bf16.msra.mxu0 0
    %2334 = vmatprep.subr.bf16.mxu0 0
    %2335 = vmatpush1.bf16.msra.mxu0 0
    %2336 = vmatprep.subr.bf16.mxu0 0
    %2337 = vmatpush1.bf16.msra.mxu0 0
    %2338 = vmatprep.subr.bf16.mxu0 0
    %2339 = vmatpush1.bf16.msra.mxu0 0
    %2340 = vmatprep.subr.bf16.mxu0 0
    %2341 = vmatpush1.bf16.msra.mxu0 0
    %2342 = vmatprep.subr.bf16.mxu0 0
    %2343 = vmatpush1.bf16.msra.mxu0 0
    %2344 = vmatprep.subr.bf16.mxu0 0
    %2345 = vmatpush1.bf16.msra.mxu0 0
    %2346 = vmatprep.subr.bf16.mxu0 0
    %2347 = vmatpush1.bf16.msra.mxu0 0
    %2348 = vmatprep.subr.bf16.mxu0 0
    %2349 = vmatpush1.bf16.msra.mxu0 0
    %2350 = vmatprep.subr.bf16.mxu0 0
    %2351 = vmatpush1.bf16.msra.mxu0 0
    %2352 = vmatprep.subr.bf16.mxu0 0
    %2353 = vmatpush1.bf16.msra.mxu0 0
    %2354 = vmatprep.subr.bf16.mxu0 0
    %2355 = vmatpush1.bf16.msra.mxu0 0
    %2356 = vmatprep.subr.bf16.mxu0 0
    %2357 = vmatpush1.bf16.msra.mxu0 0
    %2358 = vmatprep.mubr.bf16.mxu0 0
    %2359 = vmatmul.mubr.bf16.gmra.mrb[0].mxu0 %v2321
    %v2360 = vpop.f32.mrb[0].mxu0
    %v2361 = vadd.f32 0.0, %v2360
    %v2362 = vpop.f32.mrb[0].mxu0
    %v2363 = vpop.f32.mrb[0].mxu0
    %v2364 = vpop.f32.mrb[0].mxu0
    %2365 = vdwg.mxu0
    %2366 = vrot.lane.b32.xlu0 %v382, 56
    %v2367 = vpop.permute.xlu0 %2366
    %2368 = vrot.lane.b32.xlu0 %v388, 56
    %v2369 = vpop.permute.xlu0 %2368
    %v2371 = vsel %vm396, %v2367, 0
    %v2374 = vsel %vm396, %v2369, 0
    %2376 = vmatprep.subr.bf16.mxu0 0
    %2377 = vmatpush1.bf16.xpose.msra.mxu0 %v2374
    %2378 = vmatprep.subr.bf16.mxu0 0
    %2379 = vmatpush1.bf16.xpose.msra.mxu0 0
    %2380 = vmatprep.subr.bf16.mxu0 0
    %2381 = vmatpush1.bf16.xpose.msra.mxu0 0
    %2382 = vmatprep.subr.bf16.mxu0 0
    %2383 = vmatpush1.bf16.xpose.msra.mxu0 0
    %2384 = vmatprep.subr.bf16.mxu0 0
    %2385 = vmatpush1.bf16.xpose.msra.mxu0 0
    %2386 = vmatprep.subr.bf16.mxu0 0
    %2387 = vmatpush1.bf16.xpose.msra.mxu0 0
    %2388 = vmatprep.subr.bf16.mxu0 0
    %2389 = vmatpush1.bf16.xpose.msra.mxu0 0
    %2390 = vmatprep.subr.bf16.mxu0 0
    %2391 = vmatpush1.bf16.xpose.msra.mxu0 0
    %2392 = vmatprep.subr.bf16.mxu0 0
    %2393 = vmatpush1.bf16.xpose.msra.mxu0 0
    %2394 = vmatprep.subr.bf16.mxu0 0
    %2395 = vmatpush1.bf16.xpose.msra.mxu0 0
    %2396 = vmatprep.subr.bf16.mxu0 0
    %2397 = vmatpush1.bf16.xpose.msra.mxu0 0
    %2398 = vmatprep.subr.bf16.mxu0 0
    %2399 = vmatpush1.bf16.xpose.msra.mxu0 0
    %2400 = vmatprep.subr.bf16.mxu0 0
    %2401 = vmatpush1.bf16.xpose.msra.mxu0 0
    %2402 = vmatprep.subr.bf16.mxu0 0
    %2403 = vmatpush1.bf16.xpose.msra.mxu0 0
    %2404 = vmatprep.subr.bf16.mxu0 0
    %2405 = vmatpush1.bf16.xpose.msra.mxu0 0
    %2406 = vmatprep.subr.bf16.mxu0 0
    %2407 = vmatpush1.bf16.xpose.msra.mxu0 0
    %2408 = vmatprep.mubr.bf16.mxu0 0
    %2409 = vmatmul.mubr.bf16.gmra.mrb[0].mxu0 %v2371
    %v2410 = vpop.f32.mrb[0].mxu0
    %v2411 = vadd.f32 0.0, %v2410
    %v2412 = vpop.f32.mrb[0].mxu0
    %v2413 = vpop.f32.mrb[0].mxu0
    %v2414 = vpop.f32.mrb[0].mxu0
    %2415 = vdwg.mxu0
    %2416 = vrot.lane.b32.xlu0 %v383, 56
    %v2417 = vpop.permute.xlu0 %2416
    %2418 = vrot.lane.b32.xlu0 %v389, 56
    %v2419 = vpop.permute.xlu0 %2418
    %v2421 = vsel %vm396, %v2417, 0
    %v2424 = vsel %vm396, %v2419, 0
    %2426 = vmatprep.subr.bf16.mxu0 0
    %2427 = vmatpush1.bf16.xpose.msra.mxu0 %v2424
    %2428 = vmatprep.subr.bf16.mxu0 0
    %2429 = vmatpush1.bf16.xpose.msra.mxu0 0
    %2430 = vmatprep.subr.bf16.mxu0 0
    %2431 = vmatpush1.bf16.xpose.msra.mxu0 0
    %2432 = vmatprep.subr.bf16.mxu0 0
    %2433 = vmatpush1.bf16.xpose.msra.mxu0 0
    %2434 = vmatprep.subr.bf16.mxu0 0
    %2435 = vmatpush1.bf16.xpose.msra.mxu0 0
    %2436 = vmatprep.subr.bf16.mxu0 0
    %2437 = vmatpush1.bf16.xpose.msra.mxu0 0
    %2438 = vmatprep.subr.bf16.mxu0 0
    %2439 = vmatpush1.bf16.xpose.msra.mxu0 0
    %2440 = vmatprep.subr.bf16.mxu0 0
    %2441 = vmatpush1.bf16.xpose.msra.mxu0 0
    %2442 = vmatprep.subr.bf16.mxu0 0
    %2443 = vmatpush1.bf16.xpose.msra.mxu0 0
    %2444 = vmatprep.subr.bf16.mxu0 0
    %2445 = vmatpush1.bf16.xpose.msra.mxu0 0
    %2446 = vmatprep.subr.bf16.mxu0 0
    %2447 = vmatpush1.bf16.xpose.msra.mxu0 0
    %2448 = vmatprep.subr.bf16.mxu0 0
    %2449 = vmatpush1.bf16.xpose.msra.mxu0 0
    %2450 = vmatprep.subr.bf16.mxu0 0
    %2451 = vmatpush1.bf16.xpose.msra.mxu0 0
    %2452 = vmatprep.subr.bf16.mxu0 0
    %2453 = vmatpush1.bf16.xpose.msra.mxu0 0
    %2454 = vmatprep.subr.bf16.mxu0 0
    %2455 = vmatpush1.bf16.xpose.msra.mxu0 0
    %2456 = vmatprep.subr.bf16.mxu0 0
    %2457 = vmatpush1.bf16.xpose.msra.mxu0 0
    %2458 = vmatprep.mubr.bf16.mxu0 0
    %2459 = vmatmul.mubr.bf16.gmra.mrb[0].mxu0 %v2421
    %v2460 = vpop.f32.mrb[0].mxu0
    %v2461 = vadd.f32 0.0, %v2460
    %v2462 = vpop.f32.mrb[0].mxu0
    %v2463 = vpop.f32.mrb[0].mxu0
    %v2464 = vpop.f32.mrb[0].mxu0
    %2465 = vdwg.mxu0
    %v2466 = vsel %vm396, %v2411, -inf
    %2467 = vmax.xlane.f32.xlu0 %v2466
    %v2468 = vpop.xlane.xlu0 %2467
    %v2469 = vsel %vm396, %v2461, -inf
    %2470 = vmax.xlane.f32.xlu0 %v2469
    %v2471 = vpop.xlane.xlu0 %2470
    %v2472 = vsub.f32 %v2411, %v2468
    %v2473 = vsub.f32 %v2461, %v2471
    %v2474 = vmul.f32 %v2472, 1.442695
    %v2475 = vpow.pop %v2474
    %v2476 = vmul.f32 %v2473, 1.442695
    %v2477 = vpow.pop %v2476
    %v2478 = vsel %vm396, %v2475, 0.0
    %2479 = vadd.xlane.f32.xlu0 %v2478
    %v2480 = vpop.xlane.xlu0 %2479
    %v2481 = vsel %vm396, %v2477, 0.0
    %2482 = vadd.xlane.f32.xlu0 %v2481
    %v2483 = vpop.xlane.xlu0 %2482
    %v2484 = vrcp.pop %v2480
    %v2485 = vrcp.pop %v2483
    %v2486 = vmul.f32 %v2475, %v2484
    %v2487 = vmul.f32 %v2477, %v2485
    %v2488 = vpack.c.bf16 %v2486, %v2486
    %v2489 = vpack.c.bf16 %v2487, %v2487
    %2490 = vrot.lane.b32.xlu0 %v394, 56
    %v2491 = vpop.permute.xlu0 %2490
    %v2493 = vsel %vm396, %v2488, 0
    %v2496 = vsel %vm516, %v2491, 0
    %2498 = vmatprep.subr.bf16.mxu0 0
    %2499 = vmatpush1.bf16.msra.mxu0 %v2496
    %2500 = vmatprep.subr.bf16.mxu0 0
    %2501 = vmatpush1.bf16.msra.mxu0 0
    %2502 = vmatprep.subr.bf16.mxu0 0
    %2503 = vmatpush1.bf16.msra.mxu0 0
    %2504 = vmatprep.subr.bf16.mxu0 0
    %2505 = vmatpush1.bf16.msra.mxu0 0
    %2506 = vmatprep.subr.bf16.mxu0 0
    %2507 = vmatpush1.bf16.msra.mxu0 0
    %2508 = vmatprep.subr.bf16.mxu0 0
    %2509 = vmatpush1.bf16.msra.mxu0 0
    %2510 = vmatprep.subr.bf16.mxu0 0
    %2511 = vmatpush1.bf16.msra.mxu0 0
    %2512 = vmatprep.subr.bf16.mxu0 0
    %2513 = vmatpush1.bf16.msra.mxu0 0
    %2514 = vmatprep.subr.bf16.mxu0 0
    %2515 = vmatpush1.bf16.msra.mxu0 0
    %2516 = vmatprep.subr.bf16.mxu0 0
    %2517 = vmatpush1.bf16.msra.mxu0 0
    %2518 = vmatprep.subr.bf16.mxu0 0
    %2519 = vmatpush1.bf16.msra.mxu0 0
    %2520 = vmatprep.subr.bf16.mxu0 0
    %2521 = vmatpush1.bf16.msra.mxu0 0
    %2522 = vmatprep.subr.bf16.mxu0 0
    %2523 = vmatpush1.bf16.msra.mxu0 0
    %2524 = vmatprep.subr.bf16.mxu0 0
    %2525 = vmatpush1.bf16.msra.mxu0 0
    %2526 = vmatprep.subr.bf16.mxu0 0
    %2527 = vmatpush1.bf16.msra.mxu0 0
    %2528 = vmatprep.subr.bf16.mxu0 0
    %2529 = vmatpush1.bf16.msra.mxu0 0
    %2530 = vmatprep.mubr.bf16.mxu0 0
    %2531 = vmatmul.mubr.bf16.gmra.mrb[0].mxu0 %v2493
    %v2532 = vpop.f32.mrb[0].mxu0
    %v2533 = vadd.f32 0.0, %v2532
    %v2534 = vpop.f32.mrb[0].mxu0
    %v2535 = vpop.f32.mrb[0].mxu0
    %v2536 = vpop.f32.mrb[0].mxu0
    %2537 = vdwg.mxu0
    %2538 = vrot.lane.b32.xlu0 %v395, 56
    %v2539 = vpop.permute.xlu0 %2538
    %v2541 = vsel %vm396, %v2489, 0
    %v2544 = vsel %vm516, %v2539, 0
    %2546 = vmatprep.subr.bf16.mxu0 0
    %2547 = vmatpush1.bf16.msra.mxu0 %v2544
    %2548 = vmatprep.subr.bf16.mxu0 0
    %2549 = vmatpush1.bf16.msra.mxu0 0
    %2550 = vmatprep.subr.bf16.mxu0 0
    %2551 = vmatpush1.bf16.msra.mxu0 0
    %2552 = vmatprep.subr.bf16.mxu0 0
    %2553 = vmatpush1.bf16.msra.mxu0 0
    %2554 = vmatprep.subr.bf16.mxu0 0
    %2555 = vmatpush1.bf16.msra.mxu0 0
    %2556 = vmatprep.subr.bf16.mxu0 0
    %2557 = vmatpush1.bf16.msra.mxu0 0
    %2558 = vmatprep.subr.bf16.mxu0 0
    %2559 = vmatpush1.bf16.msra.mxu0 0
    %2560 = vmatprep.subr.bf16.mxu0 0
    %2561 = vmatpush1.bf16.msra.mxu0 0
    %2562 = vmatprep.subr.bf16.mxu0 0
    %2563 = vmatpush1.bf16.msra.mxu0 0
    %2564 = vmatprep.subr.bf16.mxu0 0
    %2565 = vmatpush1.bf16.msra.mxu0 0
    %2566 = vmatprep.subr.bf16.mxu0 0
    %2567 = vmatpush1.bf16.msra.mxu0 0
    %2568 = vmatprep.subr.bf16.mxu0 0
    %2569 = vmatpush1.bf16.msra.mxu0 0
    %2570 = vmatprep.subr.bf16.mxu0 0
    %2571 = vmatpush1.bf16.msra.mxu0 0
    %2572 = vmatprep.subr.bf16.mxu0 0
    %2573 = vmatpush1.bf16.msra.mxu0 0
    %2574 = vmatprep.subr.bf16.mxu0 0
    %2575 = vmatpush1.bf16.msra.mxu0 0
    %2576 = vmatprep.subr.bf16.mxu0 0
    %2577 = vmatpush1.bf16.msra.mxu0 0
    %2578 = vmatprep.mubr.bf16.mxu0 0
    %2579 = vmatmul.mubr.bf16.gmra.mrb[0].mxu0 %v2541
    %v2580 = vpop.f32.mrb[0].mxu0
    %v2581 = vadd.f32 0.0, %v2580
    %v2582 = vpop.f32.mrb[0].mxu0
    %v2583 = vpop.f32.mrb[0].mxu0
    %v2584 = vpop.f32.mrb[0].mxu0
    %2585 = vdwg.mxu0
    %2586 = vrot.lane.b32.xlu0 %v382, 48
    %v2587 = vpop.permute.xlu0 %2586
    %2588 = vrot.lane.b32.xlu0 %v388, 48
    %v2589 = vpop.permute.xlu0 %2588
    %v2591 = vsel %vm396, %v2587, 0
    %v2594 = vsel %vm396, %v2589, 0
    %2596 = vmatprep.subr.bf16.mxu0 0
    %2597 = vmatpush1.bf16.xpose.msra.mxu0 %v2594
    %2598 = vmatprep.subr.bf16.mxu0 0
    %2599 = vmatpush1.bf16.xpose.msra.mxu0 0
    %2600 = vmatprep.subr.bf16.mxu0 0
    %2601 = vmatpush1.bf16.xpose.msra.mxu0 0
    %2602 = vmatprep.subr.bf16.mxu0 0
    %2603 = vmatpush1.bf16.xpose.msra.mxu0 0
    %2604 = vmatprep.subr.bf16.mxu0 0
    %2605 = vmatpush1.bf16.xpose.msra.mxu0 0
    %2606 = vmatprep.subr.bf16.mxu0 0
    %2607 = vmatpush1.bf16.xpose.msra.mxu0 0
    %2608 = vmatprep.subr.bf16.mxu0 0
    %2609 = vmatpush1.bf16.xpose.msra.mxu0 0
    %2610 = vmatprep.subr.bf16.mxu0 0
    %2611 = vmatpush1.bf16.xpose.msra.mxu0 0
    %2612 = vmatprep.subr.bf16.mxu0 0
    %2613 = vmatpush1.bf16.xpose.msra.mxu0 0
    %2614 = vmatprep.subr.bf16.mxu0 0
    %2615 = vmatpush1.bf16.xpose.msra.mxu0 0
    %2616 = vmatprep.subr.bf16.mxu0 0
    %2617 = vmatpush1.bf16.xpose.msra.mxu0 0
    %2618 = vmatprep.subr.bf16.mxu0 0
    %2619 = vmatpush1.bf16.xpose.msra.mxu0 0
    %2620 = vmatprep.subr.bf16.mxu0 0
    %2621 = vmatpush1.bf16.xpose.msra.mxu0 0
    %2622 = vmatprep.subr.bf16.mxu0 0
    %2623 = vmatpush1.bf16.xpose.msra.mxu0 0
    %2624 = vmatprep.subr.bf16.mxu0 0
    %2625 = vmatpush1.bf16.xpose.msra.mxu0 0
    %2626 = vmatprep.subr.bf16.mxu0 0
    %2627 = vmatpush1.bf16.xpose.msra.mxu0 0
    %2628 = vmatprep.mubr.bf16.mxu0 0
    %2629 = vmatmul.mubr.bf16.gmra.mrb[0].mxu0 %v2591
    %v2630 = vpop.f32.mrb[0].mxu0
    %v2631 = vadd.f32 0.0, %v2630
    %v2632 = vpop.f32.mrb[0].mxu0
    %v2633 = vpop.f32.mrb[0].mxu0
    %v2634 = vpop.f32.mrb[0].mxu0
    %2635 = vdwg.mxu0
    %2636 = vrot.lane.b32.xlu0 %v383, 48
    %v2637 = vpop.permute.xlu0 %2636
    %2638 = vrot.lane.b32.xlu0 %v389, 48
    %v2639 = vpop.permute.xlu0 %2638
    %v2641 = vsel %vm396, %v2637, 0
    %v2644 = vsel %vm396, %v2639, 0
    %2646 = vmatprep.subr.bf16.mxu0 0
    %2647 = vmatpush1.bf16.xpose.msra.mxu0 %v2644
    %2648 = vmatprep.subr.bf16.mxu0 0
    %2649 = vmatpush1.bf16.xpose.msra.mxu0 0
    %2650 = vmatprep.subr.bf16.mxu0 0
    %2651 = vmatpush1.bf16.xpose.msra.mxu0 0
    %2652 = vmatprep.subr.bf16.mxu0 0
    %2653 = vmatpush1.bf16.xpose.msra.mxu0 0
    %2654 = vmatprep.subr.bf16.mxu0 0
    %2655 = vmatpush1.bf16.xpose.msra.mxu0 0
    %2656 = vmatprep.subr.bf16.mxu0 0
    %2657 = vmatpush1.bf16.xpose.msra.mxu0 0
    %2658 = vmatprep.subr.bf16.mxu0 0
    %2659 = vmatpush1.bf16.xpose.msra.mxu0 0
    %2660 = vmatprep.subr.bf16.mxu0 0
    %2661 = vmatpush1.bf16.xpose.msra.mxu0 0
    %2662 = vmatprep.subr.bf16.mxu0 0
    %2663 = vmatpush1.bf16.xpose.msra.mxu0 0
    %2664 = vmatprep.subr.bf16.mxu0 0
    %2665 = vmatpush1.bf16.xpose.msra.mxu0 0
    %2666 = vmatprep.subr.bf16.mxu0 0
    %2667 = vmatpush1.bf16.xpose.msra.mxu0 0
    %2668 = vmatprep.subr.bf16.mxu0 0
    %2669 = vmatpush1.bf16.xpose.msra.mxu0 0
    %2670 = vmatprep.subr.bf16.mxu0 0
    %2671 = vmatpush1.bf16.xpose.msra.mxu0 0
    %2672 = vmatprep.subr.bf16.mxu0 0
    %2673 = vmatpush1.bf16.xpose.msra.mxu0 0
    %2674 = vmatprep.subr.bf16.mxu0 0
    %2675 = vmatpush1.bf16.xpose.msra.mxu0 0
    %2676 = vmatprep.subr.bf16.mxu0 0
    %2677 = vmatpush1.bf16.xpose.msra.mxu0 0
    %2678 = vmatprep.mubr.bf16.mxu0 0
    %2679 = vmatmul.mubr.bf16.gmra.mrb[0].mxu0 %v2641
    %v2680 = vpop.f32.mrb[0].mxu0
    %v2681 = vadd.f32 0.0, %v2680
    %v2682 = vpop.f32.mrb[0].mxu0
    %v2683 = vpop.f32.mrb[0].mxu0
    %v2684 = vpop.f32.mrb[0].mxu0
    %2685 = vdwg.mxu0
    %v2686 = vsel %vm396, %v2631, -inf
    %2687 = vmax.xlane.f32.xlu0 %v2686
    %v2688 = vpop.xlane.xlu0 %2687
    %v2689 = vsel %vm396, %v2681, -inf
    %2690 = vmax.xlane.f32.xlu0 %v2689
    %v2691 = vpop.xlane.xlu0 %2690
    %v2692 = vsub.f32 %v2631, %v2688
    %v2693 = vsub.f32 %v2681, %v2691
    %v2694 = vmul.f32 %v2692, 1.442695
    %v2695 = vpow.pop %v2694
    %v2696 = vmul.f32 %v2693, 1.442695
    %v2697 = vpow.pop %v2696
    %v2698 = vsel %vm396, %v2695, 0.0
    %2699 = vadd.xlane.f32.xlu0 %v2698
    %v2700 = vpop.xlane.xlu0 %2699
    %v2701 = vsel %vm396, %v2697, 0.0
    %2702 = vadd.xlane.f32.xlu0 %v2701
    %v2703 = vpop.xlane.xlu0 %2702
    %v2704 = vrcp.pop %v2700
    %v2705 = vrcp.pop %v2703
    %v2706 = vmul.f32 %v2695, %v2704
    %v2707 = vmul.f32 %v2697, %v2705
    %v2708 = vpack.c.bf16 %v2706, %v2706
    %v2709 = vpack.c.bf16 %v2707, %v2707
    %2710 = vrot.lane.b32.xlu0 %v394, 48
    %v2711 = vpop.permute.xlu0 %2710
    %v2713 = vsel %vm396, %v2708, 0
    %v2716 = vsel %vm516, %v2711, 0
    %2718 = vmatprep.subr.bf16.mxu0 0
    %2719 = vmatpush1.bf16.msra.mxu0 %v2716
    %2720 = vmatprep.subr.bf16.mxu0 0
    %2721 = vmatpush1.bf16.msra.mxu0 0
    %2722 = vmatprep.subr.bf16.mxu0 0
    %2723 = vmatpush1.bf16.msra.mxu0 0
    %2724 = vmatprep.subr.bf16.mxu0 0
    %2725 = vmatpush1.bf16.msra.mxu0 0
    %2726 = vmatprep.subr.bf16.mxu0 0
    %2727 = vmatpush1.bf16.msra.mxu0 0
    %2728 = vmatprep.subr.bf16.mxu0 0
    %2729 = vmatpush1.bf16.msra.mxu0 0
    %2730 = vmatprep.subr.bf16.mxu0 0
    %2731 = vmatpush1.bf16.msra.mxu0 0
    %2732 = vmatprep.subr.bf16.mxu0 0
    %2733 = vmatpush1.bf16.msra.mxu0 0
    %2734 = vmatprep.subr.bf16.mxu0 0
    %2735 = vmatpush1.bf16.msra.mxu0 0
    %2736 = vmatprep.subr.bf16.mxu0 0
    %2737 = vmatpush1.bf16.msra.mxu0 0
    %2738 = vmatprep.subr.bf16.mxu0 0
    %2739 = vmatpush1.bf16.msra.mxu0 0
    %2740 = vmatprep.subr.bf16.mxu0 0
    %2741 = vmatpush1.bf16.msra.mxu0 0
    %2742 = vmatprep.subr.bf16.mxu0 0
    %2743 = vmatpush1.bf16.msra.mxu0 0
    %2744 = vmatprep.subr.bf16.mxu0 0
    %2745 = vmatpush1.bf16.msra.mxu0 0
    %2746 = vmatprep.subr.bf16.mxu0 0
    %2747 = vmatpush1.bf16.msra.mxu0 0
    %2748 = vmatprep.subr.bf16.mxu0 0
    %2749 = vmatpush1.bf16.msra.mxu0 0
    %2750 = vmatprep.mubr.bf16.mxu0 0
    %2751 = vmatmul.mubr.bf16.gmra.mrb[0].mxu0 %v2713
    %v2752 = vpop.f32.mrb[0].mxu0
    %v2753 = vadd.f32 0.0, %v2752
    %v2754 = vpop.f32.mrb[0].mxu0
    %v2755 = vpop.f32.mrb[0].mxu0
    %v2756 = vpop.f32.mrb[0].mxu0
    %2757 = vdwg.mxu0
    %2758 = vrot.lane.b32.xlu0 %v395, 48
    %v2759 = vpop.permute.xlu0 %2758
    %v2761 = vsel %vm396, %v2709, 0
    %v2764 = vsel %vm516, %v2759, 0
    %2766 = vmatprep.subr.bf16.mxu0 0
    %2767 = vmatpush1.bf16.msra.mxu0 %v2764
    %2768 = vmatprep.subr.bf16.mxu0 0
    %2769 = vmatpush1.bf16.msra.mxu0 0
    %2770 = vmatprep.subr.bf16.mxu0 0
    %2771 = vmatpush1.bf16.msra.mxu0 0
    %2772 = vmatprep.subr.bf16.mxu0 0
    %2773 = vmatpush1.bf16.msra.mxu0 0
    %2774 = vmatprep.subr.bf16.mxu0 0
    %2775 = vmatpush1.bf16.msra.mxu0 0
    %2776 = vmatprep.subr.bf16.mxu0 0
    %2777 = vmatpush1.bf16.msra.mxu0 0
    %2778 = vmatprep.subr.bf16.mxu0 0
    %2779 = vmatpush1.bf16.msra.mxu0 0
    %2780 = vmatprep.subr.bf16.mxu0 0
    %2781 = vmatpush1.bf16.msra.mxu0 0
    %2782 = vmatprep.subr.bf16.mxu0 0
    %2783 = vmatpush1.bf16.msra.mxu0 0
    %2784 = vmatprep.subr.bf16.mxu0 0
    %2785 = vmatpush1.bf16.msra.mxu0 0
    %2786 = vmatprep.subr.bf16.mxu0 0
    %2787 = vmatpush1.bf16.msra.mxu0 0
    %2788 = vmatprep.subr.bf16.mxu0 0
    %2789 = vmatpush1.bf16.msra.mxu0 0
    %2790 = vmatprep.subr.bf16.mxu0 0
    %2791 = vmatpush1.bf16.msra.mxu0 0
    %2792 = vmatprep.subr.bf16.mxu0 0
    %2793 = vmatpush1.bf16.msra.mxu0 0
    %2794 = vmatprep.subr.bf16.mxu0 0
    %2795 = vmatpush1.bf16.msra.mxu0 0
    %2796 = vmatprep.subr.bf16.mxu0 0
    %2797 = vmatpush1.bf16.msra.mxu0 0
    %2798 = vmatprep.mubr.bf16.mxu0 0
    %2799 = vmatmul.mubr.bf16.gmra.mrb[0].mxu0 %v2761
    %v2800 = vpop.f32.mrb[0].mxu0
    %v2801 = vadd.f32 0.0, %v2800
    %v2802 = vpop.f32.mrb[0].mxu0
    %v2803 = vpop.f32.mrb[0].mxu0
    %v2804 = vpop.f32.mrb[0].mxu0
    %2805 = vdwg.mxu0
    %2806 = vrot.lane.b32.xlu0 %v382, 40
    %v2807 = vpop.permute.xlu0 %2806
    %2808 = vrot.lane.b32.xlu0 %v388, 40
    %v2809 = vpop.permute.xlu0 %2808
    %v2811 = vsel %vm396, %v2807, 0
    %v2814 = vsel %vm396, %v2809, 0
    %2816 = vmatprep.subr.bf16.mxu0 0
    %2817 = vmatpush1.bf16.xpose.msra.mxu0 %v2814
    %2818 = vmatprep.subr.bf16.mxu0 0
    %2819 = vmatpush1.bf16.xpose.msra.mxu0 0
    %2820 = vmatprep.subr.bf16.mxu0 0
    %2821 = vmatpush1.bf16.xpose.msra.mxu0 0
    %2822 = vmatprep.subr.bf16.mxu0 0
    %2823 = vmatpush1.bf16.xpose.msra.mxu0 0
    %2824 = vmatprep.subr.bf16.mxu0 0
    %2825 = vmatpush1.bf16.xpose.msra.mxu0 0
    %2826 = vmatprep.subr.bf16.mxu0 0
    %2827 = vmatpush1.bf16.xpose.msra.mxu0 0
    %2828 = vmatprep.subr.bf16.mxu0 0
    %2829 = vmatpush1.bf16.xpose.msra.mxu0 0
    %2830 = vmatprep.subr.bf16.mxu0 0
    %2831 = vmatpush1.bf16.xpose.msra.mxu0 0
    %2832 = vmatprep.subr.bf16.mxu0 0
    %2833 = vmatpush1.bf16.xpose.msra.mxu0 0
    %2834 = vmatprep.subr.bf16.mxu0 0
    %2835 = vmatpush1.bf16.xpose.msra.mxu0 0
    %2836 = vmatprep.subr.bf16.mxu0 0
    %2837 = vmatpush1.bf16.xpose.msra.mxu0 0
    %2838 = vmatprep.subr.bf16.mxu0 0
    %2839 = vmatpush1.bf16.xpose.msra.mxu0 0
    %2840 = vmatprep.subr.bf16.mxu0 0
    %2841 = vmatpush1.bf16.xpose.msra.mxu0 0
    %2842 = vmatprep.subr.bf16.mxu0 0
    %2843 = vmatpush1.bf16.xpose.msra.mxu0 0
    %2844 = vmatprep.subr.bf16.mxu0 0
    %2845 = vmatpush1.bf16.xpose.msra.mxu0 0
    %2846 = vmatprep.subr.bf16.mxu0 0
    %2847 = vmatpush1.bf16.xpose.msra.mxu0 0
    %2848 = vmatprep.mubr.bf16.mxu0 0
    %2849 = vmatmul.mubr.bf16.gmra.mrb[0].mxu0 %v2811
    %v2850 = vpop.f32.mrb[0].mxu0
    %v2851 = vadd.f32 0.0, %v2850
    %v2852 = vpop.f32.mrb[0].mxu0
    %v2853 = vpop.f32.mrb[0].mxu0
    %v2854 = vpop.f32.mrb[0].mxu0
    %2855 = vdwg.mxu0
    %2856 = vrot.lane.b32.xlu0 %v383, 40
    %v2857 = vpop.permute.xlu0 %2856
    %2858 = vrot.lane.b32.xlu0 %v389, 40
    %v2859 = vpop.permute.xlu0 %2858
    %v2861 = vsel %vm396, %v2857, 0
    %v2864 = vsel %vm396, %v2859, 0
    %2866 = vmatprep.subr.bf16.mxu0 0
    %2867 = vmatpush1.bf16.xpose.msra.mxu0 %v2864
    %2868 = vmatprep.subr.bf16.mxu0 0
    %2869 = vmatpush1.bf16.xpose.msra.mxu0 0
    %2870 = vmatprep.subr.bf16.mxu0 0
    %2871 = vmatpush1.bf16.xpose.msra.mxu0 0
    %2872 = vmatprep.subr.bf16.mxu0 0
    %2873 = vmatpush1.bf16.xpose.msra.mxu0 0
    %2874 = vmatprep.subr.bf16.mxu0 0
    %2875 = vmatpush1.bf16.xpose.msra.mxu0 0
    %2876 = vmatprep.subr.bf16.mxu0 0
    %2877 = vmatpush1.bf16.xpose.msra.mxu0 0
    %2878 = vmatprep.subr.bf16.mxu0 0
    %2879 = vmatpush1.bf16.xpose.msra.mxu0 0
    %2880 = vmatprep.subr.bf16.mxu0 0
    %2881 = vmatpush1.bf16.xpose.msra.mxu0 0
    %2882 = vmatprep.subr.bf16.mxu0 0
    %2883 = vmatpush1.bf16.xpose.msra.mxu0 0
    %2884 = vmatprep.subr.bf16.mxu0 0
    %2885 = vmatpush1.bf16.xpose.msra.mxu0 0
    %2886 = vmatprep.subr.bf16.mxu0 0
    %2887 = vmatpush1.bf16.xpose.msra.mxu0 0
    %2888 = vmatprep.subr.bf16.mxu0 0
    %2889 = vmatpush1.bf16.xpose.msra.mxu0 0
    %2890 = vmatprep.subr.bf16.mxu0 0
    %2891 = vmatpush1.bf16.xpose.msra.mxu0 0
    %2892 = vmatprep.subr.bf16.mxu0 0
    %2893 = vmatpush1.bf16.xpose.msra.mxu0 0
    %2894 = vmatprep.subr.bf16.mxu0 0
    %2895 = vmatpush1.bf16.xpose.msra.mxu0 0
    %2896 = vmatprep.subr.bf16.mxu0 0
    %2897 = vmatpush1.bf16.xpose.msra.mxu0 0
    %2898 = vmatprep.mubr.bf16.mxu0 0
    %2899 = vmatmul.mubr.bf16.gmra.mrb[0].mxu0 %v2861
    %v2900 = vpop.f32.mrb[0].mxu0
    %v2901 = vadd.f32 0.0, %v2900
    %v2902 = vpop.f32.mrb[0].mxu0
    %v2903 = vpop.f32.mrb[0].mxu0
    %v2904 = vpop.f32.mrb[0].mxu0
    %2905 = vdwg.mxu0
    %v2906 = vsel %vm396, %v2851, -inf
    %2907 = vmax.xlane.f32.xlu0 %v2906
    %v2908 = vpop.xlane.xlu0 %2907
    %v2909 = vsel %vm396, %v2901, -inf
    %2910 = vmax.xlane.f32.xlu0 %v2909
    %v2911 = vpop.xlane.xlu0 %2910
    %v2912 = vsub.f32 %v2851, %v2908
    %v2913 = vsub.f32 %v2901, %v2911
    %v2914 = vmul.f32 %v2912, 1.442695
    %v2915 = vpow.pop %v2914
    %v2916 = vmul.f32 %v2913, 1.442695
    %v2917 = vpow.pop %v2916
    %v2918 = vsel %vm396, %v2915, 0.0
    %2919 = vadd.xlane.f32.xlu0 %v2918
    %v2920 = vpop.xlane.xlu0 %2919
    %v2921 = vsel %vm396, %v2917, 0.0
    %2922 = vadd.xlane.f32.xlu0 %v2921
    %v2923 = vpop.xlane.xlu0 %2922
    %v2924 = vrcp.pop %v2920
    %v2925 = vrcp.pop %v2923
    %v2926 = vmul.f32 %v2915, %v2924
    %v2927 = vmul.f32 %v2917, %v2925
    %v2928 = vpack.c.bf16 %v2926, %v2926
    %v2929 = vpack.c.bf16 %v2927, %v2927
    %2930 = vrot.lane.b32.xlu0 %v394, 40
    %v2931 = vpop.permute.xlu0 %2930
    %v2933 = vsel %vm396, %v2928, 0
    %v2936 = vsel %vm516, %v2931, 0
    %2938 = vmatprep.subr.bf16.mxu0 0
    %2939 = vmatpush1.bf16.msra.mxu0 %v2936
    %2940 = vmatprep.subr.bf16.mxu0 0
    %2941 = vmatpush1.bf16.msra.mxu0 0
    %2942 = vmatprep.subr.bf16.mxu0 0
    %2943 = vmatpush1.bf16.msra.mxu0 0
    %2944 = vmatprep.subr.bf16.mxu0 0
    %2945 = vmatpush1.bf16.msra.mxu0 0
    %2946 = vmatprep.subr.bf16.mxu0 0
    %2947 = vmatpush1.bf16.msra.mxu0 0
    %2948 = vmatprep.subr.bf16.mxu0 0
    %2949 = vmatpush1.bf16.msra.mxu0 0
    %2950 = vmatprep.subr.bf16.mxu0 0
    %2951 = vmatpush1.bf16.msra.mxu0 0
    %2952 = vmatprep.subr.bf16.mxu0 0
    %2953 = vmatpush1.bf16.msra.mxu0 0
    %2954 = vmatprep.subr.bf16.mxu0 0
    %2955 = vmatpush1.bf16.msra.mxu0 0
    %2956 = vmatprep.subr.bf16.mxu0 0
    %2957 = vmatpush1.bf16.msra.mxu0 0
    %2958 = vmatprep.subr.bf16.mxu0 0
    %2959 = vmatpush1.bf16.msra.mxu0 0
    %2960 = vmatprep.subr.bf16.mxu0 0
    %2961 = vmatpush1.bf16.msra.mxu0 0
    %2962 = vmatprep.subr.bf16.mxu0 0
    %2963 = vmatpush1.bf16.msra.mxu0 0
    %2964 = vmatprep.subr.bf16.mxu0 0
    %2965 = vmatpush1.bf16.msra.mxu0 0
    %2966 = vmatprep.subr.bf16.mxu0 0
    %2967 = vmatpush1.bf16.msra.mxu0 0
    %2968 = vmatprep.subr.bf16.mxu0 0
    %2969 = vmatpush1.bf16.msra.mxu0 0
    %2970 = vmatprep.mubr.bf16.mxu0 0
    %2971 = vmatmul.mubr.bf16.gmra.mrb[0].mxu0 %v2933
    %v2972 = vpop.f32.mrb[0].mxu0
    %v2973 = vadd.f32 0.0, %v2972
    %v2974 = vpop.f32.mrb[0].mxu0
    %v2975 = vpop.f32.mrb[0].mxu0
    %v2976 = vpop.f32.mrb[0].mxu0
    %2977 = vdwg.mxu0
    %2978 = vrot.lane.b32.xlu0 %v395, 40
    %v2979 = vpop.permute.xlu0 %2978
    %v2981 = vsel %vm396, %v2929, 0
    %v2984 = vsel %vm516, %v2979, 0
    %2986 = vmatprep.subr.bf16.mxu0 0
    %2987 = vmatpush1.bf16.msra.mxu0 %v2984
    %2988 = vmatprep.subr.bf16.mxu0 0
    %2989 = vmatpush1.bf16.msra.mxu0 0
    %2990 = vmatprep.subr.bf16.mxu0 0
    %2991 = vmatpush1.bf16.msra.mxu0 0
    %2992 = vmatprep.subr.bf16.mxu0 0
    %2993 = vmatpush1.bf16.msra.mxu0 0
    %2994 = vmatprep.subr.bf16.mxu0 0
    %2995 = vmatpush1.bf16.msra.mxu0 0
    %2996 = vmatprep.subr.bf16.mxu0 0
    %2997 = vmatpush1.bf16.msra.mxu0 0
    %2998 = vmatprep.subr.bf16.mxu0 0
    %2999 = vmatpush1.bf16.msra.mxu0 0
    %3000 = vmatprep.subr.bf16.mxu0 0
    %3001 = vmatpush1.bf16.msra.mxu0 0
    %3002 = vmatprep.subr.bf16.mxu0 0
    %3003 = vmatpush1.bf16.msra.mxu0 0
    %3004 = vmatprep.subr.bf16.mxu0 0
    %3005 = vmatpush1.bf16.msra.mxu0 0
    %3006 = vmatprep.subr.bf16.mxu0 0
    %3007 = vmatpush1.bf16.msra.mxu0 0
    %3008 = vmatprep.subr.bf16.mxu0 0
    %3009 = vmatpush1.bf16.msra.mxu0 0
    %3010 = vmatprep.subr.bf16.mxu0 0
    %3011 = vmatpush1.bf16.msra.mxu0 0
    %3012 = vmatprep.subr.bf16.mxu0 0
    %3013 = vmatpush1.bf16.msra.mxu0 0
    %3014 = vmatprep.subr.bf16.mxu0 0
    %3015 = vmatpush1.bf16.msra.mxu0 0
    %3016 = vmatprep.subr.bf16.mxu0 0
    %3017 = vmatpush1.bf16.msra.mxu0 0
    %3018 = vmatprep.mubr.bf16.mxu0 0
    %3019 = vmatmul.mubr.bf16.gmra.mrb[0].mxu0 %v2981
    %v3020 = vpop.f32.mrb[0].mxu0
    %v3021 = vadd.f32 0.0, %v3020
    %v3022 = vpop.f32.mrb[0].mxu0
    %v3023 = vpop.f32.mrb[0].mxu0
    %v3024 = vpop.f32.mrb[0].mxu0
    %3025 = vdwg.mxu0
    %3026 = vrot.lane.b32.xlu0 %v382, 32
    %v3027 = vpop.permute.xlu0 %3026
    %3028 = vrot.lane.b32.xlu0 %v388, 32
    %v3029 = vpop.permute.xlu0 %3028
    %v3031 = vsel %vm396, %v3027, 0
    %v3034 = vsel %vm396, %v3029, 0
    %3036 = vmatprep.subr.bf16.mxu0 0
    %3037 = vmatpush1.bf16.xpose.msra.mxu0 %v3034
    %3038 = vmatprep.subr.bf16.mxu0 0
    %3039 = vmatpush1.bf16.xpose.msra.mxu0 0
    %3040 = vmatprep.subr.bf16.mxu0 0
    %3041 = vmatpush1.bf16.xpose.msra.mxu0 0
    %3042 = vmatprep.subr.bf16.mxu0 0
    %3043 = vmatpush1.bf16.xpose.msra.mxu0 0
    %3044 = vmatprep.subr.bf16.mxu0 0
    %3045 = vmatpush1.bf16.xpose.msra.mxu0 0
    %3046 = vmatprep.subr.bf16.mxu0 0
    %3047 = vmatpush1.bf16.xpose.msra.mxu0 0
    %3048 = vmatprep.subr.bf16.mxu0 0
    %3049 = vmatpush1.bf16.xpose.msra.mxu0 0
    %3050 = vmatprep.subr.bf16.mxu0 0
    %3051 = vmatpush1.bf16.xpose.msra.mxu0 0
    %3052 = vmatprep.subr.bf16.mxu0 0
    %3053 = vmatpush1.bf16.xpose.msra.mxu0 0
    %3054 = vmatprep.subr.bf16.mxu0 0
    %3055 = vmatpush1.bf16.xpose.msra.mxu0 0
    %3056 = vmatprep.subr.bf16.mxu0 0
    %3057 = vmatpush1.bf16.xpose.msra.mxu0 0
    %3058 = vmatprep.subr.bf16.mxu0 0
    %3059 = vmatpush1.bf16.xpose.msra.mxu0 0
    %3060 = vmatprep.subr.bf16.mxu0 0
    %3061 = vmatpush1.bf16.xpose.msra.mxu0 0
    %3062 = vmatprep.subr.bf16.mxu0 0
    %3063 = vmatpush1.bf16.xpose.msra.mxu0 0
    %3064 = vmatprep.subr.bf16.mxu0 0
    %3065 = vmatpush1.bf16.xpose.msra.mxu0 0
    %3066 = vmatprep.subr.bf16.mxu0 0
    %3067 = vmatpush1.bf16.xpose.msra.mxu0 0
    %3068 = vmatprep.mubr.bf16.mxu0 0
    %3069 = vmatmul.mubr.bf16.gmra.mrb[0].mxu0 %v3031
    %v3070 = vpop.f32.mrb[0].mxu0
    %v3071 = vadd.f32 0.0, %v3070
    %v3072 = vpop.f32.mrb[0].mxu0
    %v3073 = vpop.f32.mrb[0].mxu0
    %v3074 = vpop.f32.mrb[0].mxu0
    %3075 = vdwg.mxu0
    %3076 = vrot.lane.b32.xlu0 %v383, 32
    %v3077 = vpop.permute.xlu0 %3076
    %3078 = vrot.lane.b32.xlu0 %v389, 32
    %v3079 = vpop.permute.xlu0 %3078
    %v3081 = vsel %vm396, %v3077, 0
    %v3084 = vsel %vm396, %v3079, 0
    %3086 = vmatprep.subr.bf16.mxu0 0
    %3087 = vmatpush1.bf16.xpose.msra.mxu0 %v3084
    %3088 = vmatprep.subr.bf16.mxu0 0
    %3089 = vmatpush1.bf16.xpose.msra.mxu0 0
    %3090 = vmatprep.subr.bf16.mxu0 0
    %3091 = vmatpush1.bf16.xpose.msra.mxu0 0
    %3092 = vmatprep.subr.bf16.mxu0 0
    %3093 = vmatpush1.bf16.xpose.msra.mxu0 0
    %3094 = vmatprep.subr.bf16.mxu0 0
    %3095 = vmatpush1.bf16.xpose.msra.mxu0 0
    %3096 = vmatprep.subr.bf16.mxu0 0
    %3097 = vmatpush1.bf16.xpose.msra.mxu0 0
    %3098 = vmatprep.subr.bf16.mxu0 0
    %3099 = vmatpush1.bf16.xpose.msra.mxu0 0
    %3100 = vmatprep.subr.bf16.mxu0 0
    %3101 = vmatpush1.bf16.xpose.msra.mxu0 0
    %3102 = vmatprep.subr.bf16.mxu0 0
    %3103 = vmatpush1.bf16.xpose.msra.mxu0 0
    %3104 = vmatprep.subr.bf16.mxu0 0
    %3105 = vmatpush1.bf16.xpose.msra.mxu0 0
    %3106 = vmatprep.subr.bf16.mxu0 0
    %3107 = vmatpush1.bf16.xpose.msra.mxu0 0
    %3108 = vmatprep.subr.bf16.mxu0 0
    %3109 = vmatpush1.bf16.xpose.msra.mxu0 0
    %3110 = vmatprep.subr.bf16.mxu0 0
    %3111 = vmatpush1.bf16.xpose.msra.mxu0 0
    %3112 = vmatprep.subr.bf16.mxu0 0
    %3113 = vmatpush1.bf16.xpose.msra.mxu0 0
    %3114 = vmatprep.subr.bf16.mxu0 0
    %3115 = vmatpush1.bf16.xpose.msra.mxu0 0
    %3116 = vmatprep.subr.bf16.mxu0 0
    %3117 = vmatpush1.bf16.xpose.msra.mxu0 0
    %3118 = vmatprep.mubr.bf16.mxu0 0
    %3119 = vmatmul.mubr.bf16.gmra.mrb[0].mxu0 %v3081
    %v3120 = vpop.f32.mrb[0].mxu0
    %v3121 = vadd.f32 0.0, %v3120
    %v3122 = vpop.f32.mrb[0].mxu0
    %v3123 = vpop.f32.mrb[0].mxu0
    %v3124 = vpop.f32.mrb[0].mxu0
    %3125 = vdwg.mxu0
    %v3126 = vsel %vm396, %v3071, -inf
    %3127 = vmax.xlane.f32.xlu0 %v3126
    %v3128 = vpop.xlane.xlu0 %3127
    %v3129 = vsel %vm396, %v3121, -inf
    %3130 = vmax.xlane.f32.xlu0 %v3129
    %v3131 = vpop.xlane.xlu0 %3130
    %v3132 = vsub.f32 %v3071, %v3128
    %v3133 = vsub.f32 %v3121, %v3131
    %v3134 = vmul.f32 %v3132, 1.442695
    %v3135 = vpow.pop %v3134
    %v3136 = vmul.f32 %v3133, 1.442695
    %v3137 = vpow.pop %v3136
    %v3138 = vsel %vm396, %v3135, 0.0
    %3139 = vadd.xlane.f32.xlu0 %v3138
    %v3140 = vpop.xlane.xlu0 %3139
    %v3141 = vsel %vm396, %v3137, 0.0
    %3142 = vadd.xlane.f32.xlu0 %v3141
    %v3143 = vpop.xlane.xlu0 %3142
    %v3144 = vrcp.pop %v3140
    %v3145 = vrcp.pop %v3143
    %v3146 = vmul.f32 %v3135, %v3144
    %v3147 = vmul.f32 %v3137, %v3145
    %v3148 = vpack.c.bf16 %v3146, %v3146
    %v3149 = vpack.c.bf16 %v3147, %v3147
    %3150 = vrot.lane.b32.xlu0 %v394, 32
    %v3151 = vpop.permute.xlu0 %3150
    %v3153 = vsel %vm396, %v3148, 0
    %v3156 = vsel %vm516, %v3151, 0
    %3158 = vmatprep.subr.bf16.mxu0 0
    %3159 = vmatpush1.bf16.msra.mxu0 %v3156
    %3160 = vmatprep.subr.bf16.mxu0 0
    %3161 = vmatpush1.bf16.msra.mxu0 0
    %3162 = vmatprep.subr.bf16.mxu0 0
    %3163 = vmatpush1.bf16.msra.mxu0 0
    %3164 = vmatprep.subr.bf16.mxu0 0
    %3165 = vmatpush1.bf16.msra.mxu0 0
    %3166 = vmatprep.subr.bf16.mxu0 0
    %3167 = vmatpush1.bf16.msra.mxu0 0
    %3168 = vmatprep.subr.bf16.mxu0 0
    %3169 = vmatpush1.bf16.msra.mxu0 0
    %3170 = vmatprep.subr.bf16.mxu0 0
    %3171 = vmatpush1.bf16.msra.mxu0 0
    %3172 = vmatprep.subr.bf16.mxu0 0
    %3173 = vmatpush1.bf16.msra.mxu0 0
    %3174 = vmatprep.subr.bf16.mxu0 0
    %3175 = vmatpush1.bf16.msra.mxu0 0
    %3176 = vmatprep.subr.bf16.mxu0 0
    %3177 = vmatpush1.bf16.msra.mxu0 0
    %3178 = vmatprep.subr.bf16.mxu0 0
    %3179 = vmatpush1.bf16.msra.mxu0 0
    %3180 = vmatprep.subr.bf16.mxu0 0
    %3181 = vmatpush1.bf16.msra.mxu0 0
    %3182 = vmatprep.subr.bf16.mxu0 0
    %3183 = vmatpush1.bf16.msra.mxu0 0
    %3184 = vmatprep.subr.bf16.mxu0 0
    %3185 = vmatpush1.bf16.msra.mxu0 0
    %3186 = vmatprep.subr.bf16.mxu0 0
    %3187 = vmatpush1.bf16.msra.mxu0 0
    %3188 = vmatprep.subr.bf16.mxu0 0
    %3189 = vmatpush1.bf16.msra.mxu0 0
    %3190 = vmatprep.mubr.bf16.mxu0 0
    %3191 = vmatmul.mubr.bf16.gmra.mrb[0].mxu0 %v3153
    %v3192 = vpop.f32.mrb[0].mxu0
    %v3193 = vadd.f32 0.0, %v3192
    %v3194 = vpop.f32.mrb[0].mxu0
    %v3195 = vpop.f32.mrb[0].mxu0
    %v3196 = vpop.f32.mrb[0].mxu0
    %3197 = vdwg.mxu0
    %3198 = vrot.lane.b32.xlu0 %v395, 32
    %v3199 = vpop.permute.xlu0 %3198
    %v3201 = vsel %vm396, %v3149, 0
    %v3204 = vsel %vm516, %v3199, 0
    %3206 = vmatprep.subr.bf16.mxu0 0
    %3207 = vmatpush1.bf16.msra.mxu0 %v3204
    %3208 = vmatprep.subr.bf16.mxu0 0
    %3209 = vmatpush1.bf16.msra.mxu0 0
    %3210 = vmatprep.subr.bf16.mxu0 0
    %3211 = vmatpush1.bf16.msra.mxu0 0
    %3212 = vmatprep.subr.bf16.mxu0 0
    %3213 = vmatpush1.bf16.msra.mxu0 0
    %3214 = vmatprep.subr.bf16.mxu0 0
    %3215 = vmatpush1.bf16.msra.mxu0 0
    %3216 = vmatprep.subr.bf16.mxu0 0
    %3217 = vmatpush1.bf16.msra.mxu0 0
    %3218 = vmatprep.subr.bf16.mxu0 0
    %3219 = vmatpush1.bf16.msra.mxu0 0
    %3220 = vmatprep.subr.bf16.mxu0 0
    %3221 = vmatpush1.bf16.msra.mxu0 0
    %3222 = vmatprep.subr.bf16.mxu0 0
    %3223 = vmatpush1.bf16.msra.mxu0 0
    %3224 = vmatprep.subr.bf16.mxu0 0
    %3225 = vmatpush1.bf16.msra.mxu0 0
    %3226 = vmatprep.subr.bf16.mxu0 0
    %3227 = vmatpush1.bf16.msra.mxu0 0
    %3228 = vmatprep.subr.bf16.mxu0 0
    %3229 = vmatpush1.bf16.msra.mxu0 0
    %3230 = vmatprep.subr.bf16.mxu0 0
    %3231 = vmatpush1.bf16.msra.mxu0 0
    %3232 = vmatprep.subr.bf16.mxu0 0
    %3233 = vmatpush1.bf16.msra.mxu0 0
    %3234 = vmatprep.subr.bf16.mxu0 0
    %3235 = vmatpush1.bf16.msra.mxu0 0
    %3236 = vmatprep.subr.bf16.mxu0 0
    %3237 = vmatpush1.bf16.msra.mxu0 0
    %3238 = vmatprep.mubr.bf16.mxu0 0
    %3239 = vmatmul.mubr.bf16.gmra.mrb[0].mxu0 %v3201
    %v3240 = vpop.f32.mrb[0].mxu0
    %v3241 = vadd.f32 0.0, %v3240
    %v3242 = vpop.f32.mrb[0].mxu0
    %v3243 = vpop.f32.mrb[0].mxu0
    %v3244 = vpop.f32.mrb[0].mxu0
    %3245 = vdwg.mxu0
    %3246 = vrot.lane.b32.xlu0 %v382, 24
    %v3247 = vpop.permute.xlu0 %3246
    %3248 = vrot.lane.b32.xlu0 %v388, 24
    %v3249 = vpop.permute.xlu0 %3248
    %v3251 = vsel %vm396, %v3247, 0
    %v3254 = vsel %vm396, %v3249, 0
    %3256 = vmatprep.subr.bf16.mxu0 0
    %3257 = vmatpush1.bf16.xpose.msra.mxu0 %v3254
    %3258 = vmatprep.subr.bf16.mxu0 0
    %3259 = vmatpush1.bf16.xpose.msra.mxu0 0
    %3260 = vmatprep.subr.bf16.mxu0 0
    %3261 = vmatpush1.bf16.xpose.msra.mxu0 0
    %3262 = vmatprep.subr.bf16.mxu0 0
    %3263 = vmatpush1.bf16.xpose.msra.mxu0 0
    %3264 = vmatprep.subr.bf16.mxu0 0
    %3265 = vmatpush1.bf16.xpose.msra.mxu0 0
    %3266 = vmatprep.subr.bf16.mxu0 0
    %3267 = vmatpush1.bf16.xpose.msra.mxu0 0
    %3268 = vmatprep.subr.bf16.mxu0 0
    %3269 = vmatpush1.bf16.xpose.msra.mxu0 0
    %3270 = vmatprep.subr.bf16.mxu0 0
    %3271 = vmatpush1.bf16.xpose.msra.mxu0 0
    %3272 = vmatprep.subr.bf16.mxu0 0
    %3273 = vmatpush1.bf16.xpose.msra.mxu0 0
    %3274 = vmatprep.subr.bf16.mxu0 0
    %3275 = vmatpush1.bf16.xpose.msra.mxu0 0
    %3276 = vmatprep.subr.bf16.mxu0 0
    %3277 = vmatpush1.bf16.xpose.msra.mxu0 0
    %3278 = vmatprep.subr.bf16.mxu0 0
    %3279 = vmatpush1.bf16.xpose.msra.mxu0 0
    %3280 = vmatprep.subr.bf16.mxu0 0
    %3281 = vmatpush1.bf16.xpose.msra.mxu0 0
    %3282 = vmatprep.subr.bf16.mxu0 0
    %3283 = vmatpush1.bf16.xpose.msra.mxu0 0
    %3284 = vmatprep.subr.bf16.mxu0 0
    %3285 = vmatpush1.bf16.xpose.msra.mxu0 0
    %3286 = vmatprep.subr.bf16.mxu0 0
    %3287 = vmatpush1.bf16.xpose.msra.mxu0 0
    %3288 = vmatprep.mubr.bf16.mxu0 0
    %3289 = vmatmul.mubr.bf16.gmra.mrb[0].mxu0 %v3251
    %v3290 = vpop.f32.mrb[0].mxu0
    %v3291 = vadd.f32 0.0, %v3290
    %v3292 = vpop.f32.mrb[0].mxu0
    %v3293 = vpop.f32.mrb[0].mxu0
    %v3294 = vpop.f32.mrb[0].mxu0
    %3295 = vdwg.mxu0
    %3296 = vrot.lane.b32.xlu0 %v383, 24
    %v3297 = vpop.permute.xlu0 %3296
    %3298 = vrot.lane.b32.xlu0 %v389, 24
    %v3299 = vpop.permute.xlu0 %3298
    %v3301 = vsel %vm396, %v3297, 0
    %v3304 = vsel %vm396, %v3299, 0
    %3306 = vmatprep.subr.bf16.mxu0 0
    %3307 = vmatpush1.bf16.xpose.msra.mxu0 %v3304
    %3308 = vmatprep.subr.bf16.mxu0 0
    %3309 = vmatpush1.bf16.xpose.msra.mxu0 0
    %3310 = vmatprep.subr.bf16.mxu0 0
    %3311 = vmatpush1.bf16.xpose.msra.mxu0 0
    %3312 = vmatprep.subr.bf16.mxu0 0
    %3313 = vmatpush1.bf16.xpose.msra.mxu0 0
    %3314 = vmatprep.subr.bf16.mxu0 0
    %3315 = vmatpush1.bf16.xpose.msra.mxu0 0
    %3316 = vmatprep.subr.bf16.mxu0 0
    %3317 = vmatpush1.bf16.xpose.msra.mxu0 0
    %3318 = vmatprep.subr.bf16.mxu0 0
    %3319 = vmatpush1.bf16.xpose.msra.mxu0 0
    %3320 = vmatprep.subr.bf16.mxu0 0
    %3321 = vmatpush1.bf16.xpose.msra.mxu0 0
    %3322 = vmatprep.subr.bf16.mxu0 0
    %3323 = vmatpush1.bf16.xpose.msra.mxu0 0
    %3324 = vmatprep.subr.bf16.mxu0 0
    %3325 = vmatpush1.bf16.xpose.msra.mxu0 0
    %3326 = vmatprep.subr.bf16.mxu0 0
    %3327 = vmatpush1.bf16.xpose.msra.mxu0 0
    %3328 = vmatprep.subr.bf16.mxu0 0
    %3329 = vmatpush1.bf16.xpose.msra.mxu0 0
    %3330 = vmatprep.subr.bf16.mxu0 0
    %3331 = vmatpush1.bf16.xpose.msra.mxu0 0
    %3332 = vmatprep.subr.bf16.mxu0 0
    %3333 = vmatpush1.bf16.xpose.msra.mxu0 0
    %3334 = vmatprep.subr.bf16.mxu0 0
    %3335 = vmatpush1.bf16.xpose.msra.mxu0 0
    %3336 = vmatprep.subr.bf16.mxu0 0
    %3337 = vmatpush1.bf16.xpose.msra.mxu0 0
    %3338 = vmatprep.mubr.bf16.mxu0 0
    %3339 = vmatmul.mubr.bf16.gmra.mrb[0].mxu0 %v3301
    %v3340 = vpop.f32.mrb[0].mxu0
    %v3341 = vadd.f32 0.0, %v3340
    %v3342 = vpop.f32.mrb[0].mxu0
    %v3343 = vpop.f32.mrb[0].mxu0
    %v3344 = vpop.f32.mrb[0].mxu0
    %3345 = vdwg.mxu0
    %v3346 = vsel %vm396, %v3291, -inf
    %3347 = vmax.xlane.f32.xlu0 %v3346
    %v3348 = vpop.xlane.xlu0 %3347
    %v3349 = vsel %vm396, %v3341, -inf
    %3350 = vmax.xlane.f32.xlu0 %v3349
    %v3351 = vpop.xlane.xlu0 %3350
    %v3352 = vsub.f32 %v3291, %v3348
    %v3353 = vsub.f32 %v3341, %v3351
    %v3354 = vmul.f32 %v3352, 1.442695
    %v3355 = vpow.pop %v3354
    %v3356 = vmul.f32 %v3353, 1.442695
    %v3357 = vpow.pop %v3356
    %v3358 = vsel %vm396, %v3355, 0.0
    %3359 = vadd.xlane.f32.xlu0 %v3358
    %v3360 = vpop.xlane.xlu0 %3359
    %v3361 = vsel %vm396, %v3357, 0.0
    %3362 = vadd.xlane.f32.xlu0 %v3361
    %v3363 = vpop.xlane.xlu0 %3362
    %v3364 = vrcp.pop %v3360
    %v3365 = vrcp.pop %v3363
    %v3366 = vmul.f32 %v3355, %v3364
    %v3367 = vmul.f32 %v3357, %v3365
    %v3368 = vpack.c.bf16 %v3366, %v3366
    %v3369 = vpack.c.bf16 %v3367, %v3367
    %3370 = vrot.lane.b32.xlu0 %v394, 24
    %v3371 = vpop.permute.xlu0 %3370
    %v3373 = vsel %vm396, %v3368, 0
    %v3376 = vsel %vm516, %v3371, 0
    %3378 = vmatprep.subr.bf16.mxu0 0
    %3379 = vmatpush1.bf16.msra.mxu0 %v3376
    %3380 = vmatprep.subr.bf16.mxu0 0
    %3381 = vmatpush1.bf16.msra.mxu0 0
    %3382 = vmatprep.subr.bf16.mxu0 0
    %3383 = vmatpush1.bf16.msra.mxu0 0
    %3384 = vmatprep.subr.bf16.mxu0 0
    %3385 = vmatpush1.bf16.msra.mxu0 0
    %3386 = vmatprep.subr.bf16.mxu0 0
    %3387 = vmatpush1.bf16.msra.mxu0 0
    %3388 = vmatprep.subr.bf16.mxu0 0
    %3389 = vmatpush1.bf16.msra.mxu0 0
    %3390 = vmatprep.subr.bf16.mxu0 0
    %3391 = vmatpush1.bf16.msra.mxu0 0
    %3392 = vmatprep.subr.bf16.mxu0 0
    %3393 = vmatpush1.bf16.msra.mxu0 0
    %3394 = vmatprep.subr.bf16.mxu0 0
    %3395 = vmatpush1.bf16.msra.mxu0 0
    %3396 = vmatprep.subr.bf16.mxu0 0
    %3397 = vmatpush1.bf16.msra.mxu0 0
    %3398 = vmatprep.subr.bf16.mxu0 0
    %3399 = vmatpush1.bf16.msra.mxu0 0
    %3400 = vmatprep.subr.bf16.mxu0 0
    %3401 = vmatpush1.bf16.msra.mxu0 0
    %3402 = vmatprep.subr.bf16.mxu0 0
    %3403 = vmatpush1.bf16.msra.mxu0 0
    %3404 = vmatprep.subr.bf16.mxu0 0
    %3405 = vmatpush1.bf16.msra.mxu0 0
    %3406 = vmatprep.subr.bf16.mxu0 0
    %3407 = vmatpush1.bf16.msra.mxu0 0
    %3408 = vmatprep.subr.bf16.mxu0 0
    %3409 = vmatpush1.bf16.msra.mxu0 0
    %3410 = vmatprep.mubr.bf16.mxu0 0
    %3411 = vmatmul.mubr.bf16.gmra.mrb[0].mxu0 %v3373
    %v3412 = vpop.f32.mrb[0].mxu0
    %v3413 = vadd.f32 0.0, %v3412
    %v3414 = vpop.f32.mrb[0].mxu0
    %v3415 = vpop.f32.mrb[0].mxu0
    %v3416 = vpop.f32.mrb[0].mxu0
    %3417 = vdwg.mxu0
    %3418 = vrot.lane.b32.xlu0 %v395, 24
    %v3419 = vpop.permute.xlu0 %3418
    %v3421 = vsel %vm396, %v3369, 0
    %v3424 = vsel %vm516, %v3419, 0
    %3426 = vmatprep.subr.bf16.mxu0 0
    %3427 = vmatpush1.bf16.msra.mxu0 %v3424
    %3428 = vmatprep.subr.bf16.mxu0 0
    %3429 = vmatpush1.bf16.msra.mxu0 0
    %3430 = vmatprep.subr.bf16.mxu0 0
    %3431 = vmatpush1.bf16.msra.mxu0 0
    %3432 = vmatprep.subr.bf16.mxu0 0
    %3433 = vmatpush1.bf16.msra.mxu0 0
    %3434 = vmatprep.subr.bf16.mxu0 0
    %3435 = vmatpush1.bf16.msra.mxu0 0
    %3436 = vmatprep.subr.bf16.mxu0 0
    %3437 = vmatpush1.bf16.msra.mxu0 0
    %3438 = vmatprep.subr.bf16.mxu0 0
    %3439 = vmatpush1.bf16.msra.mxu0 0
    %3440 = vmatprep.subr.bf16.mxu0 0
    %3441 = vmatpush1.bf16.msra.mxu0 0
    %3442 = vmatprep.subr.bf16.mxu0 0
    %3443 = vmatpush1.bf16.msra.mxu0 0
    %3444 = vmatprep.subr.bf16.mxu0 0
    %3445 = vmatpush1.bf16.msra.mxu0 0
    %3446 = vmatprep.subr.bf16.mxu0 0
    %3447 = vmatpush1.bf16.msra.mxu0 0
    %3448 = vmatprep.subr.bf16.mxu0 0
    %3449 = vmatpush1.bf16.msra.mxu0 0
    %3450 = vmatprep.subr.bf16.mxu0 0
    %3451 = vmatpush1.bf16.msra.mxu0 0
    %3452 = vmatprep.subr.bf16.mxu0 0
    %3453 = vmatpush1.bf16.msra.mxu0 0
    %3454 = vmatprep.subr.bf16.mxu0 0
    %3455 = vmatpush1.bf16.msra.mxu0 0
    %3456 = vmatprep.subr.bf16.mxu0 0
    %3457 = vmatpush1.bf16.msra.mxu0 0
    %3458 = vmatprep.mubr.bf16.mxu0 0
    %3459 = vmatmul.mubr.bf16.gmra.mrb[0].mxu0 %v3421
    %v3460 = vpop.f32.mrb[0].mxu0
    %v3461 = vadd.f32 0.0, %v3460
    %v3462 = vpop.f32.mrb[0].mxu0
    %v3463 = vpop.f32.mrb[0].mxu0
    %v3464 = vpop.f32.mrb[0].mxu0
    %3465 = vdwg.mxu0
    %3466 = vrot.lane.b32.xlu0 %v382, 16
    %v3467 = vpop.permute.xlu0 %3466
    %3468 = vrot.lane.b32.xlu0 %v388, 16
    %v3469 = vpop.permute.xlu0 %3468
    %v3471 = vsel %vm396, %v3467, 0
    %v3474 = vsel %vm396, %v3469, 0
    %3476 = vmatprep.subr.bf16.mxu0 0
    %3477 = vmatpush1.bf16.xpose.msra.mxu0 %v3474
    %3478 = vmatprep.subr.bf16.mxu0 0
    %3479 = vmatpush1.bf16.xpose.msra.mxu0 0
    %3480 = vmatprep.subr.bf16.mxu0 0
    %3481 = vmatpush1.bf16.xpose.msra.mxu0 0
    %3482 = vmatprep.subr.bf16.mxu0 0
    %3483 = vmatpush1.bf16.xpose.msra.mxu0 0
    %3484 = vmatprep.subr.bf16.mxu0 0
    %3485 = vmatpush1.bf16.xpose.msra.mxu0 0
    %3486 = vmatprep.subr.bf16.mxu0 0
    %3487 = vmatpush1.bf16.xpose.msra.mxu0 0
    %3488 = vmatprep.subr.bf16.mxu0 0
    %3489 = vmatpush1.bf16.xpose.msra.mxu0 0
    %3490 = vmatprep.subr.bf16.mxu0 0
    %3491 = vmatpush1.bf16.xpose.msra.mxu0 0
    %3492 = vmatprep.subr.bf16.mxu0 0
    %3493 = vmatpush1.bf16.xpose.msra.mxu0 0
    %3494 = vmatprep.subr.bf16.mxu0 0
    %3495 = vmatpush1.bf16.xpose.msra.mxu0 0
    %3496 = vmatprep.subr.bf16.mxu0 0
    %3497 = vmatpush1.bf16.xpose.msra.mxu0 0
    %3498 = vmatprep.subr.bf16.mxu0 0
    %3499 = vmatpush1.bf16.xpose.msra.mxu0 0
    %3500 = vmatprep.subr.bf16.mxu0 0
    %3501 = vmatpush1.bf16.xpose.msra.mxu0 0
    %3502 = vmatprep.subr.bf16.mxu0 0
    %3503 = vmatpush1.bf16.xpose.msra.mxu0 0
    %3504 = vmatprep.subr.bf16.mxu0 0
    %3505 = vmatpush1.bf16.xpose.msra.mxu0 0
    %3506 = vmatprep.subr.bf16.mxu0 0
    %3507 = vmatpush1.bf16.xpose.msra.mxu0 0
    %3508 = vmatprep.mubr.bf16.mxu0 0
    %3509 = vmatmul.mubr.bf16.gmra.mrb[0].mxu0 %v3471
    %v3510 = vpop.f32.mrb[0].mxu0
    %v3511 = vadd.f32 0.0, %v3510
    %v3512 = vpop.f32.mrb[0].mxu0
    %v3513 = vpop.f32.mrb[0].mxu0
    %v3514 = vpop.f32.mrb[0].mxu0
    %3515 = vdwg.mxu0
    %3516 = vrot.lane.b32.xlu0 %v383, 16
    %v3517 = vpop.permute.xlu0 %3516
    %3518 = vrot.lane.b32.xlu0 %v389, 16
    %v3519 = vpop.permute.xlu0 %3518
    %v3521 = vsel %vm396, %v3517, 0
    %v3524 = vsel %vm396, %v3519, 0
    %3526 = vmatprep.subr.bf16.mxu0 0
    %3527 = vmatpush1.bf16.xpose.msra.mxu0 %v3524
    %3528 = vmatprep.subr.bf16.mxu0 0
    %3529 = vmatpush1.bf16.xpose.msra.mxu0 0
    %3530 = vmatprep.subr.bf16.mxu0 0
    %3531 = vmatpush1.bf16.xpose.msra.mxu0 0
    %3532 = vmatprep.subr.bf16.mxu0 0
    %3533 = vmatpush1.bf16.xpose.msra.mxu0 0
    %3534 = vmatprep.subr.bf16.mxu0 0
    %3535 = vmatpush1.bf16.xpose.msra.mxu0 0
    %3536 = vmatprep.subr.bf16.mxu0 0
    %3537 = vmatpush1.bf16.xpose.msra.mxu0 0
    %3538 = vmatprep.subr.bf16.mxu0 0
    %3539 = vmatpush1.bf16.xpose.msra.mxu0 0
    %3540 = vmatprep.subr.bf16.mxu0 0
    %3541 = vmatpush1.bf16.xpose.msra.mxu0 0
    %3542 = vmatprep.subr.bf16.mxu0 0
    %3543 = vmatpush1.bf16.xpose.msra.mxu0 0
    %3544 = vmatprep.subr.bf16.mxu0 0
    %3545 = vmatpush1.bf16.xpose.msra.mxu0 0
    %3546 = vmatprep.subr.bf16.mxu0 0
    %3547 = vmatpush1.bf16.xpose.msra.mxu0 0
    %3548 = vmatprep.subr.bf16.mxu0 0
    %3549 = vmatpush1.bf16.xpose.msra.mxu0 0
    %3550 = vmatprep.subr.bf16.mxu0 0
    %3551 = vmatpush1.bf16.xpose.msra.mxu0 0
    %3552 = vmatprep.subr.bf16.mxu0 0
    %3553 = vmatpush1.bf16.xpose.msra.mxu0 0
    %3554 = vmatprep.subr.bf16.mxu0 0
    %3555 = vmatpush1.bf16.xpose.msra.mxu0 0
    %3556 = vmatprep.subr.bf16.mxu0 0
    %3557 = vmatpush1.bf16.xpose.msra.mxu0 0
    %3558 = vmatprep.mubr.bf16.mxu0 0
    %3559 = vmatmul.mubr.bf16.gmra.mrb[0].mxu0 %v3521
    %v3560 = vpop.f32.mrb[0].mxu0
    %v3561 = vadd.f32 0.0, %v3560
    %v3562 = vpop.f32.mrb[0].mxu0
    %v3563 = vpop.f32.mrb[0].mxu0
    %v3564 = vpop.f32.mrb[0].mxu0
    %3565 = vdwg.mxu0
    %v3566 = vsel %vm396, %v3511, -inf
    %3567 = vmax.xlane.f32.xlu0 %v3566
    %v3568 = vpop.xlane.xlu0 %3567
    %v3569 = vsel %vm396, %v3561, -inf
    %3570 = vmax.xlane.f32.xlu0 %v3569
    %v3571 = vpop.xlane.xlu0 %3570
    %v3572 = vsub.f32 %v3511, %v3568
    %v3573 = vsub.f32 %v3561, %v3571
    %v3574 = vmul.f32 %v3572, 1.442695
    %v3575 = vpow.pop %v3574
    %v3576 = vmul.f32 %v3573, 1.442695
    %v3577 = vpow.pop %v3576
    %v3578 = vsel %vm396, %v3575, 0.0
    %3579 = vadd.xlane.f32.xlu0 %v3578
    %v3580 = vpop.xlane.xlu0 %3579
    %v3581 = vsel %vm396, %v3577, 0.0
    %3582 = vadd.xlane.f32.xlu0 %v3581
    %v3583 = vpop.xlane.xlu0 %3582
    %v3584 = vrcp.pop %v3580
    %v3585 = vrcp.pop %v3583
    %v3586 = vmul.f32 %v3575, %v3584
    %v3587 = vmul.f32 %v3577, %v3585
    %v3588 = vpack.c.bf16 %v3586, %v3586
    %v3589 = vpack.c.bf16 %v3587, %v3587
    %3590 = vrot.lane.b32.xlu0 %v394, 16
    %v3591 = vpop.permute.xlu0 %3590
    %v3593 = vsel %vm396, %v3588, 0
    %v3596 = vsel %vm516, %v3591, 0
    %3598 = vmatprep.subr.bf16.mxu0 0
    %3599 = vmatpush1.bf16.msra.mxu0 %v3596
    %3600 = vmatprep.subr.bf16.mxu0 0
    %3601 = vmatpush1.bf16.msra.mxu0 0
    %3602 = vmatprep.subr.bf16.mxu0 0
    %3603 = vmatpush1.bf16.msra.mxu0 0
    %3604 = vmatprep.subr.bf16.mxu0 0
    %3605 = vmatpush1.bf16.msra.mxu0 0
    %3606 = vmatprep.subr.bf16.mxu0 0
    %3607 = vmatpush1.bf16.msra.mxu0 0
    %3608 = vmatprep.subr.bf16.mxu0 0
    %3609 = vmatpush1.bf16.msra.mxu0 0
    %3610 = vmatprep.subr.bf16.mxu0 0
    %3611 = vmatpush1.bf16.msra.mxu0 0
    %3612 = vmatprep.subr.bf16.mxu0 0
    %3613 = vmatpush1.bf16.msra.mxu0 0
    %3614 = vmatprep.subr.bf16.mxu0 0
    %3615 = vmatpush1.bf16.msra.mxu0 0
    %3616 = vmatprep.subr.bf16.mxu0 0
    %3617 = vmatpush1.bf16.msra.mxu0 0
    %3618 = vmatprep.subr.bf16.mxu0 0
    %3619 = vmatpush1.bf16.msra.mxu0 0
    %3620 = vmatprep.subr.bf16.mxu0 0
    %3621 = vmatpush1.bf16.msra.mxu0 0
    %3622 = vmatprep.subr.bf16.mxu0 0
    %3623 = vmatpush1.bf16.msra.mxu0 0
    %3624 = vmatprep.subr.bf16.mxu0 0
    %3625 = vmatpush1.bf16.msra.mxu0 0
    %3626 = vmatprep.subr.bf16.mxu0 0
    %3627 = vmatpush1.bf16.msra.mxu0 0
    %3628 = vmatprep.subr.bf16.mxu0 0
    %3629 = vmatpush1.bf16.msra.mxu0 0
    %3630 = vmatprep.mubr.bf16.mxu0 0
    %3631 = vmatmul.mubr.bf16.gmra.mrb[0].mxu0 %v3593
    %v3632 = vpop.f32.mrb[0].mxu0
    %v3633 = vadd.f32 0.0, %v3632
    %v3634 = vpop.f32.mrb[0].mxu0
    %v3635 = vpop.f32.mrb[0].mxu0
    %v3636 = vpop.f32.mrb[0].mxu0
    %3637 = vdwg.mxu0
    %3638 = vrot.lane.b32.xlu0 %v395, 16
    %v3639 = vpop.permute.xlu0 %3638
    %v3641 = vsel %vm396, %v3589, 0
    %v3644 = vsel %vm516, %v3639, 0
    %3646 = vmatprep.subr.bf16.mxu0 0
    %3647 = vmatpush1.bf16.msra.mxu0 %v3644
    %3648 = vmatprep.subr.bf16.mxu0 0
    %3649 = vmatpush1.bf16.msra.mxu0 0
    %3650 = vmatprep.subr.bf16.mxu0 0
    %3651 = vmatpush1.bf16.msra.mxu0 0
    %3652 = vmatprep.subr.bf16.mxu0 0
    %3653 = vmatpush1.bf16.msra.mxu0 0
    %3654 = vmatprep.subr.bf16.mxu0 0
    %3655 = vmatpush1.bf16.msra.mxu0 0
    %3656 = vmatprep.subr.bf16.mxu0 0
    %3657 = vmatpush1.bf16.msra.mxu0 0
    %3658 = vmatprep.subr.bf16.mxu0 0
    %3659 = vmatpush1.bf16.msra.mxu0 0
    %3660 = vmatprep.subr.bf16.mxu0 0
    %3661 = vmatpush1.bf16.msra.mxu0 0
    %3662 = vmatprep.subr.bf16.mxu0 0
    %3663 = vmatpush1.bf16.msra.mxu0 0
    %3664 = vmatprep.subr.bf16.mxu0 0
    %3665 = vmatpush1.bf16.msra.mxu0 0
    %3666 = vmatprep.subr.bf16.mxu0 0
    %3667 = vmatpush1.bf16.msra.mxu0 0
    %3668 = vmatprep.subr.bf16.mxu0 0
    %3669 = vmatpush1.bf16.msra.mxu0 0
    %3670 = vmatprep.subr.bf16.mxu0 0
    %3671 = vmatpush1.bf16.msra.mxu0 0
    %3672 = vmatprep.subr.bf16.mxu0 0
    %3673 = vmatpush1.bf16.msra.mxu0 0
    %3674 = vmatprep.subr.bf16.mxu0 0
    %3675 = vmatpush1.bf16.msra.mxu0 0
    %3676 = vmatprep.subr.bf16.mxu0 0
    %3677 = vmatpush1.bf16.msra.mxu0 0
    %3678 = vmatprep.mubr.bf16.mxu0 0
    %3679 = vmatmul.mubr.bf16.gmra.mrb[0].mxu0 %v3641
    %v3680 = vpop.f32.mrb[0].mxu0
    %v3681 = vadd.f32 0.0, %v3680
    %v3682 = vpop.f32.mrb[0].mxu0
    %v3683 = vpop.f32.mrb[0].mxu0
    %v3684 = vpop.f32.mrb[0].mxu0
    %3685 = vdwg.mxu0
    %3686 = vrot.lane.b32.xlu0 %v382, 8
    %v3687 = vpop.permute.xlu0 %3686
    %3688 = vrot.lane.b32.xlu0 %v388, 8
    %v3689 = vpop.permute.xlu0 %3688
    %v3691 = vsel %vm396, %v3687, 0
    %v3694 = vsel %vm396, %v3689, 0
    %3696 = vmatprep.subr.bf16.mxu0 0
    %3697 = vmatpush1.bf16.xpose.msra.mxu0 %v3694
    %3698 = vmatprep.subr.bf16.mxu0 0
    %3699 = vmatpush1.bf16.xpose.msra.mxu0 0
    %3700 = vmatprep.subr.bf16.mxu0 0
    %3701 = vmatpush1.bf16.xpose.msra.mxu0 0
    %3702 = vmatprep.subr.bf16.mxu0 0
    %3703 = vmatpush1.bf16.xpose.msra.mxu0 0
    %3704 = vmatprep.subr.bf16.mxu0 0
    %3705 = vmatpush1.bf16.xpose.msra.mxu0 0
    %3706 = vmatprep.subr.bf16.mxu0 0
    %3707 = vmatpush1.bf16.xpose.msra.mxu0 0
    %3708 = vmatprep.subr.bf16.mxu0 0
    %3709 = vmatpush1.bf16.xpose.msra.mxu0 0
    %3710 = vmatprep.subr.bf16.mxu0 0
    %3711 = vmatpush1.bf16.xpose.msra.mxu0 0
    %3712 = vmatprep.subr.bf16.mxu0 0
    %3713 = vmatpush1.bf16.xpose.msra.mxu0 0
    %3714 = vmatprep.subr.bf16.mxu0 0
    %3715 = vmatpush1.bf16.xpose.msra.mxu0 0
    %3716 = vmatprep.subr.bf16.mxu0 0
    %3717 = vmatpush1.bf16.xpose.msra.mxu0 0
    %3718 = vmatprep.subr.bf16.mxu0 0
    %3719 = vmatpush1.bf16.xpose.msra.mxu0 0
    %3720 = vmatprep.subr.bf16.mxu0 0
    %3721 = vmatpush1.bf16.xpose.msra.mxu0 0
    %3722 = vmatprep.subr.bf16.mxu0 0
    %3723 = vmatpush1.bf16.xpose.msra.mxu0 0
    %3724 = vmatprep.subr.bf16.mxu0 0
    %3725 = vmatpush1.bf16.xpose.msra.mxu0 0
    %3726 = vmatprep.subr.bf16.mxu0 0
    %3727 = vmatpush1.bf16.xpose.msra.mxu0 0
    %3728 = vmatprep.mubr.bf16.mxu0 0
    %3729 = vmatmul.mubr.bf16.gmra.mrb[0].mxu0 %v3691
    %v3730 = vpop.f32.mrb[0].mxu0
    %v3731 = vadd.f32 0.0, %v3730
    %v3732 = vpop.f32.mrb[0].mxu0
    %v3733 = vpop.f32.mrb[0].mxu0
    %v3734 = vpop.f32.mrb[0].mxu0
    %3735 = vdwg.mxu0
    %3736 = vrot.lane.b32.xlu0 %v383, 8
    %v3737 = vpop.permute.xlu0 %3736
    %3738 = vrot.lane.b32.xlu0 %v389, 8
    %v3739 = vpop.permute.xlu0 %3738
    %v3741 = vsel %vm396, %v3737, 0
    %v3744 = vsel %vm396, %v3739, 0
    %3746 = vmatprep.subr.bf16.mxu0 0
    %3747 = vmatpush1.bf16.xpose.msra.mxu0 %v3744
    %3748 = vmatprep.subr.bf16.mxu0 0
    %3749 = vmatpush1.bf16.xpose.msra.mxu0 0
    %3750 = vmatprep.subr.bf16.mxu0 0
    %3751 = vmatpush1.bf16.xpose.msra.mxu0 0
    %3752 = vmatprep.subr.bf16.mxu0 0
    %3753 = vmatpush1.bf16.xpose.msra.mxu0 0
    %3754 = vmatprep.subr.bf16.mxu0 0
    %3755 = vmatpush1.bf16.xpose.msra.mxu0 0
    %3756 = vmatprep.subr.bf16.mxu0 0
    %3757 = vmatpush1.bf16.xpose.msra.mxu0 0
    %3758 = vmatprep.subr.bf16.mxu0 0
    %3759 = vmatpush1.bf16.xpose.msra.mxu0 0
    %3760 = vmatprep.subr.bf16.mxu0 0
    %3761 = vmatpush1.bf16.xpose.msra.mxu0 0
    %3762 = vmatprep.subr.bf16.mxu0 0
    %3763 = vmatpush1.bf16.xpose.msra.mxu0 0
    %3764 = vmatprep.subr.bf16.mxu0 0
    %3765 = vmatpush1.bf16.xpose.msra.mxu0 0
    %3766 = vmatprep.subr.bf16.mxu0 0
    %3767 = vmatpush1.bf16.xpose.msra.mxu0 0
    %3768 = vmatprep.subr.bf16.mxu0 0
    %3769 = vmatpush1.bf16.xpose.msra.mxu0 0
    %3770 = vmatprep.subr.bf16.mxu0 0
    %3771 = vmatpush1.bf16.xpose.msra.mxu0 0
    %3772 = vmatprep.subr.bf16.mxu0 0
    %3773 = vmatpush1.bf16.xpose.msra.mxu0 0
    %3774 = vmatprep.subr.bf16.mxu0 0
    %3775 = vmatpush1.bf16.xpose.msra.mxu0 0
    %3776 = vmatprep.subr.bf16.mxu0 0
    %3777 = vmatpush1.bf16.xpose.msra.mxu0 0
    %3778 = vmatprep.mubr.bf16.mxu0 0
    %3779 = vmatmul.mubr.bf16.gmra.mrb[0].mxu0 %v3741
    %v3780 = vpop.f32.mrb[0].mxu0
    %v3781 = vadd.f32 0.0, %v3780
    %v3782 = vpop.f32.mrb[0].mxu0
    %v3783 = vpop.f32.mrb[0].mxu0
    %v3784 = vpop.f32.mrb[0].mxu0
    %3785 = vdwg.mxu0
    %v3786 = vsel %vm396, %v3731, -inf
    %3787 = vmax.xlane.f32.xlu0 %v3786
    %v3788 = vpop.xlane.xlu0 %3787
    %v3789 = vsel %vm396, %v3781, -inf
    %3790 = vmax.xlane.f32.xlu0 %v3789
    %v3791 = vpop.xlane.xlu0 %3790
    %v3792 = vsub.f32 %v3731, %v3788
    %v3793 = vsub.f32 %v3781, %v3791
    %v3794 = vmul.f32 %v3792, 1.442695
    %v3795 = vpow.pop %v3794
    %v3796 = vmul.f32 %v3793, 1.442695
    %v3797 = vpow.pop %v3796
    %v3798 = vsel %vm396, %v3795, 0.0
    %3799 = vadd.xlane.f32.xlu0 %v3798
    %v3800 = vpop.xlane.xlu0 %3799
    %v3801 = vsel %vm396, %v3797, 0.0
    %3802 = vadd.xlane.f32.xlu0 %v3801
    %v3803 = vpop.xlane.xlu0 %3802
    %v3804 = vrcp.pop %v3800
    %v3805 = vrcp.pop %v3803
    %v3806 = vmul.f32 %v3795, %v3804
    %v3807 = vmul.f32 %v3797, %v3805
    %v3808 = vpack.c.bf16 %v3806, %v3806
    %v3809 = vpack.c.bf16 %v3807, %v3807
    %3810 = vrot.lane.b32.xlu0 %v394, 8
    %v3811 = vpop.permute.xlu0 %3810
    %v3813 = vsel %vm396, %v3808, 0
    %v3816 = vsel %vm516, %v3811, 0
    %3818 = vmatprep.subr.bf16.mxu0 0
    %3819 = vmatpush1.bf16.msra.mxu0 %v3816
    %3820 = vmatprep.subr.bf16.mxu0 0
    %3821 = vmatpush1.bf16.msra.mxu0 0
    %3822 = vmatprep.subr.bf16.mxu0 0
    %3823 = vmatpush1.bf16.msra.mxu0 0
    %3824 = vmatprep.subr.bf16.mxu0 0
    %3825 = vmatpush1.bf16.msra.mxu0 0
    %3826 = vmatprep.subr.bf16.mxu0 0
    %3827 = vmatpush1.bf16.msra.mxu0 0
    %3828 = vmatprep.subr.bf16.mxu0 0
    %3829 = vmatpush1.bf16.msra.mxu0 0
    %3830 = vmatprep.subr.bf16.mxu0 0
    %3831 = vmatpush1.bf16.msra.mxu0 0
    %3832 = vmatprep.subr.bf16.mxu0 0
    %3833 = vmatpush1.bf16.msra.mxu0 0
    %3834 = vmatprep.subr.bf16.mxu0 0
    %3835 = vmatpush1.bf16.msra.mxu0 0
    %3836 = vmatprep.subr.bf16.mxu0 0
    %3837 = vmatpush1.bf16.msra.mxu0 0
    %3838 = vmatprep.subr.bf16.mxu0 0
    %3839 = vmatpush1.bf16.msra.mxu0 0
    %3840 = vmatprep.subr.bf16.mxu0 0
    %3841 = vmatpush1.bf16.msra.mxu0 0
    %3842 = vmatprep.subr.bf16.mxu0 0
    %3843 = vmatpush1.bf16.msra.mxu0 0
    %3844 = vmatprep.subr.bf16.mxu0 0
    %3845 = vmatpush1.bf16.msra.mxu0 0
    %3846 = vmatprep.subr.bf16.mxu0 0
    %3847 = vmatpush1.bf16.msra.mxu0 0
    %3848 = vmatprep.subr.bf16.mxu0 0
    %3849 = vmatpush1.bf16.msra.mxu0 0
    %3850 = vmatprep.mubr.bf16.mxu0 0
    %3851 = vmatmul.mubr.bf16.gmra.mrb[0].mxu0 %v3813
    %v3852 = vpop.f32.mrb[0].mxu0
    %v3853 = vadd.f32 0.0, %v3852
    %v3854 = vpop.f32.mrb[0].mxu0
    %v3855 = vpop.f32.mrb[0].mxu0
    %v3856 = vpop.f32.mrb[0].mxu0
    %3857 = vdwg.mxu0
    %3858 = vrot.lane.b32.xlu0 %v395, 8
    %v3859 = vpop.permute.xlu0 %3858
    %v3861 = vsel %vm396, %v3809, 0
    %v3864 = vsel %vm516, %v3859, 0
    %3866 = vmatprep.subr.bf16.mxu0 0
    %3867 = vmatpush1.bf16.msra.mxu0 %v3864
    %3868 = vmatprep.subr.bf16.mxu0 0
    %3869 = vmatpush1.bf16.msra.mxu0 0
    %3870 = vmatprep.subr.bf16.mxu0 0
    %3871 = vmatpush1.bf16.msra.mxu0 0
    %3872 = vmatprep.subr.bf16.mxu0 0
    %3873 = vmatpush1.bf16.msra.mxu0 0
    %3874 = vmatprep.subr.bf16.mxu0 0
    %3875 = vmatpush1.bf16.msra.mxu0 0
    %3876 = vmatprep.subr.bf16.mxu0 0
    %3877 = vmatpush1.bf16.msra.mxu0 0
    %3878 = vmatprep.subr.bf16.mxu0 0
    %3879 = vmatpush1.bf16.msra.mxu0 0
    %3880 = vmatprep.subr.bf16.mxu0 0
    %3881 = vmatpush1.bf16.msra.mxu0 0
    %3882 = vmatprep.subr.bf16.mxu0 0
    %3883 = vmatpush1.bf16.msra.mxu0 0
    %3884 = vmatprep.subr.bf16.mxu0 0
    %3885 = vmatpush1.bf16.msra.mxu0 0
    %3886 = vmatprep.subr.bf16.mxu0 0
    %3887 = vmatpush1.bf16.msra.mxu0 0
    %3888 = vmatprep.subr.bf16.mxu0 0
    %3889 = vmatpush1.bf16.msra.mxu0 0
    %3890 = vmatprep.subr.bf16.mxu0 0
    %3891 = vmatpush1.bf16.msra.mxu0 0
    %3892 = vmatprep.subr.bf16.mxu0 0
    %3893 = vmatpush1.bf16.msra.mxu0 0
    %3894 = vmatprep.subr.bf16.mxu0 0
    %3895 = vmatpush1.bf16.msra.mxu0 0
    %3896 = vmatprep.subr.bf16.mxu0 0
    %3897 = vmatpush1.bf16.msra.mxu0 0
    %3898 = vmatprep.mubr.bf16.mxu0 0
    %3899 = vmatmul.mubr.bf16.gmra.mrb[0].mxu0 %v3861
    %v3900 = vpop.f32.mrb[0].mxu0
    %v3901 = vadd.f32 0.0, %v3900
    %v3902 = vpop.f32.mrb[0].mxu0
    %v3903 = vpop.f32.mrb[0].mxu0
    %v3904 = vpop.f32.mrb[0].mxu0
    %3905 = vdwg.mxu0
    %3908 = vrot.lane.b32.xlu0 %v773, 8
    %v3909 = vpop.permute.xlu0 %3908
    %3910 = vrot.lane.b32.xlu0 %v821, 8
    %v3911 = vpop.permute.xlu0 %3910
    %3916 = vrot.lane.b32.xlu0 %v993, 16
    %v3917 = vpop.permute.xlu0 %3916
    %3918 = vrot.lane.b32.xlu0 %v1041, 16
    %v3919 = vpop.permute.xlu0 %3918
    %3924 = vrot.lane.b32.xlu0 %v1213, 24
    %v3925 = vpop.permute.xlu0 %3924
    %3926 = vrot.lane.b32.xlu0 %v1261, 24
    %v3927 = vpop.permute.xlu0 %3926
    %3932 = vrot.lane.b32.xlu0 %v1433, 32
    %v3933 = vpop.permute.xlu0 %3932
    %3934 = vrot.lane.b32.xlu0 %v1481, 32
    %v3935 = vpop.permute.xlu0 %3934
    %3940 = vrot.lane.b32.xlu0 %v1653, 40
    %v3941 = vpop.permute.xlu0 %3940
    %3942 = vrot.lane.b32.xlu0 %v1701, 40
    %v3943 = vpop.permute.xlu0 %3942
    %3948 = vrot.lane.b32.xlu0 %v1873, 48
    %v3949 = vpop.permute.xlu0 %3948
    %3950 = vrot.lane.b32.xlu0 %v1921, 48
    %v3951 = vpop.permute.xlu0 %3950
    %3956 = vrot.lane.b32.xlu0 %v2093, 56
    %v3957 = vpop.permute.xlu0 %3956
    %3958 = vrot.lane.b32.xlu0 %v2141, 56
    %v3959 = vpop.permute.xlu0 %3958
    %3964 = vrot.lane.b32.xlu0 %v2313, 64
    %v3965 = vpop.permute.xlu0 %3964
    %3966 = vrot.lane.b32.xlu0 %v2361, 64
    %v3967 = vpop.permute.xlu0 %3966
    %3972 = vrot.lane.b32.xlu0 %v2533, 72
    %v3973 = vpop.permute.xlu0 %3972
    %3974 = vrot.lane.b32.xlu0 %v2581, 72
    %v3975 = vpop.permute.xlu0 %3974
    %3980 = vrot.lane.b32.xlu0 %v2753, 80
    %v3981 = vpop.permute.xlu0 %3980
    %3982 = vrot.lane.b32.xlu0 %v2801, 80
    %v3983 = vpop.permute.xlu0 %3982
    %3988 = vrot.lane.b32.xlu0 %v2973, 88
    %v3989 = vpop.permute.xlu0 %3988
    %3990 = vrot.lane.b32.xlu0 %v3021, 88
    %v3991 = vpop.permute.xlu0 %3990
    %3996 = vrot.lane.b32.xlu0 %v3193, 96
    %v3997 = vpop.permute.xlu0 %3996
    %3998 = vrot.lane.b32.xlu0 %v3241, 96
    %v3999 = vpop.permute.xlu0 %3998
    %4004 = vrot.lane.b32.xlu0 %v3413, 104
    %v4005 = vpop.permute.xlu0 %4004
    %4006 = vrot.lane.b32.xlu0 %v3461, 104
    %v4007 = vpop.permute.xlu0 %4006
    %4012 = vrot.lane.b32.xlu0 %v3633, 112
    %v4013 = vpop.permute.xlu0 %4012
    %4014 = vrot.lane.b32.xlu0 %v3681, 112
    %v4015 = vpop.permute.xlu0 %4014
    %4020 = vrot.lane.b32.xlu0 %v3853, 120
    %v4021 = vpop.permute.xlu0 %4020
    %4022 = vrot.lane.b32.xlu0 %v3901, 120
    %v4023 = vpop.permute.xlu0 %4022
    %v4026 = vsel %vm396, %v555, %v3909
    %v4027 = vsel %vm396, %v601, %v3911
    %vm4028 = vcmask 130048
    %v4029 = vsel %vm4028, %v4026, %v3917
    %v4030 = vsel %vm4028, %v4027, %v3919
    %vm4031 = vcmask 195584
    %v4032 = vsel %vm4031, %v4029, %v3925
    %v4033 = vsel %vm4031, %v4030, %v3927
    %vm4034 = vcmask 261120
    %v4035 = vsel %vm4034, %v4032, %v3933
    %v4036 = vsel %vm4034, %v4033, %v3935
    %vm4037 = vcmask 326656
    %v4038 = vsel %vm4037, %v4035, %v3941
    %v4039 = vsel %vm4037, %v4036, %v3943
    %vm4040 = vcmask 392192
    %v4041 = vsel %vm4040, %v4038, %v3949
    %v4042 = vsel %vm4040, %v4039, %v3951
    %vm4043 = vcmask 457728
    %v4044 = vsel %vm4043, %v4041, %v3957
    %v4045 = vsel %vm4043, %v4042, %v3959
    %vm4046 = vcmask 523264
    %v4047 = vsel %vm4046, %v4044, %v3965
    %v4048 = vsel %vm4046, %v4045, %v3967
    %vm4049 = vcmask 588800
    %v4050 = vsel %vm4049, %v4047, %v3973
    %v4051 = vsel %vm4049, %v4048, %v3975
    %vm4052 = vcmask 654336
    %v4053 = vsel %vm4052, %v4050, %v3981
    %v4054 = vsel %vm4052, %v4051, %v3983
    %vm4055 = vcmask 719872
    %v4056 = vsel %vm4055, %v4053, %v3989
    %v4057 = vsel %vm4055, %v4054, %v3991
    %vm4058 = vcmask 785408
    %v4059 = vsel %vm4058, %v4056, %v3997
    %v4060 = vsel %vm4058, %v4057, %v3999
    %vm4061 = vcmask 850944
    %v4062 = vsel %vm4061, %v4059, %v4005
    %v4063 = vsel %vm4061, %v4060, %v4007
    %vm4064 = vcmask 916480
    %v4065 = vsel %vm4064, %v4062, %v4013
    %v4066 = vsel %vm4064, %v4063, %v4015
    %vm4067 = vcmask 982016
    %v4068 = vsel %vm4067, %v4065, %v4021
    %v4069 = vsel %vm4067, %v4066, %v4023
    %v4070 = vpack.c.bf16 %v4069, %v4068
    %v4071 = vld [vmem:[#allocation7] sm:$0xf]
    %v4072 = vld [vmem:[#allocation7 + $0x4] sm:$0xf]
    %v4073 = vld [vmem:[#allocation7 + $0x8] sm:$0xf]
    %v4074 = vld [vmem:[#allocation7 + $0xc] sm:$0xf]
    %v4075 = vld [vmem:[#allocation7 + $0x10] sm:$0xf]
    %v4076 = vld [vmem:[#allocation7 + $0x14] sm:$0xf]
    %v4077 = vld [vmem:[#allocation7 + $0x18] sm:$0xf]
    %v4078 = vld [vmem:[#allocation7 + $0x1c] sm:$0xf]
    %v4079 = vld [vmem:[#allocation7 + $0x20] sm:$0xf]
    %v4080 = vld [vmem:[#allocation7 + $0x24] sm:$0xf]
    %v4081 = vld [vmem:[#allocation7 + $0x28] sm:$0xf]
    %v4082 = vld [vmem:[#allocation7 + $0x2c] sm:$0xf]
    %v4083 = vld [vmem:[#allocation7 + $0x30] sm:$0xf]
    %v4084 = vld [vmem:[#allocation7 + $0x34] sm:$0xf]
    %v4085 = vld [vmem:[#allocation7 + $0x38] sm:$0xf]
    %v4086 = vld [vmem:[#allocation7 + $0x3c] sm:$0xf]
    %v4087 = vld [vmem:[%s4] sm:$0x1]
    %v4089 = vlaneseq
    %v4090 = vshrl.u32 %v4089, 7
    %v4091 = vsub.s32 0, %v4090
    %v4092 = vrot.slane %v4087, %v4091
    %v4110 = vunpack.c.l.b16 %v4071
    %v4111 = vunpack.c.l.b16 %v4072
    %v4112 = vunpack.c.l.b16 %v4073
    %v4113 = vunpack.c.l.b16 %v4074
    %v4114 = vunpack.c.l.b16 %v4075
    %v4115 = vunpack.c.l.b16 %v4076
    %v4116 = vunpack.c.l.b16 %v4077
    %v4117 = vunpack.c.l.b16 %v4078
    %v4118 = vunpack.c.l.b16 %v4079
    %v4119 = vunpack.c.l.b16 %v4080
    %v4120 = vunpack.c.l.b16 %v4081
    %v4121 = vunpack.c.l.b16 %v4082
    %v4122 = vunpack.c.l.b16 %v4083
    %v4123 = vunpack.c.l.b16 %v4084
    %v4124 = vunpack.c.l.b16 %v4085
    %v4125 = vunpack.c.l.b16 %v4086
    %v4126 = vpack.c.b16 %v4111, %v4110
    %v4127 = vpack.c.b16 %v4113, %v4112
    %v4128 = vpack.c.b16 %v4115, %v4114
    %v4129 = vpack.c.b16 %v4117, %v4116
    %v4130 = vpack.c.b16 %v4119, %v4118
    %v4131 = vpack.c.b16 %v4121, %v4120
    %v4132 = vpack.c.b16 %v4123, %v4122
    %v4133 = vpack.c.b16 %v4125, %v4124
    %4142 = vmatprep.subr.bf16.mxu0 0
    %4143 = vmatpush1.bf16.msra.mxu0 %v4126
    %4144 = vmatprep.subr.bf16.mxu0 0
    %4145 = vmatpush1.bf16.msra.mxu0 %v4127
    %4146 = vmatprep.subr.bf16.mxu0 0
    %4147 = vmatpush1.bf16.msra.mxu0 %v4128
    %4148 = vmatprep.subr.bf16.mxu0 0
    %4149 = vmatpush1.bf16.msra.mxu0 %v4129
    %4150 = vmatprep.subr.bf16.mxu0 0
    %4151 = vmatpush1.bf16.msra.mxu0 %v4130
    %4152 = vmatprep.subr.bf16.mxu0 0
    %4153 = vmatpush1.bf16.msra.mxu0 %v4131
    %4154 = vmatprep.subr.bf16.mxu0 0
    %4155 = vmatpush1.bf16.msra.mxu0 %v4132
    %4156 = vmatprep.subr.bf16.mxu0 0
    %4157 = vmatpush1.bf16.msra.mxu0 %v4133
    %4158 = vmatprep.subr.bf16.mxu0 0
    %4159 = vmatpush1.bf16.msra.mxu0 0
    %4160 = vmatprep.subr.bf16.mxu0 0
    %4161 = vmatpush1.bf16.msra.mxu0 0
    %4162 = vmatprep.subr.bf16.mxu0 0
    %4163 = vmatpush1.bf16.msra.mxu0 0
    %4164 = vmatprep.subr.bf16.mxu0 0
    %4165 = vmatpush1.bf16.msra.mxu0 0
    %4166 = vmatprep.subr.bf16.mxu0 0
    %4167 = vmatpush1.bf16.msra.mxu0 0
    %4168 = vmatprep.subr.bf16.mxu0 0
    %4169 = vmatpush1.bf16.msra.mxu0 0
    %4170 = vmatprep.subr.bf16.mxu0 0
    %4171 = vmatpush1.bf16.msra.mxu0 0
    %4172 = vmatprep.subr.bf16.mxu0 0
    %4173 = vmatpush1.bf16.msra.mxu0 0
    %4174 = vmatprep.mubr.bf16.mxu0 0
    %4175 = vmatmul.mubr.bf16.gmra.mrb[0].mxu0 %v4070
    %v4176 = vpop.f32.mrb[0].mxu0
    %v4177 = vadd.f32 %v4092, %v4176
    %v4178 = vpop.f32.mrb[0].mxu0
    %v4179 = vpop.f32.mrb[0].mxu0
    %v4180 = vadd.f32 %v4092, %v4179
    %v4181 = vpop.f32.mrb[0].mxu0
    %4182 = vdwg.mxu0
    %v4183 = vadd.f32 %v114, %v4177
    %v4184 = vadd.f32 %v115, %v4180
    %v4185 = vld [vmem:[%s5] sm:$0x1]
    %v4186 = vld [vmem:[%s6] sm:$0x1]
    %4187 = vadd.xlane.f32.xlu0 %v4183
    %v4188 = vpop.xlane.xlu0 %4187
    %4189 = vadd.xlane.f32.xlu0 %v4184
    %v4190 = vpop.xlane.xlu0 %4189
    %v4191 = vrcp.pop 128.0
    %v4192 = vmul.f32 %v4188, %v4191
    %v4193 = vmul.f32 %v4190, %v4191
    %v4194 = vsub.f32 %v4183, %v4192
    %v4195 = vsub.f32 %v4184, %v4193
    %v4196 = vmul.f32 %v4194, %v4194
    %v4197 = vmul.f32 %v4195, %v4195
    %4198 = vadd.xlane.f32.xlu0 %v4196
    %v4199 = vpop.xlane.xlu0 %4198
    %4200 = vadd.xlane.f32.xlu0 %v4197
    %v4201 = vpop.xlane.xlu0 %4200
    %v4202 = vmul.f32 %v4199, %v4191
    %v4203 = vmul.f32 %v4201, %v4191
    %v4204 = vadd.f32 %v4202, 1e-12
    %v4205 = vadd.f32 %v4203, 1e-12
    %v4206 = vrsqrt.pop %v4204
    %v4207 = vrsqrt.pop %v4205
    %v4208 = vmul.f32 %v4194, %v4206
    %v4209 = vmul.f32 %v4195, %v4207
    %v4211 = vlaneseq
    %v4212 = vshrl.u32 %v4211, 7
    %v4213 = vsub.s32 0, %v4212
    %v4214 = vrot.slane %v4185, %v4213
    %v4216 = vmul.f32 %v4208, %v4214
    %v4217 = vmul.f32 %v4209, %v4214
    %v4219 = vlaneseq
    %v4220 = vshrl.u32 %v4219, 7
    %v4221 = vsub.s32 0, %v4220
    %v4222 = vrot.slane %v4186, %v4221
    %v4224 = vadd.f32 %v4216, %v4222
    %v4225 = vadd.f32 %v4217, %v4222
    %v4226 = vpack.c.bf16 %v4225, %v4224
    %v4227 = vld [vmem:[#allocation8] sm:$0xff]
    %v4228 = vld [vmem:[#allocation8 + $0x8] sm:$0xff]
    %v4229 = vld [vmem:[#allocation8 + $0x10] sm:$0xff]
    %v4230 = vld [vmem:[#allocation8 + $0x18] sm:$0xff]
    %v4231 = vld [vmem:[#allocation8 + $0x20] sm:$0xff]
    %v4232 = vld [vmem:[#allocation8 + $0x28] sm:$0xff]
    %v4233 = vld [vmem:[#allocation8 + $0x30] sm:$0xff]
    %v4234 = vld [vmem:[#allocation8 + $0x38] sm:$0xff]
    %v4235 = vld [vmem:[#allocation8 + $0x40] sm:$0xff]
    %v4236 = vld [vmem:[#allocation8 + $0x48] sm:$0xff]
    %v4237 = vld [vmem:[#allocation8 + $0x50] sm:$0xff]
    %v4238 = vld [vmem:[#allocation8 + $0x58] sm:$0xff]
    %v4239 = vld [vmem:[#allocation8 + $0x60] sm:$0xff]
    %v4240 = vld [vmem:[#allocation8 + $0x68] sm:$0xff]
    %v4241 = vld [vmem:[#allocation8 + $0x70] sm:$0xff]
    %v4242 = vld [vmem:[#allocation8 + $0x78] sm:$0xff]
    %v4243 = vld [vmem:[%s8] sm:$0x3]
    %v4245 = vlaneseq
    %v4246 = vshrl.u32 %v4245, 7
    %v4247 = vsub.s32 0, %v4246
    %v4248 = vrot.slane %v4243, %v4247
    %v4249 = vlaneseq
    %v4250 = vshrl.u32 %v4249, 7
    %v4251 = vsub.s32 1, %v4250
    %v4252 = vrot.slane %v4243, %v4251
    %v4271 = vunpack.c.l.b16 %v4227
    %v4272 = vunpack.c.h.b16 %v4227
    %v4273 = vunpack.c.l.b16 %v4228
    %v4274 = vunpack.c.h.b16 %v4228
    %v4275 = vunpack.c.l.b16 %v4229
    %v4276 = vunpack.c.h.b16 %v4229
    %v4277 = vunpack.c.l.b16 %v4230
    %v4278 = vunpack.c.h.b16 %v4230
    %v4279 = vunpack.c.l.b16 %v4231
    %v4280 = vunpack.c.h.b16 %v4231
    %v4281 = vunpack.c.l.b16 %v4232
    %v4282 = vunpack.c.h.b16 %v4232
    %v4283 = vunpack.c.l.b16 %v4233
    %v4284 = vunpack.c.h.b16 %v4233
    %v4285 = vunpack.c.l.b16 %v4234
    %v4286 = vunpack.c.h.b16 %v4234
    %v4287 = vunpack.c.l.b16 %v4235
    %v4288 = vunpack.c.h.b16 %v4235
    %v4289 = vunpack.c.l.b16 %v4236
    %v4290 = vunpack.c.h.b16 %v4236
    %v4291 = vunpack.c.l.b16 %v4237
    %v4292 = vunpack.c.h.b16 %v4237
    %v4293 = vunpack.c.l.b16 %v4238
    %v4294 = vunpack.c.h.b16 %v4238
    %v4295 = vunpack.c.l.b16 %v4239
    %v4296 = vunpack.c.h.b16 %v4239
    %v4297 = vunpack.c.l.b16 %v4240
    %v4298 = vunpack.c.h.b16 %v4240
    %v4299 = vunpack.c.l.b16 %v4241
    %v4300 = vunpack.c.h.b16 %v4241
    %v4301 = vunpack.c.l.b16 %v4242
    %v4302 = vunpack.c.h.b16 %v4242
    %v4303 = vpack.c.b16 %v4273, %v4271
    %v4304 = vpack.c.b16 %v4274, %v4272
    %v4305 = vpack.c.b16 %v4277, %v4275
    %v4306 = vpack.c.b16 %v4278, %v4276
    %v4307 = vpack.c.b16 %v4281, %v4279
    %v4308 = vpack.c.b16 %v4282, %v4280
    %v4309 = vpack.c.b16 %v4285, %v4283
    %v4310 = vpack.c.b16 %v4286, %v4284
    %v4311 = vpack.c.b16 %v4289, %v4287
    %v4312 = vpack.c.b16 %v4290, %v4288
    %v4313 = vpack.c.b16 %v4293, %v4291
    %v4314 = vpack.c.b16 %v4294, %v4292
    %v4315 = vpack.c.b16 %v4297, %v4295
    %v4316 = vpack.c.b16 %v4298, %v4296
    %v4317 = vpack.c.b16 %v4301, %v4299
    %v4318 = vpack.c.b16 %v4302, %v4300
    %4335 = vmatprep.subr.bf16.mxu0 %v4304
    %4336 = vmatpush1.bf16.msra.mxu0 %v4303
    %4337 = vmatprep.subr.bf16.mxu0 %v4306
    %4338 = vmatpush1.bf16.msra.mxu0 %v4305
    %4339 = vmatprep.subr.bf16.mxu0 %v4308
    %4340 = vmatpush1.bf16.msra.mxu0 %v4307
    %4341 = vmatprep.subr.bf16.mxu0 %v4310
    %4342 = vmatpush1.bf16.msra.mxu0 %v4309
    %4343 = vmatprep.subr.bf16.mxu0 %v4312
    %4344 = vmatpush1.bf16.msra.mxu0 %v4311
    %4345 = vmatprep.subr.bf16.mxu0 %v4314
    %4346 = vmatpush1.bf16.msra.mxu0 %v4313
    %4347 = vmatprep.subr.bf16.mxu0 %v4316
    %4348 = vmatpush1.bf16.msra.mxu0 %v4315
    %4349 = vmatprep.subr.bf16.mxu0 %v4318
    %4350 = vmatpush1.bf16.msra.mxu0 %v4317
    %4351 = vmatprep.subr.bf16.mxu0 0
    %4352 = vmatpush1.bf16.msra.mxu0 0
    %4353 = vmatprep.subr.bf16.mxu0 0
    %4354 = vmatpush1.bf16.msra.mxu0 0
    %4355 = vmatprep.subr.bf16.mxu0 0
    %4356 = vmatpush1.bf16.msra.mxu0 0
    %4357 = vmatprep.subr.bf16.mxu0 0
    %4358 = vmatpush1.bf16.msra.mxu0 0
    %4359 = vmatprep.subr.bf16.mxu0 0
    %4360 = vmatpush1.bf16.msra.mxu0 0
    %4361 = vmatprep.subr.bf16.mxu0 0
    %4362 = vmatpush1.bf16.msra.mxu0 0
    %4363 = vmatprep.subr.bf16.mxu0 0
    %4364 = vmatpush1.bf16.msra.mxu0 0
    %4365 = vmatprep.subr.bf16.mxu0 0
    %4366 = vmatpush1.bf16.msra.mxu0 0
    %4367 = vmatprep.mubr.bf16.mxu0 0
    %4368 = vmatmul.mubr.bf16.gmra.mrb[0].mxu0 %v4226
    %v4369 = vpop.f32.mrb[0].mxu0
    %v4370 = vadd.f32 %v4248, %v4369
    %v4371 = vpop.f32.mrb[0].mxu0
    %v4372 = vadd.f32 %v4252, %v4371
    %v4373 = vpop.f32.mrb[0].mxu0
    %v4374 = vadd.f32 %v4248, %v4373
    %v4375 = vpop.f32.mrb[0].mxu0
    %v4376 = vadd.f32 %v4252, %v4375
    %4377 = vdwg.mxu0
    %v4378 = vmul.f32 %v4370, 0.5
    %v4379 = vmul.f32 %v4372, 0.5
    %v4380 = vmul.f32 %v4374, 0.5
    %v4381 = vmul.f32 %v4376, 0.5
    %v4382 = vmul.f32 %v4370, 0.044715
    %v4383 = vmul.f32 %v4372, 0.044715
    %v4384 = vmul.f32 %v4374, 0.044715
    %v4385 = vmul.f32 %v4376, 0.044715
    %v4386 = vmul.f32 %v4382, %v4370
    %v4387 = vmul.f32 %v4383, %v4372
    %v4388 = vmul.f32 %v4384, %v4374
    %v4389 = vmul.f32 %v4385, %v4376
    %v4390 = vmul.f32 %v4386, %v4370
    %v4391 = vmul.f32 %v4387, %v4372
    %v4392 = vmul.f32 %v4388, %v4374
    %v4393 = vmul.f32 %v4389, %v4376
    %v4394 = vadd.f32 %v4370, %v4390
    %v4395 = vadd.f32 %v4372, %v4391
    %v4396 = vadd.f32 %v4374, %v4392
    %v4397 = vadd.f32 %v4376, %v4393
    %v4398 = vmul.f32 %v4394, 0.7978846
    %v4399 = vmul.f32 %v4395, 0.7978846
    %v4400 = vmul.f32 %v4396, 0.7978846
    %v4401 = vmul.f32 %v4397, 0.7978846
    %v4402 = vtanh.pop %v4398
    %v4403 = vtanh.pop %v4399
    %v4404 = vtanh.pop %v4400
    %v4405 = vtanh.pop %v4401
    %v4406 = vadd.f32 %v4402, 1.0
    %v4407 = vadd.f32 %v4403, 1.0
    %v4408 = vadd.f32 %v4404, 1.0
    %v4409 = vadd.f32 %v4405, 1.0
    %v4410 = vmul.f32 %v4378, %v4406
    %v4411 = vmul.f32 %v4379, %v4407
    %v4412 = vmul.f32 %v4380, %v4408
    %v4413 = vmul.f32 %v4381, %v4409
    %v4414 = vpack.c.bf16 %v4412, %v4410
    %v4415 = vpack.c.bf16 %v4413, %v4411
    %v4416 = vld [vmem:[#allocation10] sm:$0xf]
    %v4417 = vld [vmem:[#allocation10 + $0x4] sm:$0xf]
    %v4418 = vld [vmem:[#allocation10 + $0x8] sm:$0xf]
    %v4419 = vld [vmem:[#allocation10 + $0xc] sm:$0xf]
    %v4420 = vld [vmem:[#allocation10 + $0x10] sm:$0xf]
    %v4421 = vld [vmem:[#allocation10 + $0x14] sm:$0xf]
    %v4422 = vld [vmem:[#allocation10 + $0x18] sm:$0xf]
    %v4423 = vld [vmem:[#allocation10 + $0x1c] sm:$0xf]
    %v4424 = vld [vmem:[#allocation10 + $0x20] sm:$0xf]
    %v4425 = vld [vmem:[#allocation10 + $0x24] sm:$0xf]
    %v4426 = vld [vmem:[#allocation10 + $0x28] sm:$0xf]
    %v4427 = vld [vmem:[#allocation10 + $0x2c] sm:$0xf]
    %v4428 = vld [vmem:[#allocation10 + $0x30] sm:$0xf]
    %v4429 = vld [vmem:[#allocation10 + $0x34] sm:$0xf]
    %v4430 = vld [vmem:[#allocation10 + $0x38] sm:$0xf]
    %v4431 = vld [vmem:[#allocation10 + $0x3c] sm:$0xf]
    %v4432 = vld [vmem:[#allocation10 + $0x40] sm:$0xf]
    %v4433 = vld [vmem:[#allocation10 + $0x44] sm:$0xf]
    %v4434 = vld [vmem:[#allocation10 + $0x48] sm:$0xf]
    %v4435 = vld [vmem:[#allocation10 + $0x4c] sm:$0xf]
    %v4436 = vld [vmem:[#allocation10 + $0x50] sm:$0xf]
    %v4437 = vld [vmem:[#allocation10 + $0x54] sm:$0xf]
    %v4438 = vld [vmem:[#allocation10 + $0x58] sm:$0xf]
    %v4439 = vld [vmem:[#allocation10 + $0x5c] sm:$0xf]
    %v4440 = vld [vmem:[#allocation10 + $0x60] sm:$0xf]
    %v4441 = vld [vmem:[#allocation10 + $0x64] sm:$0xf]
    %v4442 = vld [vmem:[#allocation10 + $0x68] sm:$0xf]
    %v4443 = vld [vmem:[#allocation10 + $0x6c] sm:$0xf]
    %v4444 = vld [vmem:[#allocation10 + $0x70] sm:$0xf]
    %v4445 = vld [vmem:[#allocation10 + $0x74] sm:$0xf]
    %v4446 = vld [vmem:[#allocation10 + $0x78] sm:$0xf]
    %v4447 = vld [vmem:[#allocation10 + $0x7c] sm:$0xf]
    %v4448 = vld [vmem:[%s10] sm:$0x1]
    %v4450 = vlaneseq
    %v4451 = vshrl.u32 %v4450, 7
    %v4452 = vsub.s32 0, %v4451
    %v4453 = vrot.slane %v4448, %v4452
    %v4487 = vunpack.c.l.b16 %v4416
    %v4488 = vunpack.c.l.b16 %v4417
    %v4489 = vunpack.c.l.b16 %v4418
    %v4490 = vunpack.c.l.b16 %v4419
    %v4491 = vunpack.c.l.b16 %v4420
    %v4492 = vunpack.c.l.b16 %v4421
    %v4493 = vunpack.c.l.b16 %v4422
    %v4494 = vunpack.c.l.b16 %v4423
    %v4495 = vunpack.c.l.b16 %v4424
    %v4496 = vunpack.c.l.b16 %v4425
    %v4497 = vunpack.c.l.b16 %v4426
    %v4498 = vunpack.c.l.b16 %v4427
    %v4499 = vunpack.c.l.b16 %v4428
    %v4500 = vunpack.c.l.b16 %v4429
    %v4501 = vunpack.c.l.b16 %v4430
    %v4502 = vunpack.c.l.b16 %v4431
    %v4503 = vunpack.c.l.b16 %v4432
    %v4504 = vunpack.c.l.b16 %v4433
    %v4505 = vunpack.c.l.b16 %v4434
    %v4506 = vunpack.c.l.b16 %v4435
    %v4507 = vunpack.c.l.b16 %v4436
    %v4508 = vunpack.c.l.b16 %v4437
    %v4509 = vunpack.c.l.b16 %v4438
    %v4510 = vunpack.c.l.b16 %v4439
    %v4511 = vunpack.c.l.b16 %v4440
    %v4512 = vunpack.c.l.b16 %v4441
    %v4513 = vunpack.c.l.b16 %v4442
    %v4514 = vunpack.c.l.b16 %v4443
    %v4515 = vunpack.c.l.b16 %v4444
    %v4516 = vunpack.c.l.b16 %v4445
    %v4517 = vunpack.c.l.b16 %v4446
    %v4518 = vunpack.c.l.b16 %v4447
    %v4519 = vpack.c.b16 %v4488, %v4487
    %v4520 = vpack.c.b16 %v4490, %v4489
    %v4521 = vpack.c.b16 %v4492, %v4491
    %v4522 = vpack.c.b16 %v4494, %v4493
    %v4523 = vpack.c.b16 %v4496, %v4495
    %v4524 = vpack.c.b16 %v4498, %v4497
    %v4525 = vpack.c.b16 %v4500, %v4499
    %v4526 = vpack.c.b16 %v4502, %v4501
    %v4527 = vpack.c.b16 %v4504, %v4503
    %v4528 = vpack.c.b16 %v4506, %v4505
    %v4529 = vpack.c.b16 %v4508, %v4507
    %v4530 = vpack.c.b16 %v4510, %v4509
    %v4531 = vpack.c.b16 %v4512, %v4511
    %v4532 = vpack.c.b16 %v4514, %v4513
    %v4533 = vpack.c.b16 %v4516, %v4515
    %v4534 = vpack.c.b16 %v4518, %v4517
    %4551 = vmatprep.subr.bf16.mxu0 0
    %4552 = vmatpush1.bf16.msra.mxu0 %v4519
    %4553 = vmatprep.subr.bf16.mxu0 0
    %4554 = vmatpush1.bf16.msra.mxu0 %v4520
    %4555 = vmatprep.subr.bf16.mxu0 0
    %4556 = vmatpush1.bf16.msra.mxu0 %v4521
    %4557 = vmatprep.subr.bf16.mxu0 0
    %4558 = vmatpush1.bf16.msra.mxu0 %v4522
    %4559 = vmatprep.subr.bf16.mxu0 0
    %4560 = vmatpush1.bf16.msra.mxu0 %v4523
    %4561 = vmatprep.subr.bf16.mxu0 0
    %4562 = vmatpush1.bf16.msra.mxu0 %v4524
    %4563 = vmatprep.subr.bf16.mxu0 0
    %4564 = vmatpush1.bf16.msra.mxu0 %v4525
    %4565 = vmatprep.subr.bf16.mxu0 0
    %4566 = vmatpush1.bf16.msra.mxu0 %v4526
    %4567 = vmatprep.subr.bf16.mxu0 0
    %4568 = vmatpush1.bf16.msra.mxu0 %v4527
    %4569 = vmatprep.subr.bf16.mxu0 0
    %4570 = vmatpush1.bf16.msra.mxu0 %v4528
    %4571 = vmatprep.subr.bf16.mxu0 0
    %4572 = vmatpush1.bf16.msra.mxu0 %v4529
    %4573 = vmatprep.subr.bf16.mxu0 0
    %4574 = vmatpush1.bf16.msra.mxu0 %v4530
    %4575 = vmatprep.subr.bf16.mxu0 0
    %4576 = vmatpush1.bf16.msra.mxu0 %v4531
    %4577 = vmatprep.subr.bf16.mxu0 0
    %4578 = vmatpush1.bf16.msra.mxu0 %v4532
    %4579 = vmatprep.subr.bf16.mxu0 0
    %4580 = vmatpush1.bf16.msra.mxu0 %v4533
    %4581 = vmatprep.subr.bf16.mxu0 0
    %4582 = vmatpush1.bf16.msra.mxu0 %v4534
    %4583 = vmatprep.mubr.bf16.mxu0 %v4415
    %4584 = vmatmul.mubr.bf16.gmra.mrb[0].mxu0 %v4414
    %v4585 = vpop.f32.mrb[0].mxu0
    %v4586 = vadd.f32 %v4453, %v4585
    %v4587 = vpop.f32.mrb[0].mxu0
    %v4588 = vpop.f32.mrb[0].mxu0
    %v4589 = vadd.f32 %v4453, %v4588
    %v4590 = vpop.f32.mrb[0].mxu0
    %4591 = vdwg.mxu0
    %v4592 = vadd.f32 %v4224, %v4586
    %v4593 = vadd.f32 %v4225, %v4589
    %v4594 = vld [vmem:[%s11] sm:$0x1]
    %v4595 = vld [vmem:[%s12] sm:$0x1]
    %4596 = vadd.xlane.f32.xlu0 %v4592
    %v4597 = vpop.xlane.xlu0 %4596
    %4598 = vadd.xlane.f32.xlu0 %v4593
    %v4599 = vpop.xlane.xlu0 %4598
    %v4600 = vmul.f32 %v4597, %v4191
    %v4601 = vmul.f32 %v4599, %v4191
    %v4602 = vsub.f32 %v4592, %v4600
    %v4603 = vsub.f32 %v4593, %v4601
    %v4604 = vmul.f32 %v4602, %v4602
    %v4605 = vmul.f32 %v4603, %v4603
    %4606 = vadd.xlane.f32.xlu0 %v4604
    %v4607 = vpop.xlane.xlu0 %4606
    %4608 = vadd.xlane.f32.xlu0 %v4605
    %v4609 = vpop.xlane.xlu0 %4608
    %v4610 = vmul.f32 %v4607, %v4191
    %v4611 = vmul.f32 %v4609, %v4191
    %v4612 = vadd.f32 %v4610, 1e-12
    %v4613 = vadd.f32 %v4611, 1e-12
    %v4614 = vrsqrt.pop %v4612
    %v4615 = vrsqrt.pop %v4613
    %v4616 = vmul.f32 %v4602, %v4614
    %v4617 = vmul.f32 %v4603, %v4615
    %v4619 = vlaneseq
    %v4620 = vshrl.u32 %v4619, 7
    %v4621 = vsub.s32 0, %v4620
    %v4622 = vrot.slane %v4594, %v4621
    %v4624 = vmul.f32 %v4616, %v4622
    %v4625 = vmul.f32 %v4617, %v4622
    %v4627 = vlaneseq
    %v4628 = vshrl.u32 %v4627, 7
    %v4629 = vsub.s32 0, %v4628
    %v4630 = vrot.slane %v4595, %v4629
    %v4632 = vadd.f32 %v4624, %v4630
    %v4633 = vadd.f32 %v4625, %v4630
    %4634 = vst [vmem:[#allocation11] sm:$0xff] %v4632
    %4635 = vst [vmem:[#allocation11 + $0x8] sm:$0xff] %v4633
    // Predicated region
    $region74: #{tpu_custom_call.1} parent=1 // pred_check
      _
    $region75: #{tpu_custom_call.1} parent=1 // pred_check_branch
      %4637 = sbr.rel (0) target = $region77
    $region76: #{tpu_custom_call.1} parent=1 // pred_region
      %s4639 = ssub.s32 256, 256
      %4640 = vsyncadd [#allocation4], %s4639
      %s4641 = sshll.u32 [#allocation11], 4
      %s4642 = int_to_ptr.vmem [resolvable:$true] %s4641
      %4647 = dma.vmem_to_hbm [thread:$0]  %s4642, 256, %s13, [#allocation4], 128, 128, 8
    $region77: #{tpu_custom_call.1} parent=1 // pred_fallthru
      _
    // Predicated region
    $region78: #{tpu_custom_call.1} parent=1 // pred_check
      _
    $region79: #{tpu_custom_call.1} parent=1 // pred_check_branch
      %4649 = sbr.rel (0) target = $region81
    $region80: #{tpu_custom_call.1} parent=1 // pred_region
      %4650 = dma.done [#allocation4], 256
    $region81: #{tpu_custom_call.1} parent=1 // pred_fallthru
      _
    %4651 = vsyncpa [#allocation3], 1
    %4652 = vsyncpa [#allocation6], 1
    %4653 = vsyncpa [#allocation9], 1
    %4654 = vsyncpa [#allocation4], 1

</llo_original>
